<compile_context>
chip_gen: v7x
topology: tpu7x:2x2x1
jax: 0.10.0
libtpu: 0.0.40
codegen_flags: <defaults>
</compile_context>

<pallas_src>
import functools

import jax
import jax.numpy as jnp
from jax import lax
from jax.experimental import pallas as pl
from jax.experimental.pallas import tpu as pltpu


K = 5        # depthwise kernel size
DIL = 3      # dilation of conv_spatial
PAD0 = 2     # padding of conv0
PAD1 = 6     # padding of conv_spatial
SP = 8       # sublane-aligned W offset of the scratch interiors (>= PAD1, % 8 == 0)
RC = 8       # row-chunk size (bounds accumulator live ranges)


# ----------------------------------------------------------------------------
# Fused LKA kernel
# ----------------------------------------------------------------------------
def _lka_kernel(x_ref, w0_ref, b0_ref, w1_ref, b1_ref, wp_ref, bp_ref,
                o_ref, s0_ref, s1_ref, *, H, W, C):
    """depthwise 5x5 -> depthwise 5x5 (dil=3) -> 1x1 -> x * attn, all in VMEM.

    x_ref  : (H, W, C)                      unpadded channels-last input tile
    w0/w1  : (K*K, C)                       depthwise taps, tap-major
    wp     : (C, C)                         1x1 conv weight, (Cin, Cout)
    b*     : (1, C)
    o_ref  : (H//RC, RC*W, C)               lane-dense chunked output tile
    s0_ref : (H+2*PAD0, W+2*SP, C)  f32     zero-haloed input  (interior @ [PAD0, SP])
    s1_ref : (H+2*PAD1, W+2*SP, C)  f32     zero-haloed conv0 output (interior @ [PAD1, SP])
    """
    f32 = jnp.float32
    WS = W + 2 * SP
    nck = H // RC

    # ---- stage x into the conv0 scratch; zero only the halo strips ----------
    s0_ref[0:PAD0, :, :] = jnp.zeros((PAD0, WS, C), f32)
    s0_ref[PAD0 + H:PAD0 + H + PAD0, :, :] = jnp.zeros((PAD0, WS, C), f32)
    s0_ref[PAD0:PAD0 + H, 0:SP, :] = jnp.zeros((H, SP, C), f32)
    s0_ref[PAD0:PAD0 + H, SP + W:SP + W + SP, :] = jnp.zeros((H, SP, C), f32)
    s0_ref[PAD0:PAD0 + H, SP:SP + W, :] = x_ref[...].astype(f32)   # aligned store

    # ---- zero the conv_spatial halo strips (interior overwritten by conv0) --
    s1_ref[0:PAD1, :, :] = jnp.zeros((PAD1, WS, C), f32)
    s1_ref[PAD1 + H:PAD1 + H + PAD1, :, :] = jnp.zeros((PAD1, WS, C), f32)
    s1_ref[PAD1:PAD1 + H, 0:SP, :] = jnp.zeros((H, SP, C), f32)
    s1_ref[PAD1:PAD1 + H, SP + W:SP + W + SP, :] = jnp.zeros((H, SP, C), f32)

    # ---- conv0: depthwise 5x5 (pad=2), chunked over RC rows ------------------
    def conv0_chunk(c, carry):
        r0 = pl.multiple_of(c * RC, RC)
        w0 = w0_ref[...]
        acc = jnp.zeros((RC, W, C), f32)
        for j in range(K):                               # W shift hoisted: 5 column loads
            cj = SP - PAD0 + j                           # 6 + j
            col = s0_ref[pl.ds(r0, RC + K - 1), cj:cj + W, :]
            for i in range(K):                           # row taps: free leading-dim slices
                acc = acc + col[i:i + RC] * w0[i * K + j]
        s1_ref[pl.ds(PAD1 + r0, RC), SP:SP + W, :] = acc + b0_ref[...]
        return carry

    lax.fori_loop(0, nck, conv0_chunk, 0)

    # ---- conv_spatial (5x5, dil=3) + 1x1 (MXU) + gating, chunked --------------
    span = RC + DIL * (K - 1)                            # rows of s1 touched per chunk
    def tail_chunk(c, carry):
        r0 = pl.multiple_of(c * RC, RC)
        w1 = w1_ref[...]
        acc = jnp.zeros((RC, W, C), f32)
        for j in range(K):
            cj = SP - PAD1 + DIL * j                     # 2 + 3j
            col = s1_ref[pl.ds(r0, span), cj:cj + W, :]
            for i in range(K):
                acc = acc + col[DIL * i:DIL * i + RC] * w1[i * K + j]
        attn = jnp.dot((acc + b1_ref[...]).reshape(RC * W, C), wp_ref[...],
                       preferred_element_type=f32) + bp_ref[...]
        xin = x_ref[pl.ds(r0, RC), :, :].astype(f32).reshape(RC * W, C)
        o_ref[c] = (xin * attn).astype(o_ref.dtype)      # lane-dense chunk store
        return carry

    lax.fori_loop(0, nck, tail_chunk, 0)


# ----------------------------------------------------------------------------
# Wrapper: PyTorch NCHW in / NCHW out, PyTorch weight layouts
# ----------------------------------------------------------------------------
@jax.jit
def lka_pallas(x, w0, b0, w1, b1, wp, bp):
    """x: (B, C, H, W).  w0/w1: (C,1,5,5), wp: (C,C,1,1), biases: (C,)."""
    B, C, H, W = x.shape
    assert H % RC == 0, "H must be a multiple of the row-chunk size"
    nck = H // RC

    x_nhwc = jnp.transpose(x, (0, 2, 3, 1))              # NCHW -> NHWC (interface only)

    # depthwise weights -> (tap, C); pointwise -> (Cin, Cout)
    w0t = jnp.transpose(w0[:, 0, :, :], (1, 2, 0)).reshape(K * K, C)
    w1t = jnp.transpose(w1[:, 0, :, :], (1, 2, 0)).reshape(K * K, C)
    wpt = jnp.transpose(wp[:, :, 0, 0], (1, 0))

    kernel = functools.partial(_lka_kernel, H=H, W=W, C=C)
    out = pl.pallas_call(
        kernel,
        out_shape=jax.ShapeDtypeStruct((B, nck, RC * W, C), x.dtype),
        grid=(B,),
        in_specs=[
            pl.BlockSpec((None, H, W, C), lambda b: (b, 0, 0, 0)),
            pl.BlockSpec((K * K, C), lambda b: (0, 0)),
            pl.BlockSpec((1, C), lambda b: (0, 0)),
            pl.BlockSpec((K * K, C), lambda b: (0, 0)),
            pl.BlockSpec((1, C), lambda b: (0, 0)),
            pl.BlockSpec((C, C), lambda b: (0, 0)),
            pl.BlockSpec((1, C), lambda b: (0, 0)),
        ],
        out_specs=pl.BlockSpec((None, nck, RC * W, C), lambda b: (b, 0, 0, 0)),
        scratch_shapes=[
            pltpu.VMEM((H + 2 * PAD0, W + 2 * SP, C), jnp.float32),   # padded x
            pltpu.VMEM((H + 2 * PAD1, W + 2 * SP, C), jnp.float32),   # padded conv0 out
        ],
        compiler_params=pltpu.CompilerParams(
            dimension_semantics=("parallel",)),
    )(x_nhwc, w0t, b0.reshape(1, C), w1t, b1.reshape(1, C), wpt, bp.reshape(1, C))

    out = out.reshape(B, H, W, C)
    return jnp.transpose(out, (0, 3, 1, 2))              # NHWC -> NCHW (interface only)


# ----------------------------------------------------------------------------
# Pure-JAX reference (mirrors the PyTorch convs) for a built-in sanity check
# ----------------------------------------------------------------------------
def lka_reference(x, w0, b0, w1, b1, wp, bp):
    dim = x.shape[1]
    dn_dw = jax.lax.conv_dimension_numbers(x.shape, w0.shape, ("NCHW", "OIHW", "NCHW"))
    attn = jax.lax.conv_general_dilated(
        x, w0, window_strides=(1, 1), padding=((PAD0, PAD0), (PAD0, PAD0)),
        dimension_numbers=dn_dw, feature_group_count=dim,
        precision=jax.lax.Precision.HIGHEST) + b0[None, :, None, None]
    attn = jax.lax.conv_general_dilated(
        attn, w1, window_strides=(1, 1), padding=((PAD1, PAD1), (PAD1, PAD1)),
        rhs_dilation=(DIL, DIL), dimension_numbers=dn_dw,
        feature_group_count=dim,
        precision=jax.lax.Precision.HIGHEST) + b1[None, :, None, None]
    dn_pw = jax.lax.conv_dimension_numbers(attn.shape, wp.shape, ("NCHW", "OIHW", "NCHW"))
    attn = jax.lax.conv_general_dilated(
        attn, wp, window_strides=(1, 1), padding=((0, 0), (0, 0)),
        dimension_numbers=dn_pw,
        precision=jax.lax.Precision.HIGHEST) + bp[None, :, None, None]
    return x * attn


# ----------------------------------------------------------------------------
# main
# ----------------------------------------------------------------------------
if __name__ == "__main__":
    key = jax.random.PRNGKey(0)
    ks = jax.random.split(key, 7)

    # C = 128 maps exactly onto the 128-lane vreg axis; B = 8 gives each v7x
    # TensorCore 4 pipelined grid steps (input DMA / writeback hidden).
    B, C, H, W = 8, 128, 16, 16

    x  = jax.random.normal(ks[0], (B, C, H, W), jnp.float32)
    w0 = jax.random.normal(ks[1], (C, 1, K, K), jnp.float32) * 0.1
    b0 = jax.random.normal(ks[2], (C,), jnp.float32) * 0.1
    w1 = jax.random.normal(ks[3], (C, 1, K, K), jnp.float32) * 0.1
    b1 = jax.random.normal(ks[4], (C,), jnp.float32) * 0.1
    wp = jax.random.normal(ks[5], (C, C, 1, 1), jnp.float32) * 0.05
    bp = jax.random.normal(ks[6], (C,), jnp.float32) * 0.05

    out = jax.block_until_ready(lka_pallas(x, w0, b0, w1, b1, wp, bp))
    assert out.shape == (B, C, H, W)

    ref = jax.block_until_ready(lka_reference(x, w0, b0, w1, b1, wp, bp))
    max_err = float(jnp.max(jnp.abs(out - ref)))
    assert max_err < 1e-2, f"max abs error vs reference = {max_err}"

    print("KERNEL_OK")
</pallas_src>

<mosaic_0001>
module attributes {stable_mosaic.version = 11 : i64} {
  func.func @_lka_kernel(%arg0: i32, %arg1: memref<1x16x16x128xf32, #tpu.memory_space<vmem>>, %arg2: memref<25x128xf32, #tpu.memory_space<vmem>>, %arg3: memref<1x128xf32, #tpu.memory_space<vmem>>, %arg4: memref<25x128xf32, #tpu.memory_space<vmem>>, %arg5: memref<1x128xf32, #tpu.memory_space<vmem>>, %arg6: memref<128x128xf32, #tpu.memory_space<vmem>>, %arg7: memref<1x128xf32, #tpu.memory_space<vmem>>, %arg8: memref<1x2x128x128xf32, #tpu.memory_space<vmem>>, %arg9: memref<20x32x128xf32, #tpu.memory_space<vmem>>, %arg10: memref<28x32x128xf32, #tpu.memory_space<vmem>>) attributes {dimension_semantics = [#tpu.dimension_semantics<parallel>], iteration_bounds = array<i64: 8>, scalar_prefetch = 0 : i64, scratch_operands = 2 : i64, tpu.core_type = #tpu.core_type<tc>, window_params = [{transform_indices = @transform_0, window_bounds = array<i64: 1, 16, 16, 128>}, {pipeline_mode = #tpu.pipeline_mode<synchronous>, transform_indices = @transform_1, window_bounds = array<i64: 25, 128>}, {pipeline_mode = #tpu.pipeline_mode<synchronous>, transform_indices = @transform_2, window_bounds = array<i64: 1, 128>}, {pipeline_mode = #tpu.pipeline_mode<synchronous>, transform_indices = @transform_3, window_bounds = array<i64: 25, 128>}, {pipeline_mode = #tpu.pipeline_mode<synchronous>, transform_indices = @transform_4, window_bounds = array<i64: 1, 128>}, {pipeline_mode = #tpu.pipeline_mode<synchronous>, transform_indices = @transform_5, window_bounds = array<i64: 128, 128>}, {pipeline_mode = #tpu.pipeline_mode<synchronous>, transform_indices = @transform_6, window_bounds = array<i64: 1, 128>}, {transform_indices = @transform_7, window_bounds = array<i64: 1, 2, 128, 128>}]} {
    %cst = arith.constant 0.000000e+00 : f32
    %0 = vector.broadcast %cst : f32 to vector<2x32x128xf32>
    %c0 = arith.constant 0 : index
    %c0_0 = arith.constant 0 : index
    %c0_1 = arith.constant 0 : index
    %1 = vector.load %arg9[%c0, %c0_0, %c0_1] : memref<20x32x128xf32, #tpu.memory_space<vmem>>, vector<2x32x128xf32>
    tpu.vector_store %arg9[%c0, %c0_0, %c0_1], %0 {strides = array<i32>} : memref<20x32x128xf32, #tpu.memory_space<vmem>>, vector<2x32x128xf32>,
    %cst_2 = arith.constant 0.000000e+00 : f32
    %2 = vector.broadcast %cst_2 : f32 to vector<2x32x128xf32>
    %c18 = arith.constant 18 : index
    %c0_3 = arith.constant 0 : index
    %c0_4 = arith.constant 0 : index
    %3 = vector.load %arg9[%c18, %c0_3, %c0_4] : memref<20x32x128xf32, #tpu.memory_space<vmem>>, vector<2x32x128xf32>
    tpu.vector_store %arg9[%c18, %c0_3, %c0_4], %2 {strides = array<i32>} : memref<20x32x128xf32, #tpu.memory_space<vmem>>, vector<2x32x128xf32>,
    %cst_5 = arith.constant 0.000000e+00 : f32
    %4 = vector.broadcast %cst_5 : f32 to vector<16x8x128xf32>
    %c2 = arith.constant 2 : index
    %c0_6 = arith.constant 0 : index
    %c0_7 = arith.constant 0 : index
    %5 = vector.load %arg9[%c2, %c0_6, %c0_7] : memref<20x32x128xf32, #tpu.memory_space<vmem>>, vector<16x8x128xf32>
    tpu.vector_store %arg9[%c2, %c0_6, %c0_7], %4 {strides = array<i32>} : memref<20x32x128xf32, #tpu.memory_space<vmem>>, vector<16x8x128xf32>,
    %cst_8 = arith.constant 0.000000e+00 : f32
    %6 = vector.broadcast %cst_8 : f32 to vector<16x8x128xf32>
    %c2_9 = arith.constant 2 : index
    %c24 = arith.constant 24 : index
    %c0_10 = arith.constant 0 : index
    %7 = vector.load %arg9[%c2_9, %c24, %c0_10] : memref<20x32x128xf32, #tpu.memory_space<vmem>>, vector<16x8x128xf32>
    tpu.vector_store %arg9[%c2_9, %c24, %c0_10], %6 {strides = array<i32>} : memref<20x32x128xf32, #tpu.memory_space<vmem>>, vector<16x8x128xf32>,
    %c0_11 = arith.constant 0 : index
    %c0_12 = arith.constant 0 : index
    %c0_13 = arith.constant 0 : index
    %c0_14 = arith.constant 0 : index
    %8 = vector.load %arg1[%c0_11, %c0_12, %c0_13, %c0_14] : memref<1x16x16x128xf32, #tpu.memory_space<vmem>>, vector<1x16x16x128xf32>
    %9 = vector.shape_cast %8 : vector<1x16x16x128xf32> to vector<16x16x128xf32>
    %c2_15 = arith.constant 2 : index
    %c8 = arith.constant 8 : index
    %c0_16 = arith.constant 0 : index
    %10 = vector.load %arg9[%c2_15, %c8, %c0_16] : memref<20x32x128xf32, #tpu.memory_space<vmem>>, vector<16x16x128xf32>
    tpu.vector_store %arg9[%c2_15, %c8, %c0_16], %9 {strides = array<i32>} : memref<20x32x128xf32, #tpu.memory_space<vmem>>, vector<16x16x128xf32>,
    %cst_17 = arith.constant 0.000000e+00 : f32
    %11 = vector.broadcast %cst_17 : f32 to vector<6x32x128xf32>
    %c0_18 = arith.constant 0 : index
    %c0_19 = arith.constant 0 : index
    %c0_20 = arith.constant 0 : index
    %12 = vector.load %arg10[%c0_18, %c0_19, %c0_20] : memref<28x32x128xf32, #tpu.memory_space<vmem>>, vector<6x32x128xf32>
    tpu.vector_store %arg10[%c0_18, %c0_19, %c0_20], %11 {strides = array<i32>} : memref<28x32x128xf32, #tpu.memory_space<vmem>>, vector<6x32x128xf32>,
    %cst_21 = arith.constant 0.000000e+00 : f32
    %13 = vector.broadcast %cst_21 : f32 to vector<6x32x128xf32>
    %c22 = arith.constant 22 : index
    %c0_22 = arith.constant 0 : index
    %c0_23 = arith.constant 0 : index
    %14 = vector.load %arg10[%c22, %c0_22, %c0_23] : memref<28x32x128xf32, #tpu.memory_space<vmem>>, vector<6x32x128xf32>
    tpu.vector_store %arg10[%c22, %c0_22, %c0_23], %13 {strides = array<i32>} : memref<28x32x128xf32, #tpu.memory_space<vmem>>, vector<6x32x128xf32>,
    %cst_24 = arith.constant 0.000000e+00 : f32
    %15 = vector.broadcast %cst_24 : f32 to vector<16x8x128xf32>
    %c6 = arith.constant 6 : index
    %c0_25 = arith.constant 0 : index
    %c0_26 = arith.constant 0 : index
    %16 = vector.load %arg10[%c6, %c0_25, %c0_26] : memref<28x32x128xf32, #tpu.memory_space<vmem>>, vector<16x8x128xf32>
    tpu.vector_store %arg10[%c6, %c0_25, %c0_26], %15 {strides = array<i32>} : memref<28x32x128xf32, #tpu.memory_space<vmem>>, vector<16x8x128xf32>,
    %cst_27 = arith.constant 0.000000e+00 : f32
    %17 = vector.broadcast %cst_27 : f32 to vector<16x8x128xf32>
    %c6_28 = arith.constant 6 : index
    %c24_29 = arith.constant 24 : index
    %c0_30 = arith.constant 0 : index
    %18 = vector.load %arg10[%c6_28, %c24_29, %c0_30] : memref<28x32x128xf32, #tpu.memory_space<vmem>>, vector<16x8x128xf32>
    tpu.vector_store %arg10[%c6_28, %c24_29, %c0_30], %17 {strides = array<i32>} : memref<28x32x128xf32, #tpu.memory_space<vmem>>, vector<16x8x128xf32>,
    %c0_i32 = arith.constant 0 : i32
    %c2_i32 = arith.constant 2 : i32
    %19 = arith.addi %c0_i32, %c2_i32 : i32
    %c1_i32 = arith.constant 1 : i32
    scf.for %arg11 = %c0_i32 to %19 step %c1_i32  : i32 {
      %c8_i32 = arith.constant 8 : i32
      %21 = arith.muli %arg11, %c8_i32 : i32
      %22 = tpu.assume_multiple %21, 8 : i32
      %c0_36 = arith.constant 0 : index
      %c0_37 = arith.constant 0 : index
      %23 = vector.load %arg2[%c0_36, %c0_37] : memref<25x128xf32, #tpu.memory_space<vmem>>, vector<25x128xf32>
      %cst_38 = arith.constant 0.000000e+00 : f32
      %24 = vector.broadcast %cst_38 : f32 to vector<8x16x128xf32>
      %25 = arith.index_cast %22 : i32 to index
      %c6_39 = arith.constant 6 : index
      %c0_40 = arith.constant 0 : index
      %26 = vector.load %arg9[%25, %c6_39, %c0_40] : memref<20x32x128xf32, #tpu.memory_space<vmem>>, vector<12x16x128xf32>
      %27 = vector.extract_strided_slice %26 {offsets = [0, 0, 0], sizes = [8, 16, 128], strides = [1, 1, 1]} : vector<12x16x128xf32> to vector<8x16x128xf32>
      %28 = vector.extract_strided_slice %23 {offsets = [0, 0], sizes = [1, 128], strides = [1, 1]} : vector<25x128xf32> to vector<1x128xf32>
      %29 = vector.shape_cast %28 : vector<1x128xf32> to vector<128xf32>
      %30 = vector.shape_cast %29 : vector<128xf32> to vector<1x1x128xf32>
      %31 = vector.broadcast %30 : vector<1x1x128xf32> to vector<8x16x128xf32>
      %32 = arith.mulf %27, %31 : vector<8x16x128xf32>
      %33 = arith.addf %24, %32 : vector<8x16x128xf32>
      %34 = vector.extract_strided_slice %26 {offsets = [1, 0, 0], sizes = [8, 16, 128], strides = [1, 1, 1]} : vector<12x16x128xf32> to vector<8x16x128xf32>
      %35 = vector.extract_strided_slice %23 {offsets = [5, 0], sizes = [1, 128], strides = [1, 1]} : vector<25x128xf32> to vector<1x128xf32>
      %36 = vector.shape_cast %35 : vector<1x128xf32> to vector<128xf32>
      %37 = vector.shape_cast %36 : vector<128xf32> to vector<1x1x128xf32>
      %38 = vector.broadcast %37 : vector<1x1x128xf32> to vector<8x16x128xf32>
      %39 = arith.mulf %34, %38 : vector<8x16x128xf32>
      %40 = arith.addf %33, %39 : vector<8x16x128xf32>
      %41 = vector.extract_strided_slice %26 {offsets = [2, 0, 0], sizes = [8, 16, 128], strides = [1, 1, 1]} : vector<12x16x128xf32> to vector<8x16x128xf32>
      %42 = vector.extract_strided_slice %23 {offsets = [10, 0], sizes = [1, 128], strides = [1, 1]} : vector<25x128xf32> to vector<1x128xf32>
      %43 = vector.shape_cast %42 : vector<1x128xf32> to vector<128xf32>
      %44 = vector.shape_cast %43 : vector<128xf32> to vector<1x1x128xf32>
      %45 = vector.broadcast %44 : vector<1x1x128xf32> to vector<8x16x128xf32>
      %46 = arith.mulf %41, %45 : vector<8x16x128xf32>
      %47 = arith.addf %40, %46 : vector<8x16x128xf32>
      %48 = vector.extract_strided_slice %26 {offsets = [3, 0, 0], sizes = [8, 16, 128], strides = [1, 1, 1]} : vector<12x16x128xf32> to vector<8x16x128xf32>
      %49 = vector.extract_strided_slice %23 {offsets = [15, 0], sizes = [1, 128], strides = [1, 1]} : vector<25x128xf32> to vector<1x128xf32>
      %50 = vector.shape_cast %49 : vector<1x128xf32> to vector<128xf32>
      %51 = vector.shape_cast %50 : vector<128xf32> to vector<1x1x128xf32>
      %52 = vector.broadcast %51 : vector<1x1x128xf32> to vector<8x16x128xf32>
      %53 = arith.mulf %48, %52 : vector<8x16x128xf32>
      %54 = arith.addf %47, %53 : vector<8x16x128xf32>
      %55 = vector.extract_strided_slice %26 {offsets = [4, 0, 0], sizes = [8, 16, 128], strides = [1, 1, 1]} : vector<12x16x128xf32> to vector<8x16x128xf32>
      %56 = vector.extract_strided_slice %23 {offsets = [20, 0], sizes = [1, 128], strides = [1, 1]} : vector<25x128xf32> to vector<1x128xf32>
      %57 = vector.shape_cast %56 : vector<1x128xf32> to vector<128xf32>
      %58 = vector.shape_cast %57 : vector<128xf32> to vector<1x1x128xf32>
      %59 = vector.broadcast %58 : vector<1x1x128xf32> to vector<8x16x128xf32>
      %60 = arith.mulf %55, %59 : vector<8x16x128xf32>
      %61 = arith.addf %54, %60 : vector<8x16x128xf32>
      %62 = arith.index_cast %22 : i32 to index
      %c7 = arith.constant 7 : index
      %c0_41 = arith.constant 0 : index
      %63 = vector.load %arg9[%62, %c7, %c0_41] : memref<20x32x128xf32, #tpu.memory_space<vmem>>, vector<12x16x128xf32>
      %64 = vector.extract_strided_slice %63 {offsets = [0, 0, 0], sizes = [8, 16, 128], strides = [1, 1, 1]} : vector<12x16x128xf32> to vector<8x16x128xf32>
      %65 = vector.extract_strided_slice %23 {offsets = [1, 0], sizes = [1, 128], strides = [1, 1]} : vector<25x128xf32> to vector<1x128xf32>
      %66 = vector.shape_cast %65 : vector<1x128xf32> to vector<128xf32>
      %67 = vector.shape_cast %66 : vector<128xf32> to vector<1x1x128xf32>
      %68 = vector.broadcast %67 : vector<1x1x128xf32> to vector<8x16x128xf32>
      %69 = arith.mulf %64, %68 : vector<8x16x128xf32>
      %70 = arith.addf %61, %69 : vector<8x16x128xf32>
      %71 = vector.extract_strided_slice %63 {offsets = [1, 0, 0], sizes = [8, 16, 128], strides = [1, 1, 1]} : vector<12x16x128xf32> to vector<8x16x128xf32>
      %72 = vector.extract_strided_slice %23 {offsets = [6, 0], sizes = [1, 128], strides = [1, 1]} : vector<25x128xf32> to vector<1x128xf32>
      %73 = vector.shape_cast %72 : vector<1x128xf32> to vector<128xf32>
      %74 = vector.shape_cast %73 : vector<128xf32> to vector<1x1x128xf32>
      %75 = vector.broadcast %74 : vector<1x1x128xf32> to vector<8x16x128xf32>
      %76 = arith.mulf %71, %75 : vector<8x16x128xf32>
      %77 = arith.addf %70, %76 : vector<8x16x128xf32>
      %78 = vector.extract_strided_slice %63 {offsets = [2, 0, 0], sizes = [8, 16, 128], strides = [1, 1, 1]} : vector<12x16x128xf32> to vector<8x16x128xf32>
      %79 = vector.extract_strided_slice %23 {offsets = [11, 0], sizes = [1, 128], strides = [1, 1]} : vector<25x128xf32> to vector<1x128xf32>
      %80 = vector.shape_cast %79 : vector<1x128xf32> to vector<128xf32>
      %81 = vector.shape_cast %80 : vector<128xf32> to vector<1x1x128xf32>
      %82 = vector.broadcast %81 : vector<1x1x128xf32> to vector<8x16x128xf32>
      %83 = arith.mulf %78, %82 : vector<8x16x128xf32>
      %84 = arith.addf %77, %83 : vector<8x16x128xf32>
      %85 = vector.extract_strided_slice %63 {offsets = [3, 0, 0], sizes = [8, 16, 128], strides = [1, 1, 1]} : vector<12x16x128xf32> to vector<8x16x128xf32>
      %86 = vector.extract_strided_slice %23 {offsets = [16, 0], sizes = [1, 128], strides = [1, 1]} : vector<25x128xf32> to vector<1x128xf32>
      %87 = vector.shape_cast %86 : vector<1x128xf32> to vector<128xf32>
      %88 = vector.shape_cast %87 : vector<128xf32> to vector<1x1x128xf32>
      %89 = vector.broadcast %88 : vector<1x1x128xf32> to vector<8x16x128xf32>
      %90 = arith.mulf %85, %89 : vector<8x16x128xf32>
      %91 = arith.addf %84, %90 : vector<8x16x128xf32>
      %92 = vector.extract_strided_slice %63 {offsets = [4, 0, 0], sizes = [8, 16, 128], strides = [1, 1, 1]} : vector<12x16x128xf32> to vector<8x16x128xf32>
      %93 = vector.extract_strided_slice %23 {offsets = [21, 0], sizes = [1, 128], strides = [1, 1]} : vector<25x128xf32> to vector<1x128xf32>
      %94 = vector.shape_cast %93 : vector<1x128xf32> to vector<128xf32>
      %95 = vector.shape_cast %94 : vector<128xf32> to vector<1x1x128xf32>
      %96 = vector.broadcast %95 : vector<1x1x128xf32> to vector<8x16x128xf32>
      %97 = arith.mulf %92, %96 : vector<8x16x128xf32>
      %98 = arith.addf %91, %97 : vector<8x16x128xf32>
      %99 = arith.index_cast %22 : i32 to index
      %c8_42 = arith.constant 8 : index
      %c0_43 = arith.constant 0 : index
      %100 = vector.load %arg9[%99, %c8_42, %c0_43] : memref<20x32x128xf32, #tpu.memory_space<vmem>>, vector<12x16x128xf32>
      %101 = vector.extract_strided_slice %100 {offsets = [0, 0, 0], sizes = [8, 16, 128], strides = [1, 1, 1]} : vector<12x16x128xf32> to vector<8x16x128xf32>
      %102 = vector.extract_strided_slice %23 {offsets = [2, 0], sizes = [1, 128], strides = [1, 1]} : vector<25x128xf32> to vector<1x128xf32>
      %103 = vector.shape_cast %102 : vector<1x128xf32> to vector<128xf32>
      %104 = vector.shape_cast %103 : vector<128xf32> to vector<1x1x128xf32>
      %105 = vector.broadcast %104 : vector<1x1x128xf32> to vector<8x16x128xf32>
      %106 = arith.mulf %101, %105 : vector<8x16x128xf32>
      %107 = arith.addf %98, %106 : vector<8x16x128xf32>
      %108 = vector.extract_strided_slice %100 {offsets = [1, 0, 0], sizes = [8, 16, 128], strides = [1, 1, 1]} : vector<12x16x128xf32> to vector<8x16x128xf32>
      %109 = vector.extract_strided_slice %23 {offsets = [7, 0], sizes = [1, 128], strides = [1, 1]} : vector<25x128xf32> to vector<1x128xf32>
      %110 = vector.shape_cast %109 : vector<1x128xf32> to vector<128xf32>
      %111 = vector.shape_cast %110 : vector<128xf32> to vector<1x1x128xf32>
      %112 = vector.broadcast %111 : vector<1x1x128xf32> to vector<8x16x128xf32>
      %113 = arith.mulf %108, %112 : vector<8x16x128xf32>
      %114 = arith.addf %107, %113 : vector<8x16x128xf32>
      %115 = vector.extract_strided_slice %100 {offsets = [2, 0, 0], sizes = [8, 16, 128], strides = [1, 1, 1]} : vector<12x16x128xf32> to vector<8x16x128xf32>
      %116 = vector.extract_strided_slice %23 {offsets = [12, 0], sizes = [1, 128], strides = [1, 1]} : vector<25x128xf32> to vector<1x128xf32>
      %117 = vector.shape_cast %116 : vector<1x128xf32> to vector<128xf32>
      %118 = vector.shape_cast %117 : vector<128xf32> to vector<1x1x128xf32>
      %119 = vector.broadcast %118 : vector<1x1x128xf32> to vector<8x16x128xf32>
      %120 = arith.mulf %115, %119 : vector<8x16x128xf32>
      %121 = arith.addf %114, %120 : vector<8x16x128xf32>
      %122 = vector.extract_strided_slice %100 {offsets = [3, 0, 0], sizes = [8, 16, 128], strides = [1, 1, 1]} : vector<12x16x128xf32> to vector<8x16x128xf32>
      %123 = vector.extract_strided_slice %23 {offsets = [17, 0], sizes = [1, 128], strides = [1, 1]} : vector<25x128xf32> to vector<1x128xf32>
      %124 = vector.shape_cast %123 : vector<1x128xf32> to vector<128xf32>
      %125 = vector.shape_cast %124 : vector<128xf32> to vector<1x1x128xf32>
      %126 = vector.broadcast %125 : vector<1x1x128xf32> to vector<8x16x128xf32>
      %127 = arith.mulf %122, %126 : vector<8x16x128xf32>
      %128 = arith.addf %121, %127 : vector<8x16x128xf32>
      %129 = vector.extract_strided_slice %100 {offsets = [4, 0, 0], sizes = [8, 16, 128], strides = [1, 1, 1]} : vector<12x16x128xf32> to vector<8x16x128xf32>
      %130 = vector.extract_strided_slice %23 {offsets = [22, 0], sizes = [1, 128], strides = [1, 1]} : vector<25x128xf32> to vector<1x128xf32>
      %131 = vector.shape_cast %130 : vector<1x128xf32> to vector<128xf32>
      %132 = vector.shape_cast %131 : vector<128xf32> to vector<1x1x128xf32>
      %133 = vector.broadcast %132 : vector<1x1x128xf32> to vector<8x16x128xf32>
      %134 = arith.mulf %129, %133 : vector<8x16x128xf32>
      %135 = arith.addf %128, %134 : vector<8x16x128xf32>
      %136 = arith.index_cast %22 : i32 to index
      %c9 = arith.constant 9 : index
      %c0_44 = arith.constant 0 : index
      %137 = vector.load %arg9[%136, %c9, %c0_44] : memref<20x32x128xf32, #tpu.memory_space<vmem>>, vector<12x16x128xf32>
      %138 = vector.extract_strided_slice %137 {offsets = [0, 0, 0], sizes = [8, 16, 128], strides = [1, 1, 1]} : vector<12x16x128xf32> to vector<8x16x128xf32>
      %139 = vector.extract_strided_slice %23 {offsets = [3, 0], sizes = [1, 128], strides = [1, 1]} : vector<25x128xf32> to vector<1x128xf32>
      %140 = vector.shape_cast %139 : vector<1x128xf32> to vector<128xf32>
      %141 = vector.shape_cast %140 : vector<128xf32> to vector<1x1x128xf32>
      %142 = vector.broadcast %141 : vector<1x1x128xf32> to vector<8x16x128xf32>
      %143 = arith.mulf %138, %142 : vector<8x16x128xf32>
      %144 = arith.addf %135, %143 : vector<8x16x128xf32>
      %145 = vector.extract_strided_slice %137 {offsets = [1, 0, 0], sizes = [8, 16, 128], strides = [1, 1, 1]} : vector<12x16x128xf32> to vector<8x16x128xf32>
      %146 = vector.extract_strided_slice %23 {offsets = [8, 0], sizes = [1, 128], strides = [1, 1]} : vector<25x128xf32> to vector<1x128xf32>
      %147 = vector.shape_cast %146 : vector<1x128xf32> to vector<128xf32>
      %148 = vector.shape_cast %147 : vector<128xf32> to vector<1x1x128xf32>
      %149 = vector.broadcast %148 : vector<1x1x128xf32> to vector<8x16x128xf32>
      %150 = arith.mulf %145, %149 : vector<8x16x128xf32>
      %151 = arith.addf %144, %150 : vector<8x16x128xf32>
      %152 = vector.extract_strided_slice %137 {offsets = [2, 0, 0], sizes = [8, 16, 128], strides = [1, 1, 1]} : vector<12x16x128xf32> to vector<8x16x128xf32>
      %153 = vector.extract_strided_slice %23 {offsets = [13, 0], sizes = [1, 128], strides = [1, 1]} : vector<25x128xf32> to vector<1x128xf32>
      %154 = vector.shape_cast %153 : vector<1x128xf32> to vector<128xf32>
      %155 = vector.shape_cast %154 : vector<128xf32> to vector<1x1x128xf32>
      %156 = vector.broadcast %155 : vector<1x1x128xf32> to vector<8x16x128xf32>
      %157 = arith.mulf %152, %156 : vector<8x16x128xf32>
      %158 = arith.addf %151, %157 : vector<8x16x128xf32>
      %159 = vector.extract_strided_slice %137 {offsets = [3, 0, 0], sizes = [8, 16, 128], strides = [1, 1, 1]} : vector<12x16x128xf32> to vector<8x16x128xf32>
      %160 = vector.extract_strided_slice %23 {offsets = [18, 0], sizes = [1, 128], strides = [1, 1]} : vector<25x128xf32> to vector<1x128xf32>
      %161 = vector.shape_cast %160 : vector<1x128xf32> to vector<128xf32>
      %162 = vector.shape_cast %161 : vector<128xf32> to vector<1x1x128xf32>
      %163 = vector.broadcast %162 : vector<1x1x128xf32> to vector<8x16x128xf32>
      %164 = arith.mulf %159, %163 : vector<8x16x128xf32>
      %165 = arith.addf %158, %164 : vector<8x16x128xf32>
      %166 = vector.extract_strided_slice %137 {offsets = [4, 0, 0], sizes = [8, 16, 128], strides = [1, 1, 1]} : vector<12x16x128xf32> to vector<8x16x128xf32>
      %167 = vector.extract_strided_slice %23 {offsets = [23, 0], sizes = [1, 128], strides = [1, 1]} : vector<25x128xf32> to vector<1x128xf32>
      %168 = vector.shape_cast %167 : vector<1x128xf32> to vector<128xf32>
      %169 = vector.shape_cast %168 : vector<128xf32> to vector<1x1x128xf32>
      %170 = vector.broadcast %169 : vector<1x1x128xf32> to vector<8x16x128xf32>
      %171 = arith.mulf %166, %170 : vector<8x16x128xf32>
      %172 = arith.addf %165, %171 : vector<8x16x128xf32>
      %173 = arith.index_cast %22 : i32 to index
      %c10 = arith.constant 10 : index
      %c0_45 = arith.constant 0 : index
      %174 = vector.load %arg9[%173, %c10, %c0_45] : memref<20x32x128xf32, #tpu.memory_space<vmem>>, vector<12x16x128xf32>
      %175 = vector.extract_strided_slice %174 {offsets = [0, 0, 0], sizes = [8, 16, 128], strides = [1, 1, 1]} : vector<12x16x128xf32> to vector<8x16x128xf32>
      %176 = vector.extract_strided_slice %23 {offsets = [4, 0], sizes = [1, 128], strides = [1, 1]} : vector<25x128xf32> to vector<1x128xf32>
      %177 = vector.shape_cast %176 : vector<1x128xf32> to vector<128xf32>
      %178 = vector.shape_cast %177 : vector<128xf32> to vector<1x1x128xf32>
      %179 = vector.broadcast %178 : vector<1x1x128xf32> to vector<8x16x128xf32>
      %180 = arith.mulf %175, %179 : vector<8x16x128xf32>
      %181 = arith.addf %172, %180 : vector<8x16x128xf32>
      %182 = vector.extract_strided_slice %174 {offsets = [1, 0, 0], sizes = [8, 16, 128], strides = [1, 1, 1]} : vector<12x16x128xf32> to vector<8x16x128xf32>
      %183 = vector.extract_strided_slice %23 {offsets = [9, 0], sizes = [1, 128], strides = [1, 1]} : vector<25x128xf32> to vector<1x128xf32>
      %184 = vector.shape_cast %183 : vector<1x128xf32> to vector<128xf32>
      %185 = vector.shape_cast %184 : vector<128xf32> to vector<1x1x128xf32>
      %186 = vector.broadcast %185 : vector<1x1x128xf32> to vector<8x16x128xf32>
      %187 = arith.mulf %182, %186 : vector<8x16x128xf32>
      %188 = arith.addf %181, %187 : vector<8x16x128xf32>
      %189 = vector.extract_strided_slice %174 {offsets = [2, 0, 0], sizes = [8, 16, 128], strides = [1, 1, 1]} : vector<12x16x128xf32> to vector<8x16x128xf32>
      %190 = vector.extract_strided_slice %23 {offsets = [14, 0], sizes = [1, 128], strides = [1, 1]} : vector<25x128xf32> to vector<1x128xf32>
      %191 = vector.shape_cast %190 : vector<1x128xf32> to vector<128xf32>
      %192 = vector.shape_cast %191 : vector<128xf32> to vector<1x1x128xf32>
      %193 = vector.broadcast %192 : vector<1x1x128xf32> to vector<8x16x128xf32>
      %194 = arith.mulf %189, %193 : vector<8x16x128xf32>
      %195 = arith.addf %188, %194 : vector<8x16x128xf32>
      %196 = vector.extract_strided_slice %174 {offsets = [3, 0, 0], sizes = [8, 16, 128], strides = [1, 1, 1]} : vector<12x16x128xf32> to vector<8x16x128xf32>
      %197 = vector.extract_strided_slice %23 {offsets = [19, 0], sizes = [1, 128], strides = [1, 1]} : vector<25x128xf32> to vector<1x128xf32>
      %198 = vector.shape_cast %197 : vector<1x128xf32> to vector<128xf32>
      %199 = vector.shape_cast %198 : vector<128xf32> to vector<1x1x128xf32>
      %200 = vector.broadcast %199 : vector<1x1x128xf32> to vector<8x16x128xf32>
      %201 = arith.mulf %196, %200 : vector<8x16x128xf32>
      %202 = arith.addf %195, %201 : vector<8x16x128xf32>
      %203 = vector.extract_strided_slice %174 {offsets = [4, 0, 0], sizes = [8, 16, 128], strides = [1, 1, 1]} : vector<12x16x128xf32> to vector<8x16x128xf32>
      %204 = vector.extract_strided_slice %23 {offsets = [24, 0], sizes = [1, 128], strides = [1, 1]} : vector<25x128xf32> to vector<1x128xf32>
      %205 = vector.shape_cast %204 : vector<1x128xf32> to vector<128xf32>
      %206 = vector.shape_cast %205 : vector<128xf32> to vector<1x1x128xf32>
      %207 = vector.broadcast %206 : vector<1x1x128xf32> to vector<8x16x128xf32>
      %208 = arith.mulf %203, %207 : vector<8x16x128xf32>
      %209 = arith.addf %202, %208 : vector<8x16x128xf32>
      %c0_46 = arith.constant 0 : index
      %c0_47 = arith.constant 0 : index
      %210 = vector.load %arg3[%c0_46, %c0_47] : memref<1x128xf32, #tpu.memory_space<vmem>>, vector<1x128xf32>
      %211 = vector.shape_cast %210 : vector<1x128xf32> to vector<1x1x128xf32>
      %212 = vector.broadcast %211 : vector<1x1x128xf32> to vector<8x16x128xf32>
      %213 = arith.addf %209, %212 : vector<8x16x128xf32>
      %c6_i32 = arith.constant 6 : i32
      %214 = arith.addi %c6_i32, %22 : i32
      %215 = arith.index_cast %214 : i32 to index
      %c8_48 = arith.constant 8 : index
      %c0_49 = arith.constant 0 : index
      %216 = vector.load %arg10[%215, %c8_48, %c0_49] : memref<28x32x128xf32, #tpu.memory_space<vmem>>, vector<8x16x128xf32>
      tpu.vector_store %arg10[%215, %c8_48, %c0_49], %213 {strides = array<i32>} : memref<28x32x128xf32, #tpu.memory_space<vmem>>, vector<8x16x128xf32>,
    }
    %c2_i32_31 = arith.constant 2 : i32
    %c0_i32_32 = arith.constant 0 : i32
    %c2_i32_33 = arith.constant 2 : i32
    %20 = arith.addi %c0_i32_32, %c2_i32_33 : i32
    %c1_i32_34 = arith.constant 1 : i32
    scf.for %arg11 = %c0_i32_32 to %20 step %c1_i32_34  : i32 {
      %c8_i32 = arith.constant 8 : i32
      %21 = arith.muli %arg11, %c8_i32 : i32
      %22 = tpu.assume_multiple %21, 8 : i32
      %c0_36 = arith.constant 0 : index
      %c0_37 = arith.constant 0 : index
      %23 = vector.load %arg4[%c0_36, %c0_37] : memref<25x128xf32, #tpu.memory_space<vmem>>, vector<25x128xf32>
      %cst_38 = arith.constant 0.000000e+00 : f32
      %24 = vector.broadcast %cst_38 : f32 to vector<8x16x128xf32>
      %25 = arith.index_cast %22 : i32 to index
      %c2_39 = arith.constant 2 : index
      %c0_40 = arith.constant 0 : index
      %26 = vector.load %arg10[%25, %c2_39, %c0_40] : memref<28x32x128xf32, #tpu.memory_space<vmem>>, vector<20x16x128xf32>
      %27 = vector.extract_strided_slice %26 {offsets = [0, 0, 0], sizes = [8, 16, 128], strides = [1, 1, 1]} : vector<20x16x128xf32> to vector<8x16x128xf32>
      %28 = vector.extract_strided_slice %23 {offsets = [0, 0], sizes = [1, 128], strides = [1, 1]} : vector<25x128xf32> to vector<1x128xf32>
      %29 = vector.shape_cast %28 : vector<1x128xf32> to vector<128xf32>
      %30 = vector.shape_cast %29 : vector<128xf32> to vector<1x1x128xf32>
      %31 = vector.broadcast %30 : vector<1x1x128xf32> to vector<8x16x128xf32>
      %32 = arith.mulf %27, %31 : vector<8x16x128xf32>
      %33 = arith.addf %24, %32 : vector<8x16x128xf32>
      %34 = vector.extract_strided_slice %26 {offsets = [3, 0, 0], sizes = [8, 16, 128], strides = [1, 1, 1]} : vector<20x16x128xf32> to vector<8x16x128xf32>
      %35 = vector.extract_strided_slice %23 {offsets = [5, 0], sizes = [1, 128], strides = [1, 1]} : vector<25x128xf32> to vector<1x128xf32>
      %36 = vector.shape_cast %35 : vector<1x128xf32> to vector<128xf32>
      %37 = vector.shape_cast %36 : vector<128xf32> to vector<1x1x128xf32>
      %38 = vector.broadcast %37 : vector<1x1x128xf32> to vector<8x16x128xf32>
      %39 = arith.mulf %34, %38 : vector<8x16x128xf32>
      %40 = arith.addf %33, %39 : vector<8x16x128xf32>
      %41 = vector.extract_strided_slice %26 {offsets = [6, 0, 0], sizes = [8, 16, 128], strides = [1, 1, 1]} : vector<20x16x128xf32> to vector<8x16x128xf32>
      %42 = vector.extract_strided_slice %23 {offsets = [10, 0], sizes = [1, 128], strides = [1, 1]} : vector<25x128xf32> to vector<1x128xf32>
      %43 = vector.shape_cast %42 : vector<1x128xf32> to vector<128xf32>
      %44 = vector.shape_cast %43 : vector<128xf32> to vector<1x1x128xf32>
      %45 = vector.broadcast %44 : vector<1x1x128xf32> to vector<8x16x128xf32>
      %46 = arith.mulf %41, %45 : vector<8x16x128xf32>
      %47 = arith.addf %40, %46 : vector<8x16x128xf32>
      %48 = vector.extract_strided_slice %26 {offsets = [9, 0, 0], sizes = [8, 16, 128], strides = [1, 1, 1]} : vector<20x16x128xf32> to vector<8x16x128xf32>
      %49 = vector.extract_strided_slice %23 {offsets = [15, 0], sizes = [1, 128], strides = [1, 1]} : vector<25x128xf32> to vector<1x128xf32>
      %50 = vector.shape_cast %49 : vector<1x128xf32> to vector<128xf32>
      %51 = vector.shape_cast %50 : vector<128xf32> to vector<1x1x128xf32>
      %52 = vector.broadcast %51 : vector<1x1x128xf32> to vector<8x16x128xf32>
      %53 = arith.mulf %48, %52 : vector<8x16x128xf32>
      %54 = arith.addf %47, %53 : vector<8x16x128xf32>
      %55 = vector.extract_strided_slice %26 {offsets = [12, 0, 0], sizes = [8, 16, 128], strides = [1, 1, 1]} : vector<20x16x128xf32> to vector<8x16x128xf32>
      %56 = vector.extract_strided_slice %23 {offsets = [20, 0], sizes = [1, 128], strides = [1, 1]} : vector<25x128xf32> to vector<1x128xf32>
      %57 = vector.shape_cast %56 : vector<1x128xf32> to vector<128xf32>
      %58 = vector.shape_cast %57 : vector<128xf32> to vector<1x1x128xf32>
      %59 = vector.broadcast %58 : vector<1x1x128xf32> to vector<8x16x128xf32>
      %60 = arith.mulf %55, %59 : vector<8x16x128xf32>
      %61 = arith.addf %54, %60 : vector<8x16x128xf32>
      %62 = arith.index_cast %22 : i32 to index
      %c5 = arith.constant 5 : index
      %c0_41 = arith.constant 0 : index
      %63 = vector.load %arg10[%62, %c5, %c0_41] : memref<28x32x128xf32, #tpu.memory_space<vmem>>, vector<20x16x128xf32>
      %64 = vector.extract_strided_slice %63 {offsets = [0, 0, 0], sizes = [8, 16, 128], strides = [1, 1, 1]} : vector<20x16x128xf32> to vector<8x16x128xf32>
      %65 = vector.extract_strided_slice %23 {offsets = [1, 0], sizes = [1, 128], strides = [1, 1]} : vector<25x128xf32> to vector<1x128xf32>
      %66 = vector.shape_cast %65 : vector<1x128xf32> to vector<128xf32>
      %67 = vector.shape_cast %66 : vector<128xf32> to vector<1x1x128xf32>
      %68 = vector.broadcast %67 : vector<1x1x128xf32> to vector<8x16x128xf32>
      %69 = arith.mulf %64, %68 : vector<8x16x128xf32>
      %70 = arith.addf %61, %69 : vector<8x16x128xf32>
      %71 = vector.extract_strided_slice %63 {offsets = [3, 0, 0], sizes = [8, 16, 128], strides = [1, 1, 1]} : vector<20x16x128xf32> to vector<8x16x128xf32>
      %72 = vector.extract_strided_slice %23 {offsets = [6, 0], sizes = [1, 128], strides = [1, 1]} : vector<25x128xf32> to vector<1x128xf32>
      %73 = vector.shape_cast %72 : vector<1x128xf32> to vector<128xf32>
      %74 = vector.shape_cast %73 : vector<128xf32> to vector<1x1x128xf32>
      %75 = vector.broadcast %74 : vector<1x1x128xf32> to vector<8x16x128xf32>
      %76 = arith.mulf %71, %75 : vector<8x16x128xf32>
      %77 = arith.addf %70, %76 : vector<8x16x128xf32>
      %78 = vector.extract_strided_slice %63 {offsets = [6, 0, 0], sizes = [8, 16, 128], strides = [1, 1, 1]} : vector<20x16x128xf32> to vector<8x16x128xf32>
      %79 = vector.extract_strided_slice %23 {offsets = [11, 0], sizes = [1, 128], strides = [1, 1]} : vector<25x128xf32> to vector<1x128xf32>
      %80 = vector.shape_cast %79 : vector<1x128xf32> to vector<128xf32>
      %81 = vector.shape_cast %80 : vector<128xf32> to vector<1x1x128xf32>
      %82 = vector.broadcast %81 : vector<1x1x128xf32> to vector<8x16x128xf32>
      %83 = arith.mulf %78, %82 : vector<8x16x128xf32>
      %84 = arith.addf %77, %83 : vector<8x16x128xf32>
      %85 = vector.extract_strided_slice %63 {offsets = [9, 0, 0], sizes = [8, 16, 128], strides = [1, 1, 1]} : vector<20x16x128xf32> to vector<8x16x128xf32>
      %86 = vector.extract_strided_slice %23 {offsets = [16, 0], sizes = [1, 128], strides = [1, 1]} : vector<25x128xf32> to vector<1x128xf32>
      %87 = vector.shape_cast %86 : vector<1x128xf32> to vector<128xf32>
      %88 = vector.shape_cast %87 : vector<128xf32> to vector<1x1x128xf32>
      %89 = vector.broadcast %88 : vector<1x1x128xf32> to vector<8x16x128xf32>
      %90 = arith.mulf %85, %89 : vector<8x16x128xf32>
      %91 = arith.addf %84, %90 : vector<8x16x128xf32>
      %92 = vector.extract_strided_slice %63 {offsets = [12, 0, 0], sizes = [8, 16, 128], strides = [1, 1, 1]} : vector<20x16x128xf32> to vector<8x16x128xf32>
      %93 = vector.extract_strided_slice %23 {offsets = [21, 0], sizes = [1, 128], strides = [1, 1]} : vector<25x128xf32> to vector<1x128xf32>
      %94 = vector.shape_cast %93 : vector<1x128xf32> to vector<128xf32>
      %95 = vector.shape_cast %94 : vector<128xf32> to vector<1x1x128xf32>
      %96 = vector.broadcast %95 : vector<1x1x128xf32> to vector<8x16x128xf32>
      %97 = arith.mulf %92, %96 : vector<8x16x128xf32>
      %98 = arith.addf %91, %97 : vector<8x16x128xf32>
      %99 = arith.index_cast %22 : i32 to index
      %c8_42 = arith.constant 8 : index
      %c0_43 = arith.constant 0 : index
      %100 = vector.load %arg10[%99, %c8_42, %c0_43] : memref<28x32x128xf32, #tpu.memory_space<vmem>>, vector<20x16x128xf32>
      %101 = vector.extract_strided_slice %100 {offsets = [0, 0, 0], sizes = [8, 16, 128], strides = [1, 1, 1]} : vector<20x16x128xf32> to vector<8x16x128xf32>
      %102 = vector.extract_strided_slice %23 {offsets = [2, 0], sizes = [1, 128], strides = [1, 1]} : vector<25x128xf32> to vector<1x128xf32>
      %103 = vector.shape_cast %102 : vector<1x128xf32> to vector<128xf32>
      %104 = vector.shape_cast %103 : vector<128xf32> to vector<1x1x128xf32>
      %105 = vector.broadcast %104 : vector<1x1x128xf32> to vector<8x16x128xf32>
      %106 = arith.mulf %101, %105 : vector<8x16x128xf32>
      %107 = arith.addf %98, %106 : vector<8x16x128xf32>
      %108 = vector.extract_strided_slice %100 {offsets = [3, 0, 0], sizes = [8, 16, 128], strides = [1, 1, 1]} : vector<20x16x128xf32> to vector<8x16x128xf32>
      %109 = vector.extract_strided_slice %23 {offsets = [7, 0], sizes = [1, 128], strides = [1, 1]} : vector<25x128xf32> to vector<1x128xf32>
      %110 = vector.shape_cast %109 : vector<1x128xf32> to vector<128xf32>
      %111 = vector.shape_cast %110 : vector<128xf32> to vector<1x1x128xf32>
      %112 = vector.broadcast %111 : vector<1x1x128xf32> to vector<8x16x128xf32>
      %113 = arith.mulf %108, %112 : vector<8x16x128xf32>
      %114 = arith.addf %107, %113 : vector<8x16x128xf32>
      %115 = vector.extract_strided_slice %100 {offsets = [6, 0, 0], sizes = [8, 16, 128], strides = [1, 1, 1]} : vector<20x16x128xf32> to vector<8x16x128xf32>
      %116 = vector.extract_strided_slice %23 {offsets = [12, 0], sizes = [1, 128], strides = [1, 1]} : vector<25x128xf32> to vector<1x128xf32>
      %117 = vector.shape_cast %116 : vector<1x128xf32> to vector<128xf32>
      %118 = vector.shape_cast %117 : vector<128xf32> to vector<1x1x128xf32>
      %119 = vector.broadcast %118 : vector<1x1x128xf32> to vector<8x16x128xf32>
      %120 = arith.mulf %115, %119 : vector<8x16x128xf32>
      %121 = arith.addf %114, %120 : vector<8x16x128xf32>
      %122 = vector.extract_strided_slice %100 {offsets = [9, 0, 0], sizes = [8, 16, 128], strides = [1, 1, 1]} : vector<20x16x128xf32> to vector<8x16x128xf32>
      %123 = vector.extract_strided_slice %23 {offsets = [17, 0], sizes = [1, 128], strides = [1, 1]} : vector<25x128xf32> to vector<1x128xf32>
      %124 = vector.shape_cast %123 : vector<1x128xf32> to vector<128xf32>
      %125 = vector.shape_cast %124 : vector<128xf32> to vector<1x1x128xf32>
      %126 = vector.broadcast %125 : vector<1x1x128xf32> to vector<8x16x128xf32>
      %127 = arith.mulf %122, %126 : vector<8x16x128xf32>
      %128 = arith.addf %121, %127 : vector<8x16x128xf32>
      %129 = vector.extract_strided_slice %100 {offsets = [12, 0, 0], sizes = [8, 16, 128], strides = [1, 1, 1]} : vector<20x16x128xf32> to vector<8x16x128xf32>
      %130 = vector.extract_strided_slice %23 {offsets = [22, 0], sizes = [1, 128], strides = [1, 1]} : vector<25x128xf32> to vector<1x128xf32>
      %131 = vector.shape_cast %130 : vector<1x128xf32> to vector<128xf32>
      %132 = vector.shape_cast %131 : vector<128xf32> to vector<1x1x128xf32>
      %133 = vector.broadcast %132 : vector<1x1x128xf32> to vector<8x16x128xf32>
      %134 = arith.mulf %129, %133 : vector<8x16x128xf32>
      %135 = arith.addf %128, %134 : vector<8x16x128xf32>
      %136 = arith.index_cast %22 : i32 to index
      %c11 = arith.constant 11 : index
      %c0_44 = arith.constant 0 : index
      %137 = vector.load %arg10[%136, %c11, %c0_44] : memref<28x32x128xf32, #tpu.memory_space<vmem>>, vector<20x16x128xf32>
      %138 = vector.extract_strided_slice %137 {offsets = [0, 0, 0], sizes = [8, 16, 128], strides = [1, 1, 1]} : vector<20x16x128xf32> to vector<8x16x128xf32>
      %139 = vector.extract_strided_slice %23 {offsets = [3, 0], sizes = [1, 128], strides = [1, 1]} : vector<25x128xf32> to vector<1x128xf32>
      %140 = vector.shape_cast %139 : vector<1x128xf32> to vector<128xf32>
      %141 = vector.shape_cast %140 : vector<128xf32> to vector<1x1x128xf32>
      %142 = vector.broadcast %141 : vector<1x1x128xf32> to vector<8x16x128xf32>
      %143 = arith.mulf %138, %142 : vector<8x16x128xf32>
      %144 = arith.addf %135, %143 : vector<8x16x128xf32>
      %145 = vector.extract_strided_slice %137 {offsets = [3, 0, 0], sizes = [8, 16, 128], strides = [1, 1, 1]} : vector<20x16x128xf32> to vector<8x16x128xf32>
      %146 = vector.extract_strided_slice %23 {offsets = [8, 0], sizes = [1, 128], strides = [1, 1]} : vector<25x128xf32> to vector<1x128xf32>
      %147 = vector.shape_cast %146 : vector<1x128xf32> to vector<128xf32>
      %148 = vector.shape_cast %147 : vector<128xf32> to vector<1x1x128xf32>
      %149 = vector.broadcast %148 : vector<1x1x128xf32> to vector<8x16x128xf32>
      %150 = arith.mulf %145, %149 : vector<8x16x128xf32>
      %151 = arith.addf %144, %150 : vector<8x16x128xf32>
      %152 = vector.extract_strided_slice %137 {offsets = [6, 0, 0], sizes = [8, 16, 128], strides = [1, 1, 1]} : vector<20x16x128xf32> to vector<8x16x128xf32>
      %153 = vector.extract_strided_slice %23 {offsets = [13, 0], sizes = [1, 128], strides = [1, 1]} : vector<25x128xf32> to vector<1x128xf32>
      %154 = vector.shape_cast %153 : vector<1x128xf32> to vector<128xf32>
      %155 = vector.shape_cast %154 : vector<128xf32> to vector<1x1x128xf32>
      %156 = vector.broadcast %155 : vector<1x1x128xf32> to vector<8x16x128xf32>
      %157 = arith.mulf %152, %156 : vector<8x16x128xf32>
      %158 = arith.addf %151, %157 : vector<8x16x128xf32>
      %159 = vector.extract_strided_slice %137 {offsets = [9, 0, 0], sizes = [8, 16, 128], strides = [1, 1, 1]} : vector<20x16x128xf32> to vector<8x16x128xf32>
      %160 = vector.extract_strided_slice %23 {offsets = [18, 0], sizes = [1, 128], strides = [1, 1]} : vector<25x128xf32> to vector<1x128xf32>
      %161 = vector.shape_cast %160 : vector<1x128xf32> to vector<128xf32>
      %162 = vector.shape_cast %161 : vector<128xf32> to vector<1x1x128xf32>
      %163 = vector.broadcast %162 : vector<1x1x128xf32> to vector<8x16x128xf32>
      %164 = arith.mulf %159, %163 : vector<8x16x128xf32>
      %165 = arith.addf %158, %164 : vector<8x16x128xf32>
      %166 = vector.extract_strided_slice %137 {offsets = [12, 0, 0], sizes = [8, 16, 128], strides = [1, 1, 1]} : vector<20x16x128xf32> to vector<8x16x128xf32>
      %167 = vector.extract_strided_slice %23 {offsets = [23, 0], sizes = [1, 128], strides = [1, 1]} : vector<25x128xf32> to vector<1x128xf32>
      %168 = vector.shape_cast %167 : vector<1x128xf32> to vector<128xf32>
      %169 = vector.shape_cast %168 : vector<128xf32> to vector<1x1x128xf32>
      %170 = vector.broadcast %169 : vector<1x1x128xf32> to vector<8x16x128xf32>
      %171 = arith.mulf %166, %170 : vector<8x16x128xf32>
      %172 = arith.addf %165, %171 : vector<8x16x128xf32>
      %173 = arith.index_cast %22 : i32 to index
      %c14 = arith.constant 14 : index
      %c0_45 = arith.constant 0 : index
      %174 = vector.load %arg10[%173, %c14, %c0_45] : memref<28x32x128xf32, #tpu.memory_space<vmem>>, vector<20x16x128xf32>
      %175 = vector.extract_strided_slice %174 {offsets = [0, 0, 0], sizes = [8, 16, 128], strides = [1, 1, 1]} : vector<20x16x128xf32> to vector<8x16x128xf32>
      %176 = vector.extract_strided_slice %23 {offsets = [4, 0], sizes = [1, 128], strides = [1, 1]} : vector<25x128xf32> to vector<1x128xf32>
      %177 = vector.shape_cast %176 : vector<1x128xf32> to vector<128xf32>
      %178 = vector.shape_cast %177 : vector<128xf32> to vector<1x1x128xf32>
      %179 = vector.broadcast %178 : vector<1x1x128xf32> to vector<8x16x128xf32>
      %180 = arith.mulf %175, %179 : vector<8x16x128xf32>
      %181 = arith.addf %172, %180 : vector<8x16x128xf32>
      %182 = vector.extract_strided_slice %174 {offsets = [3, 0, 0], sizes = [8, 16, 128], strides = [1, 1, 1]} : vector<20x16x128xf32> to vector<8x16x128xf32>
      %183 = vector.extract_strided_slice %23 {offsets = [9, 0], sizes = [1, 128], strides = [1, 1]} : vector<25x128xf32> to vector<1x128xf32>
      %184 = vector.shape_cast %183 : vector<1x128xf32> to vector<128xf32>
      %185 = vector.shape_cast %184 : vector<128xf32> to vector<1x1x128xf32>
      %186 = vector.broadcast %185 : vector<1x1x128xf32> to vector<8x16x128xf32>
      %187 = arith.mulf %182, %186 : vector<8x16x128xf32>
      %188 = arith.addf %181, %187 : vector<8x16x128xf32>
      %189 = vector.extract_strided_slice %174 {offsets = [6, 0, 0], sizes = [8, 16, 128], strides = [1, 1, 1]} : vector<20x16x128xf32> to vector<8x16x128xf32>
      %190 = vector.extract_strided_slice %23 {offsets = [14, 0], sizes = [1, 128], strides = [1, 1]} : vector<25x128xf32> to vector<1x128xf32>
      %191 = vector.shape_cast %190 : vector<1x128xf32> to vector<128xf32>
      %192 = vector.shape_cast %191 : vector<128xf32> to vector<1x1x128xf32>
      %193 = vector.broadcast %192 : vector<1x1x128xf32> to vector<8x16x128xf32>
      %194 = arith.mulf %189, %193 : vector<8x16x128xf32>
      %195 = arith.addf %188, %194 : vector<8x16x128xf32>
      %196 = vector.extract_strided_slice %174 {offsets = [9, 0, 0], sizes = [8, 16, 128], strides = [1, 1, 1]} : vector<20x16x128xf32> to vector<8x16x128xf32>
      %197 = vector.extract_strided_slice %23 {offsets = [19, 0], sizes = [1, 128], strides = [1, 1]} : vector<25x128xf32> to vector<1x128xf32>
      %198 = vector.shape_cast %197 : vector<1x128xf32> to vector<128xf32>
      %199 = vector.shape_cast %198 : vector<128xf32> to vector<1x1x128xf32>
      %200 = vector.broadcast %199 : vector<1x1x128xf32> to vector<8x16x128xf32>
      %201 = arith.mulf %196, %200 : vector<8x16x128xf32>
      %202 = arith.addf %195, %201 : vector<8x16x128xf32>
      %203 = vector.extract_strided_slice %174 {offsets = [12, 0, 0], sizes = [8, 16, 128], strides = [1, 1, 1]} : vector<20x16x128xf32> to vector<8x16x128xf32>
      %204 = vector.extract_strided_slice %23 {offsets = [24, 0], sizes = [1, 128], strides = [1, 1]} : vector<25x128xf32> to vector<1x128xf32>
      %205 = vector.shape_cast %204 : vector<1x128xf32> to vector<128xf32>
      %206 = vector.shape_cast %205 : vector<128xf32> to vector<1x1x128xf32>
      %207 = vector.broadcast %206 : vector<1x1x128xf32> to vector<8x16x128xf32>
      %208 = arith.mulf %203, %207 : vector<8x16x128xf32>
      %209 = arith.addf %202, %208 : vector<8x16x128xf32>
      %c0_46 = arith.constant 0 : index
      %c0_47 = arith.constant 0 : index
      %210 = vector.load %arg5[%c0_46, %c0_47] : memref<1x128xf32, #tpu.memory_space<vmem>>, vector<1x128xf32>
      %211 = vector.shape_cast %210 : vector<1x128xf32> to vector<1x1x128xf32>
      %212 = vector.broadcast %211 : vector<1x1x128xf32> to vector<8x16x128xf32>
      %213 = arith.addf %209, %212 : vector<8x16x128xf32>
      %214 = vector.shape_cast %213 : vector<8x16x128xf32> to vector<128x128xf32>
      %c0_48 = arith.constant 0 : index
      %c0_49 = arith.constant 0 : index
      %215 = vector.load %arg6[%c0_48, %c0_49] : memref<128x128xf32, #tpu.memory_space<vmem>>, vector<128x128xf32>
      %cst_50 = arith.constant dense<0.000000e+00> : vector<128x128xf32>
      %216 = tpu.matmul %214, %215, %cst_50 {dimension_numbers = #tpu.dot_dimension_numbers<[1], [0], [0], [1], [0, 0, 1, 1], [], []>} : vector<128x128xf32>, vector<128x128xf32>, vector<128x128xf32> -> vector<128x128xf32>
      %c0_51 = arith.constant 0 : index
      %c0_52 = arith.constant 0 : index
      %217 = vector.load %arg7[%c0_51, %c0_52] : memref<1x128xf32, #tpu.memory_space<vmem>>, vector<1x128xf32>
      %218 = vector.broadcast %217 : vector<1x128xf32> to vector<128x128xf32>
      %219 = arith.addf %216, %218 : vector<128x128xf32>
      %c0_53 = arith.constant 0 : index
      %220 = arith.index_cast %22 : i32 to index
      %c0_54 = arith.constant 0 : index
      %c0_55 = arith.constant 0 : index
      %221 = vector.load %arg1[%c0_53, %220, %c0_54, %c0_55] : memref<1x16x16x128xf32, #tpu.memory_space<vmem>>, vector<1x8x16x128xf32>
      %222 = vector.shape_cast %221 : vector<1x8x16x128xf32> to vector<8x16x128xf32>
      %223 = vector.shape_cast %222 : vector<8x16x128xf32> to vector<128x128xf32>
      %224 = arith.mulf %223, %219 : vector<128x128xf32>
      %c0_56 = arith.constant 0 : index
      %225 = arith.index_cast %arg11 : i32 to index
      %c0_57 = arith.constant 0 : index
      %c0_58 = arith.constant 0 : index
      %226 = vector.load %arg8[%c0_56, %225, %c0_57, %c0_58] : memref<1x2x128x128xf32, #tpu.memory_space<vmem>>, vector<1x1x128x128xf32>
      %227 = vector.shape_cast %226 : vector<1x1x128x128xf32> to vector<128x128xf32>
      %228 = vector.shape_cast %224 : vector<128x128xf32> to vector<1x1x128x128xf32>
      tpu.vector_store %arg8[%c0_56, %225, %c0_57, %c0_58], %228 {strides = array<i32>} : memref<1x2x128x128xf32, #tpu.memory_space<vmem>>, vector<1x1x128x128xf32>,
    }
    %c2_i32_35 = arith.constant 2 : i32
    return
  }
  func.func @transform_0(%arg0: i32) -> (i32, i32, i32, i32) {
    %c0_i32 = arith.constant 0 : i32
    %c0_i32_0 = arith.constant 0 : i32
    %c0_i32_1 = arith.constant 0 : i32
    %c0_i32_2 = arith.constant 0 : i32
    return %arg0, %c0_i32, %c0_i32_0, %c0_i32_1 : i32, i32, i32, i32
  }
  func.func @transform_1(%arg0: i32) -> (i32, i32) {
    %c0_i32 = arith.constant 0 : i32
    %c0_i32_0 = arith.constant 0 : i32
    %c0_i32_1 = arith.constant 0 : i32
    return %c0_i32, %c0_i32_0 : i32, i32
  }
  func.func @transform_2(%arg0: i32) -> (i32, i32) {
    %c0_i32 = arith.constant 0 : i32
    %c0_i32_0 = arith.constant 0 : i32
    %c0_i32_1 = arith.constant 0 : i32
    return %c0_i32, %c0_i32_0 : i32, i32
  }
  func.func @transform_3(%arg0: i32) -> (i32, i32) {
    %c0_i32 = arith.constant 0 : i32
    %c0_i32_0 = arith.constant 0 : i32
    %c0_i32_1 = arith.constant 0 : i32
    return %c0_i32, %c0_i32_0 : i32, i32
  }
  func.func @transform_4(%arg0: i32) -> (i32, i32) {
    %c0_i32 = arith.constant 0 : i32
    %c0_i32_0 = arith.constant 0 : i32
    %c0_i32_1 = arith.constant 0 : i32
    return %c0_i32, %c0_i32_0 : i32, i32
  }
  func.func @transform_5(%arg0: i32) -> (i32, i32) {
    %c0_i32 = arith.constant 0 : i32
    %c0_i32_0 = arith.constant 0 : i32
    %c0_i32_1 = arith.constant 0 : i32
    return %c0_i32, %c0_i32_0 : i32, i32
  }
  func.func @transform_6(%arg0: i32) -> (i32, i32) {
    %c0_i32 = arith.constant 0 : i32
    %c0_i32_0 = arith.constant 0 : i32
    %c0_i32_1 = arith.constant 0 : i32
    return %c0_i32, %c0_i32_0 : i32, i32
  }
  func.func @transform_7(%arg0: i32) -> (i32, i32, i32, i32) {
    %c0_i32 = arith.constant 0 : i32
    %c0_i32_0 = arith.constant 0 : i32
    %c0_i32_1 = arith.constant 0 : i32
    %c0_i32_2 = arith.constant 0 : i32
    return %arg0, %c0_i32, %c0_i32_0, %c0_i32_1 : i32, i32, i32, i32
  }
}

</mosaic_0001>

<llo_original>
// kernel: lka_pallas.1
$region0: #{lka_pallas.1}
  #allocation0 [shape = 'u32[]', space=smem, size = 0x4, offset = 0x4, fixed_abs, tag = 'smem constant byte address 0x4 - core index']
  #allocation1 [shape = 'u32[144,128]{1,0:T(1,128)}', space=vmem, size = 0x12000, scoped, tag = 'internal scratch']
  #allocation2 [shape = 'f32[20,32,128]{2,1,0:T(8,128)}', space=vmem, size = 0x50000, scoped, tag = 'scratch operand']
  #allocation3 [shape = 'f32[28,32,128]{2,1,0:T(8,128)}', space=vmem, size = 0x70000, scoped, tag = 'scratch operand']
  %s0 = inlined_call_operand.hbm [shape: f32[8,16,16,128], index: 0, kind: input, shape index: {}]
  %s1 = inlined_call_operand.vmem [shape: f32[25,128], index: 1, kind: input, shape index: {}]
  %s2 = inlined_call_operand.vmem [shape: f32[1,128], index: 2, kind: input, shape index: {}]
  %s3 = inlined_call_operand.vmem [shape: f32[25,128], index: 3, kind: input, shape index: {}]
  %s4 = inlined_call_operand.vmem [shape: f32[1,128], index: 4, kind: input, shape index: {}]
  %s5 = inlined_call_operand.vmem [shape: f32[128,128], index: 5, kind: input, shape index: {}]
  %s6 = inlined_call_operand.vmem [shape: f32[1,128], index: 6, kind: input, shape index: {}]
  %s7 = inlined_call_operand.hbm [shape: f32[8,2,128,128], index: 7, kind: output, shape index: {}]
  %s8 = sld [smem:[#allocation0]]
  $region79: #{lka_pallas.1} parent=0
    _
  %s10 = ssub.s32 1, %s8
  %s11 = scalar_select 0, %s10, %s8
  $region1: #{lka_pallas.1} parent=0
    #allocation4 [shape = 'u8[262144]{0}', space=vmem, size = 0x40000, scoped, tag = 'input window, operand 0']
    #allocation5 [shape = 's32[2]{0}', space=sflag, size = 0x8, scoped, tag = 'scoped memory for lka_pallas.1']
    #allocation6 [shape = 's32[2]{0}', space=sflag, size = 0x8, scoped, tag = 'scoped memory for lka_pallas.1']
    #allocation7 [shape = 'u8[262144]{0}', space=vmem, size = 0x40000, scoped, tag = 'output window, operand 0']
    %12 = vsyncpa [#allocation5], 0
    %s13 = scalar_lea.sflag [#allocation5], 1
    %14 = vsyncpa %s13, 0
    %15 = vsyncpa [#allocation6], 0
    %s16 = scalar_lea.sflag [#allocation6], 1
    %17 = vsyncpa %s16, 0
    loop: start=0, step=1, limit=10
    $region2: #{lka_pallas.1} parent=1 // loop_pre_header
      _
    $region3: #{lka_pallas.1} parent=1 // loop_header
      %s19 = sphi 0, %s23
      %p20 = scmp.ge.s32.totalorder %s19, 10
      %s29 = sphi 0, %s31
      %s32 = sphi 0, %s29
      %s33 = sphi 0, %s32
      %s49 = sphi 0, %s33
      %s53 = sphi 0, %s53
      %s55 = sphi 0, %s53
      %s56 = sphi 0, %s55
      %s70 = sphi 0, %s56
      %s74 = sphi 0, %s74
      %s76 = sphi 0, %s74
      %s77 = sphi 0, %s76
      %s91 = sphi 0, %s77
      %s95 = sphi 0, %s95
      %s97 = sphi 0, %s95
      %s98 = sphi 0, %s97
      %s112 = sphi 0, %s98
      %s116 = sphi 0, %s116
      %s118 = sphi 0, %s116
      %s119 = sphi 0, %s118
      %s133 = sphi 0, %s119
      %s137 = sphi 0, %s137
      %s139 = sphi 0, %s137
      %s140 = sphi 0, %s139
      %s154 = sphi 0, %s140
      %s158 = sphi 0, %s158
      %s160 = sphi 0, %s158
      %s161 = sphi 0, %s160
      %s175 = sphi 0, %s161
      %s181 = sphi 0, %s183
      %s184 = sphi 0, %s181
      %s185 = sphi 0, %s184
      %s201 = sphi 0, %s185
    $region4: #{lka_pallas.1} parent=1 // loop_header_branch
      %22 = sbr.rel (%p20) target = $region8
    $region5: #{lka_pallas.1} parent=1 // loop_body
      %s24 = ssub.s32 %s19, 1
      %s25 = ssub.s32 %s19, 2
      %s26 = sadd.s32 %s19, 1
      %s27 = ssub.s32 %s19, %s26
      %p28 = scmp.eq.s32.totalorder %s27, 0
      %s30 = sadd.s32 %s29, 1
      %s31 = scalar_select %p28, %s29, %s30
      %p34 = pneg %p28
      %p35 = scmp.eq.s32.totalorder %s19, 7
      %p36 = por %p34, %p35
      %p37 = scmp.ne.s32.totalorder %s29, %s32
      %p38 = scmp.eq.s32.totalorder %s19, 0
      %p39 = por %p37, %p38
      %p40 = scmp.ne.s32.totalorder %s29, %s32
      %p41 = scmp.eq.s32.totalorder %s24, 7
      %p42 = por %p40, %p41
      %p43 = scmp.ne.s32.totalorder %s32, %s33
      %p44 = scmp.eq.s32.totalorder %s24, 0
      %p45 = por %p43, %p44
      %p46 = scmp.ne.s32.totalorder %s32, %s33
      %p47 = scmp.eq.s32.totalorder %s25, 7
      %p48 = por %p46, %p47
      %p50 = scmp.ne.s32.totalorder %s33, %s49
      %p51 = scmp.eq.s32.totalorder %s25, 0
      %p52 = por %p50, %p51
      %s54 = sadd.s32 %s53, 1
      %p57 = scmp.eq.s32.totalorder %s19, 7
      %p58 = scmp.ne.s32.totalorder %s53, %s55
      %p59 = scmp.eq.s32.totalorder %s19, 0
      %p60 = por %p58, %p59
      %p61 = scmp.ne.s32.totalorder %s53, %s55
      %p62 = scmp.eq.s32.totalorder %s24, 7
      %p63 = por %p61, %p62
      %p64 = scmp.ne.s32.totalorder %s55, %s56
      %p65 = scmp.eq.s32.totalorder %s24, 0
      %p66 = por %p64, %p65
      %p67 = scmp.ne.s32.totalorder %s55, %s56
      %p68 = scmp.eq.s32.totalorder %s25, 7
      %p69 = por %p67, %p68
      %p71 = scmp.ne.s32.totalorder %s56, %s70
      %p72 = scmp.eq.s32.totalorder %s25, 0
      %p73 = por %p71, %p72
      %s75 = sadd.s32 %s74, 1
      %p78 = scmp.eq.s32.totalorder %s19, 7
      %p79 = scmp.ne.s32.totalorder %s74, %s76
      %p80 = scmp.eq.s32.totalorder %s19, 0
      %p81 = por %p79, %p80
      %p82 = scmp.ne.s32.totalorder %s74, %s76
      %p83 = scmp.eq.s32.totalorder %s24, 7
      %p84 = por %p82, %p83
      %p85 = scmp.ne.s32.totalorder %s76, %s77
      %p86 = scmp.eq.s32.totalorder %s24, 0
      %p87 = por %p85, %p86
      %p88 = scmp.ne.s32.totalorder %s76, %s77
      %p89 = scmp.eq.s32.totalorder %s25, 7
      %p90 = por %p88, %p89
      %p92 = scmp.ne.s32.totalorder %s77, %s91
      %p93 = scmp.eq.s32.totalorder %s25, 0
      %p94 = por %p92, %p93
      %s96 = sadd.s32 %s95, 1
      %p99 = scmp.eq.s32.totalorder %s19, 7
      %p100 = scmp.ne.s32.totalorder %s95, %s97
      %p101 = scmp.eq.s32.totalorder %s19, 0
      %p102 = por %p100, %p101
      %p103 = scmp.ne.s32.totalorder %s95, %s97
      %p104 = scmp.eq.s32.totalorder %s24, 7
      %p105 = por %p103, %p104
      %p106 = scmp.ne.s32.totalorder %s97, %s98
      %p107 = scmp.eq.s32.totalorder %s24, 0
      %p108 = por %p106, %p107
      %p109 = scmp.ne.s32.totalorder %s97, %s98
      %p110 = scmp.eq.s32.totalorder %s25, 7
      %p111 = por %p109, %p110
      %p113 = scmp.ne.s32.totalorder %s98, %s112
      %p114 = scmp.eq.s32.totalorder %s25, 0
      %p115 = por %p113, %p114
      %s117 = sadd.s32 %s116, 1
      %p120 = scmp.eq.s32.totalorder %s19, 7
      %p121 = scmp.ne.s32.totalorder %s116, %s118
      %p122 = scmp.eq.s32.totalorder %s19, 0
      %p123 = por %p121, %p122
      %p124 = scmp.ne.s32.totalorder %s116, %s118
      %p125 = scmp.eq.s32.totalorder %s24, 7
      %p126 = por %p124, %p125
      %p127 = scmp.ne.s32.totalorder %s118, %s119
      %p128 = scmp.eq.s32.totalorder %s24, 0
      %p129 = por %p127, %p128
      %p130 = scmp.ne.s32.totalorder %s118, %s119
      %p131 = scmp.eq.s32.totalorder %s25, 7
      %p132 = por %p130, %p131
      %p134 = scmp.ne.s32.totalorder %s119, %s133
      %p135 = scmp.eq.s32.totalorder %s25, 0
      %p136 = por %p134, %p135
      %s138 = sadd.s32 %s137, 1
      %p141 = scmp.eq.s32.totalorder %s19, 7
      %p142 = scmp.ne.s32.totalorder %s137, %s139
      %p143 = scmp.eq.s32.totalorder %s19, 0
      %p144 = por %p142, %p143
      %p145 = scmp.ne.s32.totalorder %s137, %s139
      %p146 = scmp.eq.s32.totalorder %s24, 7
      %p147 = por %p145, %p146
      %p148 = scmp.ne.s32.totalorder %s139, %s140
      %p149 = scmp.eq.s32.totalorder %s24, 0
      %p150 = por %p148, %p149
      %p151 = scmp.ne.s32.totalorder %s139, %s140
      %p152 = scmp.eq.s32.totalorder %s25, 7
      %p153 = por %p151, %p152
      %p155 = scmp.ne.s32.totalorder %s140, %s154
      %p156 = scmp.eq.s32.totalorder %s25, 0
      %p157 = por %p155, %p156
      %s159 = sadd.s32 %s158, 1
      %p162 = scmp.eq.s32.totalorder %s19, 7
      %p163 = scmp.ne.s32.totalorder %s158, %s160
      %p164 = scmp.eq.s32.totalorder %s19, 0
      %p165 = por %p163, %p164
      %p166 = scmp.ne.s32.totalorder %s158, %s160
      %p167 = scmp.eq.s32.totalorder %s24, 7
      %p168 = por %p166, %p167
      %p169 = scmp.ne.s32.totalorder %s160, %s161
      %p170 = scmp.eq.s32.totalorder %s24, 0
      %p171 = por %p169, %p170
      %p172 = scmp.ne.s32.totalorder %s160, %s161
      %p173 = scmp.eq.s32.totalorder %s25, 7
      %p174 = por %p172, %p173
      %p176 = scmp.ne.s32.totalorder %s161, %s175
      %p177 = scmp.eq.s32.totalorder %s25, 0
      %p178 = por %p176, %p177
      %s179 = ssub.s32 %s19, %s26
      %p180 = scmp.eq.s32.totalorder %s179, 0
      %s182 = sadd.s32 %s181, 1
      %s183 = scalar_select %p180, %s181, %s182
      %p186 = pneg %p180
      %p187 = scmp.eq.s32.totalorder %s19, 7
      %p188 = por %p186, %p187
      %p189 = scmp.ne.s32.totalorder %s181, %s184
      %p190 = scmp.eq.s32.totalorder %s19, 0
      %p191 = por %p189, %p190
      %p192 = scmp.ne.s32.totalorder %s181, %s184
      %p193 = scmp.eq.s32.totalorder %s24, 7
      %p194 = por %p192, %p193
      %p195 = scmp.ne.s32.totalorder %s184, %s185
      %p196 = scmp.eq.s32.totalorder %s24, 0
      %p197 = por %p195, %p196
      %p198 = scmp.ne.s32.totalorder %s184, %s185
      %p199 = scmp.eq.s32.totalorder %s25, 7
      %p200 = por %p198, %p199
      %p202 = scmp.ne.s32.totalorder %s185, %s201
      %p203 = scmp.eq.s32.totalorder %s25, 0
      %p204 = por %p202, %p203
      %p205 = scmp.le.s32.totalorder 1, %s19
      %p206 = scmp.lt.s32.totalorder %s19, 9
      %p207 = pnand %p205, %p206
      %p208 = pneg %p207
      // Predicated region
      $region9: #{lka_pallas.1} parent=5 // pred_check
        _
      $region10: #{lka_pallas.1} parent=5 // pred_check_branch
        %210 = sbr.rel (%p207) target = $region12
      $region11: #{lka_pallas.1} parent=5 // pred_region
        %s211 = ssub.s32 %s19, 1
        // Predicated region
        $region13: #{lka_pallas.1} parent=11 // pred_check
          %p212 = pneg %p66
        $region14: #{lka_pallas.1} parent=11 // pred_check_branch
          %214 = sbr.rel (%p212) target = $region16
        $region15: #{lka_pallas.1} parent=11 // pred_region
          _
        $region16: #{lka_pallas.1} parent=11 // pred_fallthru
          _
        // Predicated region
        $region17: #{lka_pallas.1} parent=11 // pred_check
          %p215 = pneg %p87
        $region18: #{lka_pallas.1} parent=11 // pred_check_branch
          %217 = sbr.rel (%p215) target = $region20
        $region19: #{lka_pallas.1} parent=11 // pred_region
          _
        $region20: #{lka_pallas.1} parent=11 // pred_fallthru
          _
        // Predicated region
        $region21: #{lka_pallas.1} parent=11 // pred_check
          %p218 = pneg %p108
        $region22: #{lka_pallas.1} parent=11 // pred_check_branch
          %220 = sbr.rel (%p218) target = $region24
        $region23: #{lka_pallas.1} parent=11 // pred_region
          _
        $region24: #{lka_pallas.1} parent=11 // pred_fallthru
          _
        // Predicated region
        $region25: #{lka_pallas.1} parent=11 // pred_check
          %p221 = pneg %p129
        $region26: #{lka_pallas.1} parent=11 // pred_check_branch
          %223 = sbr.rel (%p221) target = $region28
        $region27: #{lka_pallas.1} parent=11 // pred_region
          _
        $region28: #{lka_pallas.1} parent=11 // pred_fallthru
          _
        // Predicated region
        $region29: #{lka_pallas.1} parent=11 // pred_check
          %p224 = pneg %p150
        $region30: #{lka_pallas.1} parent=11 // pred_check_branch
          %226 = sbr.rel (%p224) target = $region32
        $region31: #{lka_pallas.1} parent=11 // pred_region
          _
        $region32: #{lka_pallas.1} parent=11 // pred_fallthru
          _
        // Predicated region
        $region33: #{lka_pallas.1} parent=11 // pred_check
          %p227 = pneg %p171
        $region34: #{lka_pallas.1} parent=11 // pred_check_branch
          %229 = sbr.rel (%p227) target = $region36
        $region35: #{lka_pallas.1} parent=11 // pred_region
          _
        $region36: #{lka_pallas.1} parent=11 // pred_fallthru
          _
      $region12: #{lka_pallas.1} parent=5 // pred_fallthru
        _
      %p230 = scmp.lt.s32.totalorder %s19, 8
      // Predicated region
      $region37: #{lka_pallas.1} parent=5 // pred_check
        %p231 = pneg %p230
      $region38: #{lka_pallas.1} parent=5 // pred_check_branch
        %233 = sbr.rel (%p231) target = $region40
      $region39: #{lka_pallas.1} parent=5 // pred_region
        // Predicated region
        $region41: #{lka_pallas.1} parent=39 // pred_check
          %p234 = pneg %p39
        $region42: #{lka_pallas.1} parent=39 // pred_check_branch
          %236 = sbr.rel (%p234) target = $region44
        $region43: #{lka_pallas.1} parent=39 // pred_region
          %s237 = sand.u32 %s29, 1
          %s238 = scalar_lea.sflag [#allocation5], %s237
          %s239 = sand.u32 %s29, 1
          %s240 = smul.addr %s239, 256
          %s241 = scalar_lea.vmem [#allocation4], %s240
          %s243 = ssub.s32 4096, 4096
          %244 = vsyncadd %s238, %s243
          %s245 = smul.addr %s19, 32
          %s246 = smul.addr %s245, 128
          %s247 = scalar_lea.hbm %s0, %s246
          %s248 = sshll.u32 %s241, 4
          %s249 = int_to_ptr.vmem [resolvable:$true] %s248
          %254 = dma.hbm_to_vmem [thread:$0]  %s247, 4096, %s249, %s238, 128, 128, 8
        $region44: #{lka_pallas.1} parent=39 // pred_fallthru
          _
      $region40: #{lka_pallas.1} parent=5 // pred_fallthru
        _
      %p255 = scmp.le.s32.totalorder 1, %s19
      %p256 = scmp.lt.s32.totalorder %s19, 9
      %p257 = pnand %p255, %p256
      %p258 = pneg %p257
      // Predicated region
      $region45: #{lka_pallas.1} parent=5 // pred_check
        _
      $region46: #{lka_pallas.1} parent=5 // pred_check_branch
        %260 = sbr.rel (%p257) target = $region48
      $region47: #{lka_pallas.1} parent=5 // pred_region
        %s261 = ssub.s32 %s19, 1
        %s262 = sand.u32 %s32, 1
        %s263 = scalar_lea.sflag [#allocation5], %s262
        %s264 = sand.u32 %s32, 1
        %s265 = smul.addr %s264, 256
        %s266 = scalar_lea.vmem [#allocation4], %s265
        // Predicated region
        $region49: #{lka_pallas.1} parent=47 // pred_check
          %p267 = pneg %p45
        $region50: #{lka_pallas.1} parent=47 // pred_check_branch
          %269 = sbr.rel (%p267) target = $region52
        $region51: #{lka_pallas.1} parent=47 // pred_region
          %270 = dma.done %s263, 4096
        $region52: #{lka_pallas.1} parent=47 // pred_fallthru
          _
        %s271 = sand.u32 %s32, 1
        %s272 = scalar_lea.sflag [#allocation5], %s271
        %s273 = sand.u32 %s32, 1
        %s274 = smul.addr %s273, 256
        %s275 = scalar_lea.vmem [#allocation4], %s274
        %p276 = pneg %p45
        %p277 = pneg %p42
        %p278 = pneg %p66
        %p279 = pneg %p63
        %p280 = pneg %p87
        %p281 = pneg %p84
        %p282 = pneg %p108
        %p283 = pneg %p105
        %p284 = pneg %p129
        %p285 = pneg %p126
        %p286 = pneg %p150
        %p287 = pneg %p147
        %p288 = pneg %p171
        %p289 = pneg %p168
        %p290 = pneg %p197
        %p291 = pneg %p194
        %s292 = sand.u32 %s184, 1
        %s293 = scalar_lea.sflag [#allocation6], %s292
        %s294 = sand.u32 %s184, 1
        %s295 = smul.addr %s294, 256
        %s296 = scalar_lea.vmem [#allocation7], %s295
        %297 = vst [vmem:[#allocation2] sm:$0xff] 0.0
        %298 = vst [vmem:[#allocation2 + $0x8] sm:$0xff] 0.0
        %299 = vst [vmem:[#allocation2 + $0x10] sm:$0xff] 0.0
        %300 = vst [vmem:[#allocation2 + $0x18] sm:$0xff] 0.0
        %301 = vst [vmem:[#allocation2 + $0x20] sm:$0xff] 0.0
        %302 = vst [vmem:[#allocation2 + $0x28] sm:$0xff] 0.0
        %303 = vst [vmem:[#allocation2 + $0x30] sm:$0xff] 0.0
        %304 = vst [vmem:[#allocation2 + $0x38] sm:$0xff] 0.0
        %s305 = scalar_lea.vmem [#allocation2], 576
        %306 = vst [vmem:[%s305] sm:$0xff] 0.0
        %307 = vst [vmem:[%s305 + $0x8] sm:$0xff] 0.0
        %308 = vst [vmem:[%s305 + $0x10] sm:$0xff] 0.0
        %309 = vst [vmem:[%s305 + $0x18] sm:$0xff] 0.0
        %310 = vst [vmem:[%s305 + $0x20] sm:$0xff] 0.0
        %311 = vst [vmem:[%s305 + $0x28] sm:$0xff] 0.0
        %312 = vst [vmem:[%s305 + $0x30] sm:$0xff] 0.0
        %313 = vst [vmem:[%s305 + $0x38] sm:$0xff] 0.0
        %s314 = scalar_lea.vmem [#allocation2], 64
        %315 = vst [vmem:[%s314] sm:$0xff] 0.0
        %316 = vst [vmem:[%s314 + $0x20] sm:$0xff] 0.0
        %317 = vst [vmem:[%s314 + $0x40] sm:$0xff] 0.0
        %318 = vst [vmem:[%s314 + $0x60] sm:$0xff] 0.0
        %319 = vst [vmem:[%s314 + $0x80] sm:$0xff] 0.0
        %320 = vst [vmem:[%s314 + $0xa0] sm:$0xff] 0.0
        %321 = vst [vmem:[%s314 + $0xc0] sm:$0xff] 0.0
        %322 = vst [vmem:[%s314 + $0xe0] sm:$0xff] 0.0
        %323 = vst [vmem:[%s314 + $0x100] sm:$0xff] 0.0
        %324 = vst [vmem:[%s314 + $0x120] sm:$0xff] 0.0
        %325 = vst [vmem:[%s314 + $0x140] sm:$0xff] 0.0
        %326 = vst [vmem:[%s314 + $0x160] sm:$0xff] 0.0
        %327 = vst [vmem:[%s314 + $0x180] sm:$0xff] 0.0
        %328 = vst [vmem:[%s314 + $0x1a0] sm:$0xff] 0.0
        %329 = vst [vmem:[%s314 + $0x1c0] sm:$0xff] 0.0
        %330 = vst [vmem:[%s314 + $0x1e0] sm:$0xff] 0.0
        %331 = vst [vmem:[%s314 + $0x18] sm:$0xff] 0.0
        %332 = vst [vmem:[%s314 + $0x38] sm:$0xff] 0.0
        %333 = vst [vmem:[%s314 + $0x58] sm:$0xff] 0.0
        %334 = vst [vmem:[%s314 + $0x78] sm:$0xff] 0.0
        %335 = vst [vmem:[%s314 + $0x98] sm:$0xff] 0.0
        %336 = vst [vmem:[%s314 + $0xb8] sm:$0xff] 0.0
        %337 = vst [vmem:[%s314 + $0xd8] sm:$0xff] 0.0
        %338 = vst [vmem:[%s314 + $0xf8] sm:$0xff] 0.0
        %339 = vst [vmem:[%s314 + $0x118] sm:$0xff] 0.0
        %340 = vst [vmem:[%s314 + $0x138] sm:$0xff] 0.0
        %341 = vst [vmem:[%s314 + $0x158] sm:$0xff] 0.0
        %342 = vst [vmem:[%s314 + $0x178] sm:$0xff] 0.0
        %343 = vst [vmem:[%s314 + $0x198] sm:$0xff] 0.0
        %344 = vst [vmem:[%s314 + $0x1b8] sm:$0xff] 0.0
        %345 = vst [vmem:[%s314 + $0x1d8] sm:$0xff] 0.0
        %346 = vst [vmem:[%s314 + $0x1f8] sm:$0xff] 0.0
        %v347 = vld [vmem:[%s266] sm:$0xff]
        %v348 = vld [vmem:[%s266 + $0x8] sm:$0xff]
        %v349 = vld [vmem:[%s266 + $0x10] sm:$0xff]
        %v350 = vld [vmem:[%s266 + $0x18] sm:$0xff]
        %v351 = vld [vmem:[%s266 + $0x20] sm:$0xff]
        %v352 = vld [vmem:[%s266 + $0x28] sm:$0xff]
        %v353 = vld [vmem:[%s266 + $0x30] sm:$0xff]
        %v354 = vld [vmem:[%s266 + $0x38] sm:$0xff]
        %v355 = vld [vmem:[%s266 + $0x40] sm:$0xff]
        %v356 = vld [vmem:[%s266 + $0x48] sm:$0xff]
        %v357 = vld [vmem:[%s266 + $0x50] sm:$0xff]
        %v358 = vld [vmem:[%s266 + $0x58] sm:$0xff]
        %v359 = vld [vmem:[%s266 + $0x60] sm:$0xff]
        %v360 = vld [vmem:[%s266 + $0x68] sm:$0xff]
        %v361 = vld [vmem:[%s266 + $0x70] sm:$0xff]
        %v362 = vld [vmem:[%s266 + $0x78] sm:$0xff]
        %v363 = vld [vmem:[%s266 + $0x80] sm:$0xff]
        %v364 = vld [vmem:[%s266 + $0x88] sm:$0xff]
        %v365 = vld [vmem:[%s266 + $0x90] sm:$0xff]
        %v366 = vld [vmem:[%s266 + $0x98] sm:$0xff]
        %v367 = vld [vmem:[%s266 + $0xa0] sm:$0xff]
        %v368 = vld [vmem:[%s266 + $0xa8] sm:$0xff]
        %v369 = vld [vmem:[%s266 + $0xb0] sm:$0xff]
        %v370 = vld [vmem:[%s266 + $0xb8] sm:$0xff]
        %v371 = vld [vmem:[%s266 + $0xc0] sm:$0xff]
        %v372 = vld [vmem:[%s266 + $0xc8] sm:$0xff]
        %v373 = vld [vmem:[%s266 + $0xd0] sm:$0xff]
        %v374 = vld [vmem:[%s266 + $0xd8] sm:$0xff]
        %v375 = vld [vmem:[%s266 + $0xe0] sm:$0xff]
        %v376 = vld [vmem:[%s266 + $0xe8] sm:$0xff]
        %v377 = vld [vmem:[%s266 + $0xf0] sm:$0xff]
        %v378 = vld [vmem:[%s266 + $0xf8] sm:$0xff]
        %379 = vst [vmem:[%s314 + $0x8] sm:$0xff] %v347
        %380 = vst [vmem:[%s314 + $0x10] sm:$0xff] %v348
        %381 = vst [vmem:[%s314 + $0x28] sm:$0xff] %v349
        %382 = vst [vmem:[%s314 + $0x30] sm:$0xff] %v350
        %383 = vst [vmem:[%s314 + $0x48] sm:$0xff] %v351
        %384 = vst [vmem:[%s314 + $0x50] sm:$0xff] %v352
        %385 = vst [vmem:[%s314 + $0x68] sm:$0xff] %v353
        %386 = vst [vmem:[%s314 + $0x70] sm:$0xff] %v354
        %387 = vst [vmem:[%s314 + $0x88] sm:$0xff] %v355
        %388 = vst [vmem:[%s314 + $0x90] sm:$0xff] %v356
        %389 = vst [vmem:[%s314 + $0xa8] sm:$0xff] %v357
        %390 = vst [vmem:[%s314 + $0xb0] sm:$0xff] %v358
        %391 = vst [vmem:[%s314 + $0xc8] sm:$0xff] %v359
        %392 = vst [vmem:[%s314 + $0xd0] sm:$0xff] %v360
        %393 = vst [vmem:[%s314 + $0xe8] sm:$0xff] %v361
        %394 = vst [vmem:[%s314 + $0xf0] sm:$0xff] %v362
        %395 = vst [vmem:[%s314 + $0x108] sm:$0xff] %v363
        %396 = vst [vmem:[%s314 + $0x110] sm:$0xff] %v364
        %397 = vst [vmem:[%s314 + $0x128] sm:$0xff] %v365
        %398 = vst [vmem:[%s314 + $0x130] sm:$0xff] %v366
        %399 = vst [vmem:[%s314 + $0x148] sm:$0xff] %v367
        %400 = vst [vmem:[%s314 + $0x150] sm:$0xff] %v368
        %401 = vst [vmem:[%s314 + $0x168] sm:$0xff] %v369
        %402 = vst [vmem:[%s314 + $0x170] sm:$0xff] %v370
        %403 = vst [vmem:[%s314 + $0x188] sm:$0xff] %v371
        %404 = vst [vmem:[%s314 + $0x190] sm:$0xff] %v372
        %405 = vst [vmem:[%s314 + $0x1a8] sm:$0xff] %v373
        %406 = vst [vmem:[%s314 + $0x1b0] sm:$0xff] %v374
        %407 = vst [vmem:[%s314 + $0x1c8] sm:$0xff] %v375
        %408 = vst [vmem:[%s314 + $0x1d0] sm:$0xff] %v376
        %409 = vst [vmem:[%s314 + $0x1e8] sm:$0xff] %v377
        %410 = vst [vmem:[%s314 + $0x1f0] sm:$0xff] %v378
        %411 = vst [vmem:[#allocation3] sm:$0xff] 0.0
        %412 = vst [vmem:[#allocation3 + $0x8] sm:$0xff] 0.0
        %413 = vst [vmem:[#allocation3 + $0x10] sm:$0xff] 0.0
        %414 = vst [vmem:[#allocation3 + $0x18] sm:$0xff] 0.0
        %415 = vst [vmem:[#allocation3 + $0x20] sm:$0xff] 0.0
        %416 = vst [vmem:[#allocation3 + $0x28] sm:$0xff] 0.0
        %417 = vst [vmem:[#allocation3 + $0x30] sm:$0xff] 0.0
        %418 = vst [vmem:[#allocation3 + $0x38] sm:$0xff] 0.0
        %419 = vst [vmem:[#allocation3 + $0x40] sm:$0xff] 0.0
        %420 = vst [vmem:[#allocation3 + $0x48] sm:$0xff] 0.0
        %421 = vst [vmem:[#allocation3 + $0x50] sm:$0xff] 0.0
        %422 = vst [vmem:[#allocation3 + $0x58] sm:$0xff] 0.0
        %423 = vst [vmem:[#allocation3 + $0x60] sm:$0xff] 0.0
        %424 = vst [vmem:[#allocation3 + $0x68] sm:$0xff] 0.0
        %425 = vst [vmem:[#allocation3 + $0x70] sm:$0xff] 0.0
        %426 = vst [vmem:[#allocation3 + $0x78] sm:$0xff] 0.0
        %427 = vst [vmem:[#allocation3 + $0x80] sm:$0xff] 0.0
        %428 = vst [vmem:[#allocation3 + $0x88] sm:$0xff] 0.0
        %429 = vst [vmem:[#allocation3 + $0x90] sm:$0xff] 0.0
        %430 = vst [vmem:[#allocation3 + $0x98] sm:$0xff] 0.0
        %431 = vst [vmem:[#allocation3 + $0xa0] sm:$0xff] 0.0
        %432 = vst [vmem:[#allocation3 + $0xa8] sm:$0xff] 0.0
        %433 = vst [vmem:[#allocation3 + $0xb0] sm:$0xff] 0.0
        %434 = vst [vmem:[#allocation3 + $0xb8] sm:$0xff] 0.0
        %s435 = scalar_lea.vmem [#allocation3], 704
        %436 = vst [vmem:[%s435] sm:$0xff] 0.0
        %437 = vst [vmem:[%s435 + $0x8] sm:$0xff] 0.0
        %438 = vst [vmem:[%s435 + $0x10] sm:$0xff] 0.0
        %439 = vst [vmem:[%s435 + $0x18] sm:$0xff] 0.0
        %440 = vst [vmem:[%s435 + $0x20] sm:$0xff] 0.0
        %441 = vst [vmem:[%s435 + $0x28] sm:$0xff] 0.0
        %442 = vst [vmem:[%s435 + $0x30] sm:$0xff] 0.0
        %443 = vst [vmem:[%s435 + $0x38] sm:$0xff] 0.0
        %444 = vst [vmem:[%s435 + $0x40] sm:$0xff] 0.0
        %445 = vst [vmem:[%s435 + $0x48] sm:$0xff] 0.0
        %446 = vst [vmem:[%s435 + $0x50] sm:$0xff] 0.0
        %447 = vst [vmem:[%s435 + $0x58] sm:$0xff] 0.0
        %448 = vst [vmem:[%s435 + $0x60] sm:$0xff] 0.0
        %449 = vst [vmem:[%s435 + $0x68] sm:$0xff] 0.0
        %450 = vst [vmem:[%s435 + $0x70] sm:$0xff] 0.0
        %451 = vst [vmem:[%s435 + $0x78] sm:$0xff] 0.0
        %452 = vst [vmem:[%s435 + $0x80] sm:$0xff] 0.0
        %453 = vst [vmem:[%s435 + $0x88] sm:$0xff] 0.0
        %454 = vst [vmem:[%s435 + $0x90] sm:$0xff] 0.0
        %455 = vst [vmem:[%s435 + $0x98] sm:$0xff] 0.0
        %456 = vst [vmem:[%s435 + $0xa0] sm:$0xff] 0.0
        %457 = vst [vmem:[%s435 + $0xa8] sm:$0xff] 0.0
        %458 = vst [vmem:[%s435 + $0xb0] sm:$0xff] 0.0
        %459 = vst [vmem:[%s435 + $0xb8] sm:$0xff] 0.0
        %s460 = scalar_lea.vmem [#allocation3], 192
        %461 = vst [vmem:[%s460] sm:$0xff] 0.0
        %462 = vst [vmem:[%s460 + $0x20] sm:$0xff] 0.0
        %463 = vst [vmem:[%s460 + $0x40] sm:$0xff] 0.0
        %464 = vst [vmem:[%s460 + $0x60] sm:$0xff] 0.0
        %465 = vst [vmem:[%s460 + $0x80] sm:$0xff] 0.0
        %466 = vst [vmem:[%s460 + $0xa0] sm:$0xff] 0.0
        %467 = vst [vmem:[%s460 + $0xc0] sm:$0xff] 0.0
        %468 = vst [vmem:[%s460 + $0xe0] sm:$0xff] 0.0
        %469 = vst [vmem:[%s460 + $0x100] sm:$0xff] 0.0
        %470 = vst [vmem:[%s460 + $0x120] sm:$0xff] 0.0
        %471 = vst [vmem:[%s460 + $0x140] sm:$0xff] 0.0
        %472 = vst [vmem:[%s460 + $0x160] sm:$0xff] 0.0
        %473 = vst [vmem:[%s460 + $0x180] sm:$0xff] 0.0
        %474 = vst [vmem:[%s460 + $0x1a0] sm:$0xff] 0.0
        %475 = vst [vmem:[%s460 + $0x1c0] sm:$0xff] 0.0
        %476 = vst [vmem:[%s460 + $0x1e0] sm:$0xff] 0.0
        %477 = vst [vmem:[%s460 + $0x18] sm:$0xff] 0.0
        %478 = vst [vmem:[%s460 + $0x38] sm:$0xff] 0.0
        %479 = vst [vmem:[%s460 + $0x58] sm:$0xff] 0.0
        %480 = vst [vmem:[%s460 + $0x78] sm:$0xff] 0.0
        %481 = vst [vmem:[%s460 + $0x98] sm:$0xff] 0.0
        %482 = vst [vmem:[%s460 + $0xb8] sm:$0xff] 0.0
        %483 = vst [vmem:[%s460 + $0xd8] sm:$0xff] 0.0
        %484 = vst [vmem:[%s460 + $0xf8] sm:$0xff] 0.0
        %485 = vst [vmem:[%s460 + $0x118] sm:$0xff] 0.0
        %486 = vst [vmem:[%s460 + $0x138] sm:$0xff] 0.0
        %487 = vst [vmem:[%s460 + $0x158] sm:$0xff] 0.0
        %488 = vst [vmem:[%s460 + $0x178] sm:$0xff] 0.0
        %489 = vst [vmem:[%s460 + $0x198] sm:$0xff] 0.0
        %490 = vst [vmem:[%s460 + $0x1b8] sm:$0xff] 0.0
        %491 = vst [vmem:[%s460 + $0x1d8] sm:$0xff] 0.0
        %492 = vst [vmem:[%s460 + $0x1f8] sm:$0xff] 0.0
        loop: start=0, step=1, limit=2
        $region53: #{lka_pallas.1} parent=47 // loop_pre_header
          _
        $region54: #{lka_pallas.1} parent=47 // loop_header
          %s494 = sphi 0, %s498
          %p495 = scmp.ge.s32.totalorder %s494, 2
        $region55: #{lka_pallas.1} parent=47 // loop_header_branch
          %497 = sbr.rel (%p495) target = $region59
        $region56: #{lka_pallas.1} parent=47 // loop_body
          %s499 = smul.u32 %s494, 8
          %v500 = vld [vmem:[%s1] sm:$0xff]
          %v501 = vld [vmem:[%s1 + $0x8] sm:$0xff]
          %v502 = vld [vmem:[%s1 + $0x10] sm:$0xff]
          %v503 = vld [vmem:[%s1 + $0x18] sm:$0x1]
          %s504 = smul.u32 %s499, 32
          %s505 = scalar_lea.vmem [#allocation2], %s504
          %v506 = vld [vmem:[%s505 + $0x6] sm:$0xff]
          %v507 = vld [vmem:[%s505 + $0xe] sm:$0xff]
          %v508 = vld [vmem:[%s505 + $0x26] sm:$0xff]
          %v509 = vld [vmem:[%s505 + $0x2e] sm:$0xff]
          %v510 = vld [vmem:[%s505 + $0x46] sm:$0xff]
          %v511 = vld [vmem:[%s505 + $0x4e] sm:$0xff]
          %v512 = vld [vmem:[%s505 + $0x66] sm:$0xff]
          %v513 = vld [vmem:[%s505 + $0x6e] sm:$0xff]
          %v514 = vld [vmem:[%s505 + $0x86] sm:$0xff]
          %v515 = vld [vmem:[%s505 + $0x8e] sm:$0xff]
          %v516 = vld [vmem:[%s505 + $0xa6] sm:$0xff]
          %v517 = vld [vmem:[%s505 + $0xae] sm:$0xff]
          %v518 = vld [vmem:[%s505 + $0xc6] sm:$0xff]
          %v519 = vld [vmem:[%s505 + $0xce] sm:$0xff]
          %v520 = vld [vmem:[%s505 + $0xe6] sm:$0xff]
          %v521 = vld [vmem:[%s505 + $0xee] sm:$0xff]
          %v522 = vld [vmem:[%s505 + $0x106] sm:$0xff]
          %v523 = vld [vmem:[%s505 + $0x10e] sm:$0xff]
          %v524 = vld [vmem:[%s505 + $0x126] sm:$0xff]
          %v525 = vld [vmem:[%s505 + $0x12e] sm:$0xff]
          %v526 = vld [vmem:[%s505 + $0x146] sm:$0xff]
          %v527 = vld [vmem:[%s505 + $0x14e] sm:$0xff]
          %v528 = vld [vmem:[%s505 + $0x166] sm:$0xff]
          %v529 = vld [vmem:[%s505 + $0x16e] sm:$0xff]
          %v530 = vlaneseq
          %v531 = vshrl.u32 %v530, 7
          %v532 = vsub.s32 0, %v531
          %v533 = vrot.slane %v500, %v532
          %v534 = vmul.f32 %v506, %v533
          %v535 = vmul.f32 %v507, %v533
          %v536 = vmul.f32 %v508, %v533
          %v537 = vmul.f32 %v509, %v533
          %v538 = vmul.f32 %v510, %v533
          %v539 = vmul.f32 %v511, %v533
          %v540 = vmul.f32 %v512, %v533
          %v541 = vmul.f32 %v513, %v533
          %v542 = vmul.f32 %v514, %v533
          %v543 = vmul.f32 %v515, %v533
          %v544 = vmul.f32 %v516, %v533
          %v545 = vmul.f32 %v517, %v533
          %v546 = vmul.f32 %v518, %v533
          %v547 = vmul.f32 %v519, %v533
          %v548 = vmul.f32 %v520, %v533
          %v549 = vmul.f32 %v521, %v533
          %v550 = vadd.f32 %v534, 0.0
          %v551 = vadd.f32 %v535, 0.0
          %v552 = vadd.f32 %v536, 0.0
          %v553 = vadd.f32 %v537, 0.0
          %v554 = vadd.f32 %v538, 0.0
          %v555 = vadd.f32 %v539, 0.0
          %v556 = vadd.f32 %v540, 0.0
          %v557 = vadd.f32 %v541, 0.0
          %v558 = vadd.f32 %v542, 0.0
          %v559 = vadd.f32 %v543, 0.0
          %v560 = vadd.f32 %v544, 0.0
          %v561 = vadd.f32 %v545, 0.0
          %v562 = vadd.f32 %v546, 0.0
          %v563 = vadd.f32 %v547, 0.0
          %v564 = vadd.f32 %v548, 0.0
          %v565 = vadd.f32 %v549, 0.0
          %v566 = vlaneseq
          %v567 = vshrl.u32 %v566, 7
          %v568 = vsub.s32 5, %v567
          %v569 = vrot.slane %v500, %v568
          %v570 = vmul.f32 %v508, %v569
          %v571 = vmul.f32 %v509, %v569
          %v572 = vmul.f32 %v510, %v569
          %v573 = vmul.f32 %v511, %v569
          %v574 = vmul.f32 %v512, %v569
          %v575 = vmul.f32 %v513, %v569
          %v576 = vmul.f32 %v514, %v569
          %v577 = vmul.f32 %v515, %v569
          %v578 = vmul.f32 %v516, %v569
          %v579 = vmul.f32 %v517, %v569
          %v580 = vmul.f32 %v518, %v569
          %v581 = vmul.f32 %v519, %v569
          %v582 = vmul.f32 %v520, %v569
          %v583 = vmul.f32 %v521, %v569
          %v584 = vmul.f32 %v522, %v569
          %v585 = vmul.f32 %v523, %v569
          %v586 = vadd.f32 %v550, %v570
          %v587 = vadd.f32 %v551, %v571
          %v588 = vadd.f32 %v552, %v572
          %v589 = vadd.f32 %v553, %v573
          %v590 = vadd.f32 %v554, %v574
          %v591 = vadd.f32 %v555, %v575
          %v592 = vadd.f32 %v556, %v576
          %v593 = vadd.f32 %v557, %v577
          %v594 = vadd.f32 %v558, %v578
          %v595 = vadd.f32 %v559, %v579
          %v596 = vadd.f32 %v560, %v580
          %v597 = vadd.f32 %v561, %v581
          %v598 = vadd.f32 %v562, %v582
          %v599 = vadd.f32 %v563, %v583
          %v600 = vadd.f32 %v564, %v584
          %v601 = vadd.f32 %v565, %v585
          %v602 = vlaneseq
          %v603 = vshrl.u32 %v602, 7
          %v604 = vsub.s32 2, %v603
          %v605 = vrot.slane %v501, %v604
          %v606 = vmul.f32 %v510, %v605
          %v607 = vmul.f32 %v511, %v605
          %v608 = vmul.f32 %v512, %v605
          %v609 = vmul.f32 %v513, %v605
          %v610 = vmul.f32 %v514, %v605
          %v611 = vmul.f32 %v515, %v605
          %v612 = vmul.f32 %v516, %v605
          %v613 = vmul.f32 %v517, %v605
          %v614 = vmul.f32 %v518, %v605
          %v615 = vmul.f32 %v519, %v605
          %v616 = vmul.f32 %v520, %v605
          %v617 = vmul.f32 %v521, %v605
          %v618 = vmul.f32 %v522, %v605
          %v619 = vmul.f32 %v523, %v605
          %v620 = vmul.f32 %v524, %v605
          %v621 = vmul.f32 %v525, %v605
          %v622 = vadd.f32 %v586, %v606
          %v623 = vadd.f32 %v587, %v607
          %v624 = vadd.f32 %v588, %v608
          %v625 = vadd.f32 %v589, %v609
          %v626 = vadd.f32 %v590, %v610
          %v627 = vadd.f32 %v591, %v611
          %v628 = vadd.f32 %v592, %v612
          %v629 = vadd.f32 %v593, %v613
          %v630 = vadd.f32 %v594, %v614
          %v631 = vadd.f32 %v595, %v615
          %v632 = vadd.f32 %v596, %v616
          %v633 = vadd.f32 %v597, %v617
          %v634 = vadd.f32 %v598, %v618
          %v635 = vadd.f32 %v599, %v619
          %v636 = vadd.f32 %v600, %v620
          %v637 = vadd.f32 %v601, %v621
          %v638 = vlaneseq
          %v639 = vshrl.u32 %v638, 7
          %v640 = vsub.s32 7, %v639
          %v641 = vrot.slane %v501, %v640
          %v642 = vmul.f32 %v512, %v641
          %v643 = vmul.f32 %v513, %v641
          %v644 = vmul.f32 %v514, %v641
          %v645 = vmul.f32 %v515, %v641
          %v646 = vmul.f32 %v516, %v641
          %v647 = vmul.f32 %v517, %v641
          %v648 = vmul.f32 %v518, %v641
          %v649 = vmul.f32 %v519, %v641
          %v650 = vmul.f32 %v520, %v641
          %v651 = vmul.f32 %v521, %v641
          %v652 = vmul.f32 %v522, %v641
          %v653 = vmul.f32 %v523, %v641
          %v654 = vmul.f32 %v524, %v641
          %v655 = vmul.f32 %v525, %v641
          %v656 = vmul.f32 %v526, %v641
          %v657 = vmul.f32 %v527, %v641
          %v658 = vadd.f32 %v622, %v642
          %v659 = vadd.f32 %v623, %v643
          %v660 = vadd.f32 %v624, %v644
          %v661 = vadd.f32 %v625, %v645
          %v662 = vadd.f32 %v626, %v646
          %v663 = vadd.f32 %v627, %v647
          %v664 = vadd.f32 %v628, %v648
          %v665 = vadd.f32 %v629, %v649
          %v666 = vadd.f32 %v630, %v650
          %v667 = vadd.f32 %v631, %v651
          %v668 = vadd.f32 %v632, %v652
          %v669 = vadd.f32 %v633, %v653
          %v670 = vadd.f32 %v634, %v654
          %v671 = vadd.f32 %v635, %v655
          %v672 = vadd.f32 %v636, %v656
          %v673 = vadd.f32 %v637, %v657
          %v674 = vlaneseq
          %v675 = vshrl.u32 %v674, 7
          %v676 = vsub.s32 4, %v675
          %v677 = vrot.slane %v502, %v676
          %v678 = vmul.f32 %v514, %v677
          %v679 = vmul.f32 %v515, %v677
          %v680 = vmul.f32 %v516, %v677
          %v681 = vmul.f32 %v517, %v677
          %v682 = vmul.f32 %v518, %v677
          %v683 = vmul.f32 %v519, %v677
          %v684 = vmul.f32 %v520, %v677
          %v685 = vmul.f32 %v521, %v677
          %v686 = vmul.f32 %v522, %v677
          %v687 = vmul.f32 %v523, %v677
          %v688 = vmul.f32 %v524, %v677
          %v689 = vmul.f32 %v525, %v677
          %v690 = vmul.f32 %v526, %v677
          %v691 = vmul.f32 %v527, %v677
          %v692 = vmul.f32 %v528, %v677
          %v693 = vmul.f32 %v529, %v677
          %v694 = vadd.f32 %v658, %v678
          %v695 = vadd.f32 %v659, %v679
          %v696 = vadd.f32 %v660, %v680
          %v697 = vadd.f32 %v661, %v681
          %v698 = vadd.f32 %v662, %v682
          %v699 = vadd.f32 %v663, %v683
          %v700 = vadd.f32 %v664, %v684
          %v701 = vadd.f32 %v665, %v685
          %v702 = vadd.f32 %v666, %v686
          %v703 = vadd.f32 %v667, %v687
          %v704 = vadd.f32 %v668, %v688
          %v705 = vadd.f32 %v669, %v689
          %v706 = vadd.f32 %v670, %v690
          %v707 = vadd.f32 %v671, %v691
          %v708 = vadd.f32 %v672, %v692
          %v709 = vadd.f32 %v673, %v693
          %v710 = vld [vmem:[%s505 + $0x7] sm:$0xff]
          %v711 = vld [vmem:[%s505 + $0xf] sm:$0xff]
          %v712 = vld [vmem:[%s505 + $0x27] sm:$0xff]
          %v713 = vld [vmem:[%s505 + $0x2f] sm:$0xff]
          %v714 = vld [vmem:[%s505 + $0x47] sm:$0xff]
          %v715 = vld [vmem:[%s505 + $0x4f] sm:$0xff]
          %v716 = vld [vmem:[%s505 + $0x67] sm:$0xff]
          %v717 = vld [vmem:[%s505 + $0x6f] sm:$0xff]
          %v718 = vld [vmem:[%s505 + $0x87] sm:$0xff]
          %v719 = vld [vmem:[%s505 + $0x8f] sm:$0xff]
          %v720 = vld [vmem:[%s505 + $0xa7] sm:$0xff]
          %v721 = vld [vmem:[%s505 + $0xaf] sm:$0xff]
          %v722 = vld [vmem:[%s505 + $0xc7] sm:$0xff]
          %v723 = vld [vmem:[%s505 + $0xcf] sm:$0xff]
          %v724 = vld [vmem:[%s505 + $0xe7] sm:$0xff]
          %v725 = vld [vmem:[%s505 + $0xef] sm:$0xff]
          %v726 = vld [vmem:[%s505 + $0x107] sm:$0xff]
          %v727 = vld [vmem:[%s505 + $0x10f] sm:$0xff]
          %v728 = vld [vmem:[%s505 + $0x127] sm:$0xff]
          %v729 = vld [vmem:[%s505 + $0x12f] sm:$0xff]
          %v730 = vld [vmem:[%s505 + $0x147] sm:$0xff]
          %v731 = vld [vmem:[%s505 + $0x14f] sm:$0xff]
          %v732 = vld [vmem:[%s505 + $0x167] sm:$0xff]
          %v733 = vld [vmem:[%s505 + $0x16f] sm:$0xff]
          %v734 = vlaneseq
          %v735 = vshrl.u32 %v734, 7
          %v736 = vsub.s32 1, %v735
          %v737 = vrot.slane %v500, %v736
          %v738 = vmul.f32 %v710, %v737
          %v739 = vmul.f32 %v711, %v737
          %v740 = vmul.f32 %v712, %v737
          %v741 = vmul.f32 %v713, %v737
          %v742 = vmul.f32 %v714, %v737
          %v743 = vmul.f32 %v715, %v737
          %v744 = vmul.f32 %v716, %v737
          %v745 = vmul.f32 %v717, %v737
          %v746 = vmul.f32 %v718, %v737
          %v747 = vmul.f32 %v719, %v737
          %v748 = vmul.f32 %v720, %v737
          %v749 = vmul.f32 %v721, %v737
          %v750 = vmul.f32 %v722, %v737
          %v751 = vmul.f32 %v723, %v737
          %v752 = vmul.f32 %v724, %v737
          %v753 = vmul.f32 %v725, %v737
          %v754 = vadd.f32 %v694, %v738
          %v755 = vadd.f32 %v695, %v739
          %v756 = vadd.f32 %v696, %v740
          %v757 = vadd.f32 %v697, %v741
          %v758 = vadd.f32 %v698, %v742
          %v759 = vadd.f32 %v699, %v743
          %v760 = vadd.f32 %v700, %v744
          %v761 = vadd.f32 %v701, %v745
          %v762 = vadd.f32 %v702, %v746
          %v763 = vadd.f32 %v703, %v747
          %v764 = vadd.f32 %v704, %v748
          %v765 = vadd.f32 %v705, %v749
          %v766 = vadd.f32 %v706, %v750
          %v767 = vadd.f32 %v707, %v751
          %v768 = vadd.f32 %v708, %v752
          %v769 = vadd.f32 %v709, %v753
          %v770 = vlaneseq
          %v771 = vshrl.u32 %v770, 7
          %v772 = vsub.s32 6, %v771
          %v773 = vrot.slane %v500, %v772
          %v774 = vmul.f32 %v712, %v773
          %v775 = vmul.f32 %v713, %v773
          %v776 = vmul.f32 %v714, %v773
          %v777 = vmul.f32 %v715, %v773
          %v778 = vmul.f32 %v716, %v773
          %v779 = vmul.f32 %v717, %v773
          %v780 = vmul.f32 %v718, %v773
          %v781 = vmul.f32 %v719, %v773
          %v782 = vmul.f32 %v720, %v773
          %v783 = vmul.f32 %v721, %v773
          %v784 = vmul.f32 %v722, %v773
          %v785 = vmul.f32 %v723, %v773
          %v786 = vmul.f32 %v724, %v773
          %v787 = vmul.f32 %v725, %v773
          %v788 = vmul.f32 %v726, %v773
          %v789 = vmul.f32 %v727, %v773
          %v790 = vadd.f32 %v754, %v774
          %v791 = vadd.f32 %v755, %v775
          %v792 = vadd.f32 %v756, %v776
          %v793 = vadd.f32 %v757, %v777
          %v794 = vadd.f32 %v758, %v778
          %v795 = vadd.f32 %v759, %v779
          %v796 = vadd.f32 %v760, %v780
          %v797 = vadd.f32 %v761, %v781
          %v798 = vadd.f32 %v762, %v782
          %v799 = vadd.f32 %v763, %v783
          %v800 = vadd.f32 %v764, %v784
          %v801 = vadd.f32 %v765, %v785
          %v802 = vadd.f32 %v766, %v786
          %v803 = vadd.f32 %v767, %v787
          %v804 = vadd.f32 %v768, %v788
          %v805 = vadd.f32 %v769, %v789
          %v806 = vlaneseq
          %v807 = vshrl.u32 %v806, 7
          %v808 = vsub.s32 3, %v807
          %v809 = vrot.slane %v501, %v808
          %v810 = vmul.f32 %v714, %v809
          %v811 = vmul.f32 %v715, %v809
          %v812 = vmul.f32 %v716, %v809
          %v813 = vmul.f32 %v717, %v809
          %v814 = vmul.f32 %v718, %v809
          %v815 = vmul.f32 %v719, %v809
          %v816 = vmul.f32 %v720, %v809
          %v817 = vmul.f32 %v721, %v809
          %v818 = vmul.f32 %v722, %v809
          %v819 = vmul.f32 %v723, %v809
          %v820 = vmul.f32 %v724, %v809
          %v821 = vmul.f32 %v725, %v809
          %v822 = vmul.f32 %v726, %v809
          %v823 = vmul.f32 %v727, %v809
          %v824 = vmul.f32 %v728, %v809
          %v825 = vmul.f32 %v729, %v809
          %v826 = vadd.f32 %v790, %v810
          %v827 = vadd.f32 %v791, %v811
          %v828 = vadd.f32 %v792, %v812
          %v829 = vadd.f32 %v793, %v813
          %v830 = vadd.f32 %v794, %v814
          %v831 = vadd.f32 %v795, %v815
          %v832 = vadd.f32 %v796, %v816
          %v833 = vadd.f32 %v797, %v817
          %v834 = vadd.f32 %v798, %v818
          %v835 = vadd.f32 %v799, %v819
          %v836 = vadd.f32 %v800, %v820
          %v837 = vadd.f32 %v801, %v821
          %v838 = vadd.f32 %v802, %v822
          %v839 = vadd.f32 %v803, %v823
          %v840 = vadd.f32 %v804, %v824
          %v841 = vadd.f32 %v805, %v825
          %v842 = vlaneseq
          %v843 = vshrl.u32 %v842, 7
          %v844 = vsub.s32 0, %v843
          %v845 = vrot.slane %v502, %v844
          %v846 = vmul.f32 %v716, %v845
          %v847 = vmul.f32 %v717, %v845
          %v848 = vmul.f32 %v718, %v845
          %v849 = vmul.f32 %v719, %v845
          %v850 = vmul.f32 %v720, %v845
          %v851 = vmul.f32 %v721, %v845
          %v852 = vmul.f32 %v722, %v845
          %v853 = vmul.f32 %v723, %v845
          %v854 = vmul.f32 %v724, %v845
          %v855 = vmul.f32 %v725, %v845
          %v856 = vmul.f32 %v726, %v845
          %v857 = vmul.f32 %v727, %v845
          %v858 = vmul.f32 %v728, %v845
          %v859 = vmul.f32 %v729, %v845
          %v860 = vmul.f32 %v730, %v845
          %v861 = vmul.f32 %v731, %v845
          %v862 = vadd.f32 %v826, %v846
          %v863 = vadd.f32 %v827, %v847
          %v864 = vadd.f32 %v828, %v848
          %v865 = vadd.f32 %v829, %v849
          %v866 = vadd.f32 %v830, %v850
          %v867 = vadd.f32 %v831, %v851
          %v868 = vadd.f32 %v832, %v852
          %v869 = vadd.f32 %v833, %v853
          %v870 = vadd.f32 %v834, %v854
          %v871 = vadd.f32 %v835, %v855
          %v872 = vadd.f32 %v836, %v856
          %v873 = vadd.f32 %v837, %v857
          %v874 = vadd.f32 %v838, %v858
          %v875 = vadd.f32 %v839, %v859
          %v876 = vadd.f32 %v840, %v860
          %v877 = vadd.f32 %v841, %v861
          %v878 = vlaneseq
          %v879 = vshrl.u32 %v878, 7
          %v880 = vsub.s32 5, %v879
          %v881 = vrot.slane %v502, %v880
          %v882 = vmul.f32 %v718, %v881
          %v883 = vmul.f32 %v719, %v881
          %v884 = vmul.f32 %v720, %v881
          %v885 = vmul.f32 %v721, %v881
          %v886 = vmul.f32 %v722, %v881
          %v887 = vmul.f32 %v723, %v881
          %v888 = vmul.f32 %v724, %v881
          %v889 = vmul.f32 %v725, %v881
          %v890 = vmul.f32 %v726, %v881
          %v891 = vmul.f32 %v727, %v881
          %v892 = vmul.f32 %v728, %v881
          %v893 = vmul.f32 %v729, %v881
          %v894 = vmul.f32 %v730, %v881
          %v895 = vmul.f32 %v731, %v881
          %v896 = vmul.f32 %v732, %v881
          %v897 = vmul.f32 %v733, %v881
          %v898 = vadd.f32 %v862, %v882
          %v899 = vadd.f32 %v863, %v883
          %v900 = vadd.f32 %v864, %v884
          %v901 = vadd.f32 %v865, %v885
          %v902 = vadd.f32 %v866, %v886
          %v903 = vadd.f32 %v867, %v887
          %v904 = vadd.f32 %v868, %v888
          %v905 = vadd.f32 %v869, %v889
          %v906 = vadd.f32 %v870, %v890
          %v907 = vadd.f32 %v871, %v891
          %v908 = vadd.f32 %v872, %v892
          %v909 = vadd.f32 %v873, %v893
          %v910 = vadd.f32 %v874, %v894
          %v911 = vadd.f32 %v875, %v895
          %v912 = vadd.f32 %v876, %v896
          %v913 = vadd.f32 %v877, %v897
          %v914 = vld [vmem:[%s505 + $0x8] sm:$0xff]
          %v915 = vld [vmem:[%s505 + $0x10] sm:$0xff]
          %v916 = vld [vmem:[%s505 + $0x28] sm:$0xff]
          %v917 = vld [vmem:[%s505 + $0x30] sm:$0xff]
          %v918 = vld [vmem:[%s505 + $0x48] sm:$0xff]
          %v919 = vld [vmem:[%s505 + $0x50] sm:$0xff]
          %v920 = vld [vmem:[%s505 + $0x68] sm:$0xff]
          %v921 = vld [vmem:[%s505 + $0x70] sm:$0xff]
          %v922 = vld [vmem:[%s505 + $0x88] sm:$0xff]
          %v923 = vld [vmem:[%s505 + $0x90] sm:$0xff]
          %v924 = vld [vmem:[%s505 + $0xa8] sm:$0xff]
          %v925 = vld [vmem:[%s505 + $0xb0] sm:$0xff]
          %v926 = vld [vmem:[%s505 + $0xc8] sm:$0xff]
          %v927 = vld [vmem:[%s505 + $0xd0] sm:$0xff]
          %v928 = vld [vmem:[%s505 + $0xe8] sm:$0xff]
          %v929 = vld [vmem:[%s505 + $0xf0] sm:$0xff]
          %v930 = vld [vmem:[%s505 + $0x108] sm:$0xff]
          %v931 = vld [vmem:[%s505 + $0x110] sm:$0xff]
          %v932 = vld [vmem:[%s505 + $0x128] sm:$0xff]
          %v933 = vld [vmem:[%s505 + $0x130] sm:$0xff]
          %v934 = vld [vmem:[%s505 + $0x148] sm:$0xff]
          %v935 = vld [vmem:[%s505 + $0x150] sm:$0xff]
          %v936 = vld [vmem:[%s505 + $0x168] sm:$0xff]
          %v937 = vld [vmem:[%s505 + $0x170] sm:$0xff]
          %v938 = vlaneseq
          %v939 = vshrl.u32 %v938, 7
          %v940 = vsub.s32 2, %v939
          %v941 = vrot.slane %v500, %v940
          %v942 = vmul.f32 %v914, %v941
          %v943 = vmul.f32 %v915, %v941
          %v944 = vmul.f32 %v916, %v941
          %v945 = vmul.f32 %v917, %v941
          %v946 = vmul.f32 %v918, %v941
          %v947 = vmul.f32 %v919, %v941
          %v948 = vmul.f32 %v920, %v941
          %v949 = vmul.f32 %v921, %v941
          %v950 = vmul.f32 %v922, %v941
          %v951 = vmul.f32 %v923, %v941
          %v952 = vmul.f32 %v924, %v941
          %v953 = vmul.f32 %v925, %v941
          %v954 = vmul.f32 %v926, %v941
          %v955 = vmul.f32 %v927, %v941
          %v956 = vmul.f32 %v928, %v941
          %v957 = vmul.f32 %v929, %v941
          %v958 = vadd.f32 %v898, %v942
          %v959 = vadd.f32 %v899, %v943
          %v960 = vadd.f32 %v900, %v944
          %v961 = vadd.f32 %v901, %v945
          %v962 = vadd.f32 %v902, %v946
          %v963 = vadd.f32 %v903, %v947
          %v964 = vadd.f32 %v904, %v948
          %v965 = vadd.f32 %v905, %v949
          %v966 = vadd.f32 %v906, %v950
          %v967 = vadd.f32 %v907, %v951
          %v968 = vadd.f32 %v908, %v952
          %v969 = vadd.f32 %v909, %v953
          %v970 = vadd.f32 %v910, %v954
          %v971 = vadd.f32 %v911, %v955
          %v972 = vadd.f32 %v912, %v956
          %v973 = vadd.f32 %v913, %v957
          %v974 = vlaneseq
          %v975 = vshrl.u32 %v974, 7
          %v976 = vsub.s32 7, %v975
          %v977 = vrot.slane %v500, %v976
          %v978 = vmul.f32 %v916, %v977
          %v979 = vmul.f32 %v917, %v977
          %v980 = vmul.f32 %v918, %v977
          %v981 = vmul.f32 %v919, %v977
          %v982 = vmul.f32 %v920, %v977
          %v983 = vmul.f32 %v921, %v977
          %v984 = vmul.f32 %v922, %v977
          %v985 = vmul.f32 %v923, %v977
          %v986 = vmul.f32 %v924, %v977
          %v987 = vmul.f32 %v925, %v977
          %v988 = vmul.f32 %v926, %v977
          %v989 = vmul.f32 %v927, %v977
          %v990 = vmul.f32 %v928, %v977
          %v991 = vmul.f32 %v929, %v977
          %v992 = vmul.f32 %v930, %v977
          %v993 = vmul.f32 %v931, %v977
          %v994 = vadd.f32 %v958, %v978
          %v995 = vadd.f32 %v959, %v979
          %v996 = vadd.f32 %v960, %v980
          %v997 = vadd.f32 %v961, %v981
          %v998 = vadd.f32 %v962, %v982
          %v999 = vadd.f32 %v963, %v983
          %v1000 = vadd.f32 %v964, %v984
          %v1001 = vadd.f32 %v965, %v985
          %v1002 = vadd.f32 %v966, %v986
          %v1003 = vadd.f32 %v967, %v987
          %v1004 = vadd.f32 %v968, %v988
          %v1005 = vadd.f32 %v969, %v989
          %v1006 = vadd.f32 %v970, %v990
          %v1007 = vadd.f32 %v971, %v991
          %v1008 = vadd.f32 %v972, %v992
          %v1009 = vadd.f32 %v973, %v993
          %v1010 = vlaneseq
          %v1011 = vshrl.u32 %v1010, 7
          %v1012 = vsub.s32 4, %v1011
          %v1013 = vrot.slane %v501, %v1012
          %v1014 = vmul.f32 %v918, %v1013
          %v1015 = vmul.f32 %v919, %v1013
          %v1016 = vmul.f32 %v920, %v1013
          %v1017 = vmul.f32 %v921, %v1013
          %v1018 = vmul.f32 %v922, %v1013
          %v1019 = vmul.f32 %v923, %v1013
          %v1020 = vmul.f32 %v924, %v1013
          %v1021 = vmul.f32 %v925, %v1013
          %v1022 = vmul.f32 %v926, %v1013
          %v1023 = vmul.f32 %v927, %v1013
          %v1024 = vmul.f32 %v928, %v1013
          %v1025 = vmul.f32 %v929, %v1013
          %v1026 = vmul.f32 %v930, %v1013
          %v1027 = vmul.f32 %v931, %v1013
          %v1028 = vmul.f32 %v932, %v1013
          %v1029 = vmul.f32 %v933, %v1013
          %v1030 = vadd.f32 %v994, %v1014
          %v1031 = vadd.f32 %v995, %v1015
          %v1032 = vadd.f32 %v996, %v1016
          %v1033 = vadd.f32 %v997, %v1017
          %v1034 = vadd.f32 %v998, %v1018
          %v1035 = vadd.f32 %v999, %v1019
          %v1036 = vadd.f32 %v1000, %v1020
          %v1037 = vadd.f32 %v1001, %v1021
          %v1038 = vadd.f32 %v1002, %v1022
          %v1039 = vadd.f32 %v1003, %v1023
          %v1040 = vadd.f32 %v1004, %v1024
          %v1041 = vadd.f32 %v1005, %v1025
          %v1042 = vadd.f32 %v1006, %v1026
          %v1043 = vadd.f32 %v1007, %v1027
          %v1044 = vadd.f32 %v1008, %v1028
          %v1045 = vadd.f32 %v1009, %v1029
          %v1046 = vlaneseq
          %v1047 = vshrl.u32 %v1046, 7
          %v1048 = vsub.s32 1, %v1047
          %v1049 = vrot.slane %v502, %v1048
          %v1050 = vmul.f32 %v920, %v1049
          %v1051 = vmul.f32 %v921, %v1049
          %v1052 = vmul.f32 %v922, %v1049
          %v1053 = vmul.f32 %v923, %v1049
          %v1054 = vmul.f32 %v924, %v1049
          %v1055 = vmul.f32 %v925, %v1049
          %v1056 = vmul.f32 %v926, %v1049
          %v1057 = vmul.f32 %v927, %v1049
          %v1058 = vmul.f32 %v928, %v1049
          %v1059 = vmul.f32 %v929, %v1049
          %v1060 = vmul.f32 %v930, %v1049
          %v1061 = vmul.f32 %v931, %v1049
          %v1062 = vmul.f32 %v932, %v1049
          %v1063 = vmul.f32 %v933, %v1049
          %v1064 = vmul.f32 %v934, %v1049
          %v1065 = vmul.f32 %v935, %v1049
          %v1066 = vadd.f32 %v1030, %v1050
          %v1067 = vadd.f32 %v1031, %v1051
          %v1068 = vadd.f32 %v1032, %v1052
          %v1069 = vadd.f32 %v1033, %v1053
          %v1070 = vadd.f32 %v1034, %v1054
          %v1071 = vadd.f32 %v1035, %v1055
          %v1072 = vadd.f32 %v1036, %v1056
          %v1073 = vadd.f32 %v1037, %v1057
          %v1074 = vadd.f32 %v1038, %v1058
          %v1075 = vadd.f32 %v1039, %v1059
          %v1076 = vadd.f32 %v1040, %v1060
          %v1077 = vadd.f32 %v1041, %v1061
          %v1078 = vadd.f32 %v1042, %v1062
          %v1079 = vadd.f32 %v1043, %v1063
          %v1080 = vadd.f32 %v1044, %v1064
          %v1081 = vadd.f32 %v1045, %v1065
          %v1082 = vlaneseq
          %v1083 = vshrl.u32 %v1082, 7
          %v1084 = vsub.s32 6, %v1083
          %v1085 = vrot.slane %v502, %v1084
          %v1086 = vmul.f32 %v922, %v1085
          %v1087 = vmul.f32 %v923, %v1085
          %v1088 = vmul.f32 %v924, %v1085
          %v1089 = vmul.f32 %v925, %v1085
          %v1090 = vmul.f32 %v926, %v1085
          %v1091 = vmul.f32 %v927, %v1085
          %v1092 = vmul.f32 %v928, %v1085
          %v1093 = vmul.f32 %v929, %v1085
          %v1094 = vmul.f32 %v930, %v1085
          %v1095 = vmul.f32 %v931, %v1085
          %v1096 = vmul.f32 %v932, %v1085
          %v1097 = vmul.f32 %v933, %v1085
          %v1098 = vmul.f32 %v934, %v1085
          %v1099 = vmul.f32 %v935, %v1085
          %v1100 = vmul.f32 %v936, %v1085
          %v1101 = vmul.f32 %v937, %v1085
          %v1102 = vadd.f32 %v1066, %v1086
          %v1103 = vadd.f32 %v1067, %v1087
          %v1104 = vadd.f32 %v1068, %v1088
          %v1105 = vadd.f32 %v1069, %v1089
          %v1106 = vadd.f32 %v1070, %v1090
          %v1107 = vadd.f32 %v1071, %v1091
          %v1108 = vadd.f32 %v1072, %v1092
          %v1109 = vadd.f32 %v1073, %v1093
          %v1110 = vadd.f32 %v1074, %v1094
          %v1111 = vadd.f32 %v1075, %v1095
          %v1112 = vadd.f32 %v1076, %v1096
          %v1113 = vadd.f32 %v1077, %v1097
          %v1114 = vadd.f32 %v1078, %v1098
          %v1115 = vadd.f32 %v1079, %v1099
          %v1116 = vadd.f32 %v1080, %v1100
          %v1117 = vadd.f32 %v1081, %v1101
          %v1118 = vld [vmem:[%s505 + $0x9] sm:$0xff]
          %v1119 = vld [vmem:[%s505 + $0x11] sm:$0xff]
          %v1120 = vld [vmem:[%s505 + $0x29] sm:$0xff]
          %v1121 = vld [vmem:[%s505 + $0x31] sm:$0xff]
          %v1122 = vld [vmem:[%s505 + $0x49] sm:$0xff]
          %v1123 = vld [vmem:[%s505 + $0x51] sm:$0xff]
          %v1124 = vld [vmem:[%s505 + $0x69] sm:$0xff]
          %v1125 = vld [vmem:[%s505 + $0x71] sm:$0xff]
          %v1126 = vld [vmem:[%s505 + $0x89] sm:$0xff]
          %v1127 = vld [vmem:[%s505 + $0x91] sm:$0xff]
          %v1128 = vld [vmem:[%s505 + $0xa9] sm:$0xff]
          %v1129 = vld [vmem:[%s505 + $0xb1] sm:$0xff]
          %v1130 = vld [vmem:[%s505 + $0xc9] sm:$0xff]
          %v1131 = vld [vmem:[%s505 + $0xd1] sm:$0xff]
          %v1132 = vld [vmem:[%s505 + $0xe9] sm:$0xff]
          %v1133 = vld [vmem:[%s505 + $0xf1] sm:$0xff]
          %v1134 = vld [vmem:[%s505 + $0x109] sm:$0xff]
          %v1135 = vld [vmem:[%s505 + $0x111] sm:$0xff]
          %v1136 = vld [vmem:[%s505 + $0x129] sm:$0xff]
          %v1137 = vld [vmem:[%s505 + $0x131] sm:$0xff]
          %v1138 = vld [vmem:[%s505 + $0x149] sm:$0xff]
          %v1139 = vld [vmem:[%s505 + $0x151] sm:$0xff]
          %v1140 = vld [vmem:[%s505 + $0x169] sm:$0xff]
          %v1141 = vld [vmem:[%s505 + $0x171] sm:$0xff]
          %v1142 = vlaneseq
          %v1143 = vshrl.u32 %v1142, 7
          %v1144 = vsub.s32 3, %v1143
          %v1145 = vrot.slane %v500, %v1144
          %v1146 = vmul.f32 %v1118, %v1145
          %v1147 = vmul.f32 %v1119, %v1145
          %v1148 = vmul.f32 %v1120, %v1145
          %v1149 = vmul.f32 %v1121, %v1145
          %v1150 = vmul.f32 %v1122, %v1145
          %v1151 = vmul.f32 %v1123, %v1145
          %v1152 = vmul.f32 %v1124, %v1145
          %v1153 = vmul.f32 %v1125, %v1145
          %v1154 = vmul.f32 %v1126, %v1145
          %v1155 = vmul.f32 %v1127, %v1145
          %v1156 = vmul.f32 %v1128, %v1145
          %v1157 = vmul.f32 %v1129, %v1145
          %v1158 = vmul.f32 %v1130, %v1145
          %v1159 = vmul.f32 %v1131, %v1145
          %v1160 = vmul.f32 %v1132, %v1145
          %v1161 = vmul.f32 %v1133, %v1145
          %v1162 = vadd.f32 %v1102, %v1146
          %v1163 = vadd.f32 %v1103, %v1147
          %v1164 = vadd.f32 %v1104, %v1148
          %v1165 = vadd.f32 %v1105, %v1149
          %v1166 = vadd.f32 %v1106, %v1150
          %v1167 = vadd.f32 %v1107, %v1151
          %v1168 = vadd.f32 %v1108, %v1152
          %v1169 = vadd.f32 %v1109, %v1153
          %v1170 = vadd.f32 %v1110, %v1154
          %v1171 = vadd.f32 %v1111, %v1155
          %v1172 = vadd.f32 %v1112, %v1156
          %v1173 = vadd.f32 %v1113, %v1157
          %v1174 = vadd.f32 %v1114, %v1158
          %v1175 = vadd.f32 %v1115, %v1159
          %v1176 = vadd.f32 %v1116, %v1160
          %v1177 = vadd.f32 %v1117, %v1161
          %v1178 = vlaneseq
          %v1179 = vshrl.u32 %v1178, 7
          %v1180 = vsub.s32 0, %v1179
          %v1181 = vrot.slane %v501, %v1180
          %v1182 = vmul.f32 %v1120, %v1181
          %v1183 = vmul.f32 %v1121, %v1181
          %v1184 = vmul.f32 %v1122, %v1181
          %v1185 = vmul.f32 %v1123, %v1181
          %v1186 = vmul.f32 %v1124, %v1181
          %v1187 = vmul.f32 %v1125, %v1181
          %v1188 = vmul.f32 %v1126, %v1181
          %v1189 = vmul.f32 %v1127, %v1181
          %v1190 = vmul.f32 %v1128, %v1181
          %v1191 = vmul.f32 %v1129, %v1181
          %v1192 = vmul.f32 %v1130, %v1181
          %v1193 = vmul.f32 %v1131, %v1181
          %v1194 = vmul.f32 %v1132, %v1181
          %v1195 = vmul.f32 %v1133, %v1181
          %v1196 = vmul.f32 %v1134, %v1181
          %v1197 = vmul.f32 %v1135, %v1181
          %v1198 = vadd.f32 %v1162, %v1182
          %v1199 = vadd.f32 %v1163, %v1183
          %v1200 = vadd.f32 %v1164, %v1184
          %v1201 = vadd.f32 %v1165, %v1185
          %v1202 = vadd.f32 %v1166, %v1186
          %v1203 = vadd.f32 %v1167, %v1187
          %v1204 = vadd.f32 %v1168, %v1188
          %v1205 = vadd.f32 %v1169, %v1189
          %v1206 = vadd.f32 %v1170, %v1190
          %v1207 = vadd.f32 %v1171, %v1191
          %v1208 = vadd.f32 %v1172, %v1192
          %v1209 = vadd.f32 %v1173, %v1193
          %v1210 = vadd.f32 %v1174, %v1194
          %v1211 = vadd.f32 %v1175, %v1195
          %v1212 = vadd.f32 %v1176, %v1196
          %v1213 = vadd.f32 %v1177, %v1197
          %v1214 = vlaneseq
          %v1215 = vshrl.u32 %v1214, 7
          %v1216 = vsub.s32 5, %v1215
          %v1217 = vrot.slane %v501, %v1216
          %v1218 = vmul.f32 %v1122, %v1217
          %v1219 = vmul.f32 %v1123, %v1217
          %v1220 = vmul.f32 %v1124, %v1217
          %v1221 = vmul.f32 %v1125, %v1217
          %v1222 = vmul.f32 %v1126, %v1217
          %v1223 = vmul.f32 %v1127, %v1217
          %v1224 = vmul.f32 %v1128, %v1217
          %v1225 = vmul.f32 %v1129, %v1217
          %v1226 = vmul.f32 %v1130, %v1217
          %v1227 = vmul.f32 %v1131, %v1217
          %v1228 = vmul.f32 %v1132, %v1217
          %v1229 = vmul.f32 %v1133, %v1217
          %v1230 = vmul.f32 %v1134, %v1217
          %v1231 = vmul.f32 %v1135, %v1217
          %v1232 = vmul.f32 %v1136, %v1217
          %v1233 = vmul.f32 %v1137, %v1217
          %v1234 = vadd.f32 %v1198, %v1218
          %v1235 = vadd.f32 %v1199, %v1219
          %v1236 = vadd.f32 %v1200, %v1220
          %v1237 = vadd.f32 %v1201, %v1221
          %v1238 = vadd.f32 %v1202, %v1222
          %v1239 = vadd.f32 %v1203, %v1223
          %v1240 = vadd.f32 %v1204, %v1224
          %v1241 = vadd.f32 %v1205, %v1225
          %v1242 = vadd.f32 %v1206, %v1226
          %v1243 = vadd.f32 %v1207, %v1227
          %v1244 = vadd.f32 %v1208, %v1228
          %v1245 = vadd.f32 %v1209, %v1229
          %v1246 = vadd.f32 %v1210, %v1230
          %v1247 = vadd.f32 %v1211, %v1231
          %v1248 = vadd.f32 %v1212, %v1232
          %v1249 = vadd.f32 %v1213, %v1233
          %v1250 = vlaneseq
          %v1251 = vshrl.u32 %v1250, 7
          %v1252 = vsub.s32 2, %v1251
          %v1253 = vrot.slane %v502, %v1252
          %v1254 = vmul.f32 %v1124, %v1253
          %v1255 = vmul.f32 %v1125, %v1253
          %v1256 = vmul.f32 %v1126, %v1253
          %v1257 = vmul.f32 %v1127, %v1253
          %v1258 = vmul.f32 %v1128, %v1253
          %v1259 = vmul.f32 %v1129, %v1253
          %v1260 = vmul.f32 %v1130, %v1253
          %v1261 = vmul.f32 %v1131, %v1253
          %v1262 = vmul.f32 %v1132, %v1253
          %v1263 = vmul.f32 %v1133, %v1253
          %v1264 = vmul.f32 %v1134, %v1253
          %v1265 = vmul.f32 %v1135, %v1253
          %v1266 = vmul.f32 %v1136, %v1253
          %v1267 = vmul.f32 %v1137, %v1253
          %v1268 = vmul.f32 %v1138, %v1253
          %v1269 = vmul.f32 %v1139, %v1253
          %v1270 = vadd.f32 %v1234, %v1254
          %v1271 = vadd.f32 %v1235, %v1255
          %v1272 = vadd.f32 %v1236, %v1256
          %v1273 = vadd.f32 %v1237, %v1257
          %v1274 = vadd.f32 %v1238, %v1258
          %v1275 = vadd.f32 %v1239, %v1259
          %v1276 = vadd.f32 %v1240, %v1260
          %v1277 = vadd.f32 %v1241, %v1261
          %v1278 = vadd.f32 %v1242, %v1262
          %v1279 = vadd.f32 %v1243, %v1263
          %v1280 = vadd.f32 %v1244, %v1264
          %v1281 = vadd.f32 %v1245, %v1265
          %v1282 = vadd.f32 %v1246, %v1266
          %v1283 = vadd.f32 %v1247, %v1267
          %v1284 = vadd.f32 %v1248, %v1268
          %v1285 = vadd.f32 %v1249, %v1269
          %v1286 = vlaneseq
          %v1287 = vshrl.u32 %v1286, 7
          %v1288 = vsub.s32 7, %v1287
          %v1289 = vrot.slane %v502, %v1288
          %v1290 = vmul.f32 %v1126, %v1289
          %v1291 = vmul.f32 %v1127, %v1289
          %v1292 = vmul.f32 %v1128, %v1289
          %v1293 = vmul.f32 %v1129, %v1289
          %v1294 = vmul.f32 %v1130, %v1289
          %v1295 = vmul.f32 %v1131, %v1289
          %v1296 = vmul.f32 %v1132, %v1289
          %v1297 = vmul.f32 %v1133, %v1289
          %v1298 = vmul.f32 %v1134, %v1289
          %v1299 = vmul.f32 %v1135, %v1289
          %v1300 = vmul.f32 %v1136, %v1289
          %v1301 = vmul.f32 %v1137, %v1289
          %v1302 = vmul.f32 %v1138, %v1289
          %v1303 = vmul.f32 %v1139, %v1289
          %v1304 = vmul.f32 %v1140, %v1289
          %v1305 = vmul.f32 %v1141, %v1289
          %v1306 = vadd.f32 %v1270, %v1290
          %v1307 = vadd.f32 %v1271, %v1291
          %v1308 = vadd.f32 %v1272, %v1292
          %v1309 = vadd.f32 %v1273, %v1293
          %v1310 = vadd.f32 %v1274, %v1294
          %v1311 = vadd.f32 %v1275, %v1295
          %v1312 = vadd.f32 %v1276, %v1296
          %v1313 = vadd.f32 %v1277, %v1297
          %v1314 = vadd.f32 %v1278, %v1298
          %v1315 = vadd.f32 %v1279, %v1299
          %v1316 = vadd.f32 %v1280, %v1300
          %v1317 = vadd.f32 %v1281, %v1301
          %v1318 = vadd.f32 %v1282, %v1302
          %v1319 = vadd.f32 %v1283, %v1303
          %v1320 = vadd.f32 %v1284, %v1304
          %v1321 = vadd.f32 %v1285, %v1305
          %v1322 = vld [vmem:[%s505 + $0xa] sm:$0xff]
          %v1323 = vld [vmem:[%s505 + $0x12] sm:$0xff]
          %v1324 = vld [vmem:[%s505 + $0x2a] sm:$0xff]
          %v1325 = vld [vmem:[%s505 + $0x32] sm:$0xff]
          %v1326 = vld [vmem:[%s505 + $0x4a] sm:$0xff]
          %v1327 = vld [vmem:[%s505 + $0x52] sm:$0xff]
          %v1328 = vld [vmem:[%s505 + $0x6a] sm:$0xff]
          %v1329 = vld [vmem:[%s505 + $0x72] sm:$0xff]
          %v1330 = vld [vmem:[%s505 + $0x8a] sm:$0xff]
          %v1331 = vld [vmem:[%s505 + $0x92] sm:$0xff]
          %v1332 = vld [vmem:[%s505 + $0xaa] sm:$0xff]
          %v1333 = vld [vmem:[%s505 + $0xb2] sm:$0xff]
          %v1334 = vld [vmem:[%s505 + $0xca] sm:$0xff]
          %v1335 = vld [vmem:[%s505 + $0xd2] sm:$0xff]
          %v1336 = vld [vmem:[%s505 + $0xea] sm:$0xff]
          %v1337 = vld [vmem:[%s505 + $0xf2] sm:$0xff]
          %v1338 = vld [vmem:[%s505 + $0x10a] sm:$0xff]
          %v1339 = vld [vmem:[%s505 + $0x112] sm:$0xff]
          %v1340 = vld [vmem:[%s505 + $0x12a] sm:$0xff]
          %v1341 = vld [vmem:[%s505 + $0x132] sm:$0xff]
          %v1342 = vld [vmem:[%s505 + $0x14a] sm:$0xff]
          %v1343 = vld [vmem:[%s505 + $0x152] sm:$0xff]
          %v1344 = vld [vmem:[%s505 + $0x16a] sm:$0xff]
          %v1345 = vld [vmem:[%s505 + $0x172] sm:$0xff]
          %v1346 = vlaneseq
          %v1347 = vshrl.u32 %v1346, 7
          %v1348 = vsub.s32 4, %v1347
          %v1349 = vrot.slane %v500, %v1348
          %v1350 = vmul.f32 %v1322, %v1349
          %v1351 = vmul.f32 %v1323, %v1349
          %v1352 = vmul.f32 %v1324, %v1349
          %v1353 = vmul.f32 %v1325, %v1349
          %v1354 = vmul.f32 %v1326, %v1349
          %v1355 = vmul.f32 %v1327, %v1349
          %v1356 = vmul.f32 %v1328, %v1349
          %v1357 = vmul.f32 %v1329, %v1349
          %v1358 = vmul.f32 %v1330, %v1349
          %v1359 = vmul.f32 %v1331, %v1349
          %v1360 = vmul.f32 %v1332, %v1349
          %v1361 = vmul.f32 %v1333, %v1349
          %v1362 = vmul.f32 %v1334, %v1349
          %v1363 = vmul.f32 %v1335, %v1349
          %v1364 = vmul.f32 %v1336, %v1349
          %v1365 = vmul.f32 %v1337, %v1349
          %v1366 = vadd.f32 %v1306, %v1350
          %v1367 = vadd.f32 %v1307, %v1351
          %v1368 = vadd.f32 %v1308, %v1352
          %v1369 = vadd.f32 %v1309, %v1353
          %v1370 = vadd.f32 %v1310, %v1354
          %v1371 = vadd.f32 %v1311, %v1355
          %v1372 = vadd.f32 %v1312, %v1356
          %v1373 = vadd.f32 %v1313, %v1357
          %v1374 = vadd.f32 %v1314, %v1358
          %v1375 = vadd.f32 %v1315, %v1359
          %v1376 = vadd.f32 %v1316, %v1360
          %v1377 = vadd.f32 %v1317, %v1361
          %v1378 = vadd.f32 %v1318, %v1362
          %v1379 = vadd.f32 %v1319, %v1363
          %v1380 = vadd.f32 %v1320, %v1364
          %v1381 = vadd.f32 %v1321, %v1365
          %v1382 = vlaneseq
          %v1383 = vshrl.u32 %v1382, 7
          %v1384 = vsub.s32 1, %v1383
          %v1385 = vrot.slane %v501, %v1384
          %v1386 = vmul.f32 %v1324, %v1385
          %v1387 = vmul.f32 %v1325, %v1385
          %v1388 = vmul.f32 %v1326, %v1385
          %v1389 = vmul.f32 %v1327, %v1385
          %v1390 = vmul.f32 %v1328, %v1385
          %v1391 = vmul.f32 %v1329, %v1385
          %v1392 = vmul.f32 %v1330, %v1385
          %v1393 = vmul.f32 %v1331, %v1385
          %v1394 = vmul.f32 %v1332, %v1385
          %v1395 = vmul.f32 %v1333, %v1385
          %v1396 = vmul.f32 %v1334, %v1385
          %v1397 = vmul.f32 %v1335, %v1385
          %v1398 = vmul.f32 %v1336, %v1385
          %v1399 = vmul.f32 %v1337, %v1385
          %v1400 = vmul.f32 %v1338, %v1385
          %v1401 = vmul.f32 %v1339, %v1385
          %v1402 = vadd.f32 %v1366, %v1386
          %v1403 = vadd.f32 %v1367, %v1387
          %v1404 = vadd.f32 %v1368, %v1388
          %v1405 = vadd.f32 %v1369, %v1389
          %v1406 = vadd.f32 %v1370, %v1390
          %v1407 = vadd.f32 %v1371, %v1391
          %v1408 = vadd.f32 %v1372, %v1392
          %v1409 = vadd.f32 %v1373, %v1393
          %v1410 = vadd.f32 %v1374, %v1394
          %v1411 = vadd.f32 %v1375, %v1395
          %v1412 = vadd.f32 %v1376, %v1396
          %v1413 = vadd.f32 %v1377, %v1397
          %v1414 = vadd.f32 %v1378, %v1398
          %v1415 = vadd.f32 %v1379, %v1399
          %v1416 = vadd.f32 %v1380, %v1400
          %v1417 = vadd.f32 %v1381, %v1401
          %v1418 = vlaneseq
          %v1419 = vshrl.u32 %v1418, 7
          %v1420 = vsub.s32 6, %v1419
          %v1421 = vrot.slane %v501, %v1420
          %v1422 = vmul.f32 %v1326, %v1421
          %v1423 = vmul.f32 %v1327, %v1421
          %v1424 = vmul.f32 %v1328, %v1421
          %v1425 = vmul.f32 %v1329, %v1421
          %v1426 = vmul.f32 %v1330, %v1421
          %v1427 = vmul.f32 %v1331, %v1421
          %v1428 = vmul.f32 %v1332, %v1421
          %v1429 = vmul.f32 %v1333, %v1421
          %v1430 = vmul.f32 %v1334, %v1421
          %v1431 = vmul.f32 %v1335, %v1421
          %v1432 = vmul.f32 %v1336, %v1421
          %v1433 = vmul.f32 %v1337, %v1421
          %v1434 = vmul.f32 %v1338, %v1421
          %v1435 = vmul.f32 %v1339, %v1421
          %v1436 = vmul.f32 %v1340, %v1421
          %v1437 = vmul.f32 %v1341, %v1421
          %v1438 = vadd.f32 %v1402, %v1422
          %v1439 = vadd.f32 %v1403, %v1423
          %v1440 = vadd.f32 %v1404, %v1424
          %v1441 = vadd.f32 %v1405, %v1425
          %v1442 = vadd.f32 %v1406, %v1426
          %v1443 = vadd.f32 %v1407, %v1427
          %v1444 = vadd.f32 %v1408, %v1428
          %v1445 = vadd.f32 %v1409, %v1429
          %v1446 = vadd.f32 %v1410, %v1430
          %v1447 = vadd.f32 %v1411, %v1431
          %v1448 = vadd.f32 %v1412, %v1432
          %v1449 = vadd.f32 %v1413, %v1433
          %v1450 = vadd.f32 %v1414, %v1434
          %v1451 = vadd.f32 %v1415, %v1435
          %v1452 = vadd.f32 %v1416, %v1436
          %v1453 = vadd.f32 %v1417, %v1437
          %v1454 = vlaneseq
          %v1455 = vshrl.u32 %v1454, 7
          %v1456 = vsub.s32 3, %v1455
          %v1457 = vrot.slane %v502, %v1456
          %v1458 = vmul.f32 %v1328, %v1457
          %v1459 = vmul.f32 %v1329, %v1457
          %v1460 = vmul.f32 %v1330, %v1457
          %v1461 = vmul.f32 %v1331, %v1457
          %v1462 = vmul.f32 %v1332, %v1457
          %v1463 = vmul.f32 %v1333, %v1457
          %v1464 = vmul.f32 %v1334, %v1457
          %v1465 = vmul.f32 %v1335, %v1457
          %v1466 = vmul.f32 %v1336, %v1457
          %v1467 = vmul.f32 %v1337, %v1457
          %v1468 = vmul.f32 %v1338, %v1457
          %v1469 = vmul.f32 %v1339, %v1457
          %v1470 = vmul.f32 %v1340, %v1457
          %v1471 = vmul.f32 %v1341, %v1457
          %v1472 = vmul.f32 %v1342, %v1457
          %v1473 = vmul.f32 %v1343, %v1457
          %v1474 = vadd.f32 %v1438, %v1458
          %v1475 = vadd.f32 %v1439, %v1459
          %v1476 = vadd.f32 %v1440, %v1460
          %v1477 = vadd.f32 %v1441, %v1461
          %v1478 = vadd.f32 %v1442, %v1462
          %v1479 = vadd.f32 %v1443, %v1463
          %v1480 = vadd.f32 %v1444, %v1464
          %v1481 = vadd.f32 %v1445, %v1465
          %v1482 = vadd.f32 %v1446, %v1466
          %v1483 = vadd.f32 %v1447, %v1467
          %v1484 = vadd.f32 %v1448, %v1468
          %v1485 = vadd.f32 %v1449, %v1469
          %v1486 = vadd.f32 %v1450, %v1470
          %v1487 = vadd.f32 %v1451, %v1471
          %v1488 = vadd.f32 %v1452, %v1472
          %v1489 = vadd.f32 %v1453, %v1473
          %v1490 = vlaneseq
          %v1491 = vshrl.u32 %v1490, 7
          %v1492 = vsub.s32 0, %v1491
          %v1493 = vrot.slane %v503, %v1492
          %v1494 = vmul.f32 %v1330, %v1493
          %v1495 = vmul.f32 %v1331, %v1493
          %v1496 = vmul.f32 %v1332, %v1493
          %v1497 = vmul.f32 %v1333, %v1493
          %v1498 = vmul.f32 %v1334, %v1493
          %v1499 = vmul.f32 %v1335, %v1493
          %v1500 = vmul.f32 %v1336, %v1493
          %v1501 = vmul.f32 %v1337, %v1493
          %v1502 = vmul.f32 %v1338, %v1493
          %v1503 = vmul.f32 %v1339, %v1493
          %v1504 = vmul.f32 %v1340, %v1493
          %v1505 = vmul.f32 %v1341, %v1493
          %v1506 = vmul.f32 %v1342, %v1493
          %v1507 = vmul.f32 %v1343, %v1493
          %v1508 = vmul.f32 %v1344, %v1493
          %v1509 = vmul.f32 %v1345, %v1493
          %v1510 = vadd.f32 %v1474, %v1494
          %v1511 = vadd.f32 %v1475, %v1495
          %v1512 = vadd.f32 %v1476, %v1496
          %v1513 = vadd.f32 %v1477, %v1497
          %v1514 = vadd.f32 %v1478, %v1498
          %v1515 = vadd.f32 %v1479, %v1499
          %v1516 = vadd.f32 %v1480, %v1500
          %v1517 = vadd.f32 %v1481, %v1501
          %v1518 = vadd.f32 %v1482, %v1502
          %v1519 = vadd.f32 %v1483, %v1503
          %v1520 = vadd.f32 %v1484, %v1504
          %v1521 = vadd.f32 %v1485, %v1505
          %v1522 = vadd.f32 %v1486, %v1506
          %v1523 = vadd.f32 %v1487, %v1507
          %v1524 = vadd.f32 %v1488, %v1508
          %v1525 = vadd.f32 %v1489, %v1509
          %v1526 = vld [vmem:[%s2] sm:$0x1]
          %v1528 = vlaneseq
          %v1529 = vshrl.u32 %v1528, 7
          %v1530 = vsub.s32 0, %v1529
          %v1531 = vrot.slane %v1526, %v1530
          %v1533 = vadd.f32 %v1510, %v1531
          %v1534 = vadd.f32 %v1511, %v1531
          %v1535 = vadd.f32 %v1512, %v1531
          %v1536 = vadd.f32 %v1513, %v1531
          %v1537 = vadd.f32 %v1514, %v1531
          %v1538 = vadd.f32 %v1515, %v1531
          %v1539 = vadd.f32 %v1516, %v1531
          %v1540 = vadd.f32 %v1517, %v1531
          %v1541 = vadd.f32 %v1518, %v1531
          %v1542 = vadd.f32 %v1519, %v1531
          %v1543 = vadd.f32 %v1520, %v1531
          %v1544 = vadd.f32 %v1521, %v1531
          %v1545 = vadd.f32 %v1522, %v1531
          %v1546 = vadd.f32 %v1523, %v1531
          %v1547 = vadd.f32 %v1524, %v1531
          %v1548 = vadd.f32 %v1525, %v1531
          %s1549 = sadd.s32 %s499, 6
          %s1550 = smul.u32 %s1549, 32
          %s1551 = scalar_lea.vmem [#allocation3], %s1550
          %1552 = vst [vmem:[%s1551 + $0x8] sm:$0xff] %v1533
          %1553 = vst [vmem:[%s1551 + $0x10] sm:$0xff] %v1534
          %1554 = vst [vmem:[%s1551 + $0x28] sm:$0xff] %v1535
          %1555 = vst [vmem:[%s1551 + $0x30] sm:$0xff] %v1536
          %1556 = vst [vmem:[%s1551 + $0x48] sm:$0xff] %v1537
          %1557 = vst [vmem:[%s1551 + $0x50] sm:$0xff] %v1538
          %1558 = vst [vmem:[%s1551 + $0x68] sm:$0xff] %v1539
          %1559 = vst [vmem:[%s1551 + $0x70] sm:$0xff] %v1540
          %1560 = vst [vmem:[%s1551 + $0x88] sm:$0xff] %v1541
          %1561 = vst [vmem:[%s1551 + $0x90] sm:$0xff] %v1542
          %1562 = vst [vmem:[%s1551 + $0xa8] sm:$0xff] %v1543
          %1563 = vst [vmem:[%s1551 + $0xb0] sm:$0xff] %v1544
          %1564 = vst [vmem:[%s1551 + $0xc8] sm:$0xff] %v1545
          %1565 = vst [vmem:[%s1551 + $0xd0] sm:$0xff] %v1546
          %1566 = vst [vmem:[%s1551 + $0xe8] sm:$0xff] %v1547
          %1567 = vst [vmem:[%s1551 + $0xf0] sm:$0xff] %v1548
        $region57: #{lka_pallas.1} parent=47 // loop_footer
          %s498 = sadd.s32 1, %s494
        $region58: #{lka_pallas.1} parent=47 // loop_footer_branch
          %493 = sbr.rel target = $region54
        $region59: #{lka_pallas.1} parent=47 // loop_exit
          _
        loop: start=0, step=1, limit=2
        $region60: #{lka_pallas.1} parent=47 // loop_pre_header
          _
        $region61: #{lka_pallas.1} parent=47 // loop_header
          %s1569 = sphi 0, %s1573
          %p1570 = scmp.ge.s32.totalorder %s1569, 2
        $region62: #{lka_pallas.1} parent=47 // loop_header_branch
          %1572 = sbr.rel (%p1570) target = $region66
        $region63: #{lka_pallas.1} parent=47 // loop_body
          %s1574 = smul.u32 %s1569, 8
          %v1575 = vld [vmem:[%s3] sm:$0xff]
          %v1576 = vld [vmem:[%s3 + $0x8] sm:$0xff]
          %v1577 = vld [vmem:[%s3 + $0x10] sm:$0xff]
          %v1578 = vld [vmem:[%s3 + $0x18] sm:$0x1]
          %s1579 = smul.u32 %s1574, 32
          %s1580 = scalar_lea.vmem [#allocation3], %s1579
          %v1581 = vld [vmem:[%s1580 + $0x2] sm:$0xff]
          %v1582 = vld [vmem:[%s1580 + $0xa] sm:$0xff]
          %v1583 = vld [vmem:[%s1580 + $0x22] sm:$0xff]
          %v1584 = vld [vmem:[%s1580 + $0x2a] sm:$0xff]
          %v1585 = vld [vmem:[%s1580 + $0x42] sm:$0xff]
          %v1586 = vld [vmem:[%s1580 + $0x4a] sm:$0xff]
          %v1587 = vld [vmem:[%s1580 + $0x62] sm:$0xff]
          %v1588 = vld [vmem:[%s1580 + $0x6a] sm:$0xff]
          %v1589 = vld [vmem:[%s1580 + $0x82] sm:$0xff]
          %v1590 = vld [vmem:[%s1580 + $0x8a] sm:$0xff]
          %v1591 = vld [vmem:[%s1580 + $0xa2] sm:$0xff]
          %v1592 = vld [vmem:[%s1580 + $0xaa] sm:$0xff]
          %v1593 = vld [vmem:[%s1580 + $0xc2] sm:$0xff]
          %v1594 = vld [vmem:[%s1580 + $0xca] sm:$0xff]
          %v1595 = vld [vmem:[%s1580 + $0xe2] sm:$0xff]
          %v1596 = vld [vmem:[%s1580 + $0xea] sm:$0xff]
          %v1597 = vld [vmem:[%s1580 + $0x102] sm:$0xff]
          %v1598 = vld [vmem:[%s1580 + $0x10a] sm:$0xff]
          %v1599 = vld [vmem:[%s1580 + $0x122] sm:$0xff]
          %v1600 = vld [vmem:[%s1580 + $0x12a] sm:$0xff]
          %v1601 = vld [vmem:[%s1580 + $0x142] sm:$0xff]
          %v1602 = vld [vmem:[%s1580 + $0x14a] sm:$0xff]
          %v1603 = vld [vmem:[%s1580 + $0x162] sm:$0xff]
          %v1604 = vld [vmem:[%s1580 + $0x16a] sm:$0xff]
          %v1605 = vld [vmem:[%s1580 + $0x182] sm:$0xff]
          %v1606 = vld [vmem:[%s1580 + $0x18a] sm:$0xff]
          %v1607 = vld [vmem:[%s1580 + $0x1a2] sm:$0xff]
          %v1608 = vld [vmem:[%s1580 + $0x1aa] sm:$0xff]
          %v1609 = vld [vmem:[%s1580 + $0x1c2] sm:$0xff]
          %v1610 = vld [vmem:[%s1580 + $0x1ca] sm:$0xff]
          %v1611 = vld [vmem:[%s1580 + $0x1e2] sm:$0xff]
          %v1612 = vld [vmem:[%s1580 + $0x1ea] sm:$0xff]
          %v1613 = vld [vmem:[%s1580 + $0x202] sm:$0xff]
          %v1614 = vld [vmem:[%s1580 + $0x20a] sm:$0xff]
          %v1615 = vld [vmem:[%s1580 + $0x222] sm:$0xff]
          %v1616 = vld [vmem:[%s1580 + $0x22a] sm:$0xff]
          %v1617 = vld [vmem:[%s1580 + $0x242] sm:$0xff]
          %v1618 = vld [vmem:[%s1580 + $0x24a] sm:$0xff]
          %v1619 = vld [vmem:[%s1580 + $0x262] sm:$0xff]
          %v1620 = vld [vmem:[%s1580 + $0x26a] sm:$0xff]
          %v1621 = vlaneseq
          %v1622 = vshrl.u32 %v1621, 7
          %v1623 = vsub.s32 0, %v1622
          %v1624 = vrot.slane %v1575, %v1623
          %v1625 = vmul.f32 %v1581, %v1624
          %v1626 = vmul.f32 %v1582, %v1624
          %v1627 = vmul.f32 %v1583, %v1624
          %v1628 = vmul.f32 %v1584, %v1624
          %v1629 = vmul.f32 %v1585, %v1624
          %v1630 = vmul.f32 %v1586, %v1624
          %v1631 = vmul.f32 %v1587, %v1624
          %v1632 = vmul.f32 %v1588, %v1624
          %v1633 = vmul.f32 %v1589, %v1624
          %v1634 = vmul.f32 %v1590, %v1624
          %v1635 = vmul.f32 %v1591, %v1624
          %v1636 = vmul.f32 %v1592, %v1624
          %v1637 = vmul.f32 %v1593, %v1624
          %v1638 = vmul.f32 %v1594, %v1624
          %v1639 = vmul.f32 %v1595, %v1624
          %v1640 = vmul.f32 %v1596, %v1624
          %v1641 = vadd.f32 %v1625, 0.0
          %v1642 = vadd.f32 %v1626, 0.0
          %v1643 = vadd.f32 %v1627, 0.0
          %v1644 = vadd.f32 %v1628, 0.0
          %v1645 = vadd.f32 %v1629, 0.0
          %v1646 = vadd.f32 %v1630, 0.0
          %v1647 = vadd.f32 %v1631, 0.0
          %v1648 = vadd.f32 %v1632, 0.0
          %v1649 = vadd.f32 %v1633, 0.0
          %v1650 = vadd.f32 %v1634, 0.0
          %v1651 = vadd.f32 %v1635, 0.0
          %v1652 = vadd.f32 %v1636, 0.0
          %v1653 = vadd.f32 %v1637, 0.0
          %v1654 = vadd.f32 %v1638, 0.0
          %v1655 = vadd.f32 %v1639, 0.0
          %v1656 = vadd.f32 %v1640, 0.0
          %v1657 = vlaneseq
          %v1658 = vshrl.u32 %v1657, 7
          %v1659 = vsub.s32 5, %v1658
          %v1660 = vrot.slane %v1575, %v1659
          %v1661 = vmul.f32 %v1587, %v1660
          %v1662 = vmul.f32 %v1588, %v1660
          %v1663 = vmul.f32 %v1589, %v1660
          %v1664 = vmul.f32 %v1590, %v1660
          %v1665 = vmul.f32 %v1591, %v1660
          %v1666 = vmul.f32 %v1592, %v1660
          %v1667 = vmul.f32 %v1593, %v1660
          %v1668 = vmul.f32 %v1594, %v1660
          %v1669 = vmul.f32 %v1595, %v1660
          %v1670 = vmul.f32 %v1596, %v1660
          %v1671 = vmul.f32 %v1597, %v1660
          %v1672 = vmul.f32 %v1598, %v1660
          %v1673 = vmul.f32 %v1599, %v1660
          %v1674 = vmul.f32 %v1600, %v1660
          %v1675 = vmul.f32 %v1601, %v1660
          %v1676 = vmul.f32 %v1602, %v1660
          %v1677 = vadd.f32 %v1641, %v1661
          %v1678 = vadd.f32 %v1642, %v1662
          %v1679 = vadd.f32 %v1643, %v1663
          %v1680 = vadd.f32 %v1644, %v1664
          %v1681 = vadd.f32 %v1645, %v1665
          %v1682 = vadd.f32 %v1646, %v1666
          %v1683 = vadd.f32 %v1647, %v1667
          %v1684 = vadd.f32 %v1648, %v1668
          %v1685 = vadd.f32 %v1649, %v1669
          %v1686 = vadd.f32 %v1650, %v1670
          %v1687 = vadd.f32 %v1651, %v1671
          %v1688 = vadd.f32 %v1652, %v1672
          %v1689 = vadd.f32 %v1653, %v1673
          %v1690 = vadd.f32 %v1654, %v1674
          %v1691 = vadd.f32 %v1655, %v1675
          %v1692 = vadd.f32 %v1656, %v1676
          %v1693 = vlaneseq
          %v1694 = vshrl.u32 %v1693, 7
          %v1695 = vsub.s32 2, %v1694
          %v1696 = vrot.slane %v1576, %v1695
          %v1697 = vmul.f32 %v1593, %v1696
          %v1698 = vmul.f32 %v1594, %v1696
          %v1699 = vmul.f32 %v1595, %v1696
          %v1700 = vmul.f32 %v1596, %v1696
          %v1701 = vmul.f32 %v1597, %v1696
          %v1702 = vmul.f32 %v1598, %v1696
          %v1703 = vmul.f32 %v1599, %v1696
          %v1704 = vmul.f32 %v1600, %v1696
          %v1705 = vmul.f32 %v1601, %v1696
          %v1706 = vmul.f32 %v1602, %v1696
          %v1707 = vmul.f32 %v1603, %v1696
          %v1708 = vmul.f32 %v1604, %v1696
          %v1709 = vmul.f32 %v1605, %v1696
          %v1710 = vmul.f32 %v1606, %v1696
          %v1711 = vmul.f32 %v1607, %v1696
          %v1712 = vmul.f32 %v1608, %v1696
          %v1713 = vadd.f32 %v1677, %v1697
          %v1714 = vadd.f32 %v1678, %v1698
          %v1715 = vadd.f32 %v1679, %v1699
          %v1716 = vadd.f32 %v1680, %v1700
          %v1717 = vadd.f32 %v1681, %v1701
          %v1718 = vadd.f32 %v1682, %v1702
          %v1719 = vadd.f32 %v1683, %v1703
          %v1720 = vadd.f32 %v1684, %v1704
          %v1721 = vadd.f32 %v1685, %v1705
          %v1722 = vadd.f32 %v1686, %v1706
          %v1723 = vadd.f32 %v1687, %v1707
          %v1724 = vadd.f32 %v1688, %v1708
          %v1725 = vadd.f32 %v1689, %v1709
          %v1726 = vadd.f32 %v1690, %v1710
          %v1727 = vadd.f32 %v1691, %v1711
          %v1728 = vadd.f32 %v1692, %v1712
          %v1729 = vlaneseq
          %v1730 = vshrl.u32 %v1729, 7
          %v1731 = vsub.s32 7, %v1730
          %v1732 = vrot.slane %v1576, %v1731
          %v1733 = vmul.f32 %v1599, %v1732
          %v1734 = vmul.f32 %v1600, %v1732
          %v1735 = vmul.f32 %v1601, %v1732
          %v1736 = vmul.f32 %v1602, %v1732
          %v1737 = vmul.f32 %v1603, %v1732
          %v1738 = vmul.f32 %v1604, %v1732
          %v1739 = vmul.f32 %v1605, %v1732
          %v1740 = vmul.f32 %v1606, %v1732
          %v1741 = vmul.f32 %v1607, %v1732
          %v1742 = vmul.f32 %v1608, %v1732
          %v1743 = vmul.f32 %v1609, %v1732
          %v1744 = vmul.f32 %v1610, %v1732
          %v1745 = vmul.f32 %v1611, %v1732
          %v1746 = vmul.f32 %v1612, %v1732
          %v1747 = vmul.f32 %v1613, %v1732
          %v1748 = vmul.f32 %v1614, %v1732
          %v1749 = vadd.f32 %v1713, %v1733
          %v1750 = vadd.f32 %v1714, %v1734
          %v1751 = vadd.f32 %v1715, %v1735
          %v1752 = vadd.f32 %v1716, %v1736
          %v1753 = vadd.f32 %v1717, %v1737
          %v1754 = vadd.f32 %v1718, %v1738
          %v1755 = vadd.f32 %v1719, %v1739
          %v1756 = vadd.f32 %v1720, %v1740
          %v1757 = vadd.f32 %v1721, %v1741
          %v1758 = vadd.f32 %v1722, %v1742
          %v1759 = vadd.f32 %v1723, %v1743
          %v1760 = vadd.f32 %v1724, %v1744
          %v1761 = vadd.f32 %v1725, %v1745
          %v1762 = vadd.f32 %v1726, %v1746
          %v1763 = vadd.f32 %v1727, %v1747
          %v1764 = vadd.f32 %v1728, %v1748
          %v1765 = vlaneseq
          %v1766 = vshrl.u32 %v1765, 7
          %v1767 = vsub.s32 4, %v1766
          %v1768 = vrot.slane %v1577, %v1767
          %v1769 = vmul.f32 %v1605, %v1768
          %v1770 = vmul.f32 %v1606, %v1768
          %v1771 = vmul.f32 %v1607, %v1768
          %v1772 = vmul.f32 %v1608, %v1768
          %v1773 = vmul.f32 %v1609, %v1768
          %v1774 = vmul.f32 %v1610, %v1768
          %v1775 = vmul.f32 %v1611, %v1768
          %v1776 = vmul.f32 %v1612, %v1768
          %v1777 = vmul.f32 %v1613, %v1768
          %v1778 = vmul.f32 %v1614, %v1768
          %v1779 = vmul.f32 %v1615, %v1768
          %v1780 = vmul.f32 %v1616, %v1768
          %v1781 = vmul.f32 %v1617, %v1768
          %v1782 = vmul.f32 %v1618, %v1768
          %v1783 = vmul.f32 %v1619, %v1768
          %v1784 = vmul.f32 %v1620, %v1768
          %v1785 = vadd.f32 %v1749, %v1769
          %v1786 = vadd.f32 %v1750, %v1770
          %v1787 = vadd.f32 %v1751, %v1771
          %v1788 = vadd.f32 %v1752, %v1772
          %v1789 = vadd.f32 %v1753, %v1773
          %v1790 = vadd.f32 %v1754, %v1774
          %v1791 = vadd.f32 %v1755, %v1775
          %v1792 = vadd.f32 %v1756, %v1776
          %v1793 = vadd.f32 %v1757, %v1777
          %v1794 = vadd.f32 %v1758, %v1778
          %v1795 = vadd.f32 %v1759, %v1779
          %v1796 = vadd.f32 %v1760, %v1780
          %v1797 = vadd.f32 %v1761, %v1781
          %v1798 = vadd.f32 %v1762, %v1782
          %v1799 = vadd.f32 %v1763, %v1783
          %v1800 = vadd.f32 %v1764, %v1784
          %v1801 = vld [vmem:[%s1580 + $0x5] sm:$0xff]
          %v1802 = vld [vmem:[%s1580 + $0xd] sm:$0xff]
          %v1803 = vld [vmem:[%s1580 + $0x25] sm:$0xff]
          %v1804 = vld [vmem:[%s1580 + $0x2d] sm:$0xff]
          %v1805 = vld [vmem:[%s1580 + $0x45] sm:$0xff]
          %v1806 = vld [vmem:[%s1580 + $0x4d] sm:$0xff]
          %v1807 = vld [vmem:[%s1580 + $0x65] sm:$0xff]
          %v1808 = vld [vmem:[%s1580 + $0x6d] sm:$0xff]
          %v1809 = vld [vmem:[%s1580 + $0x85] sm:$0xff]
          %v1810 = vld [vmem:[%s1580 + $0x8d] sm:$0xff]
          %v1811 = vld [vmem:[%s1580 + $0xa5] sm:$0xff]
          %v1812 = vld [vmem:[%s1580 + $0xad] sm:$0xff]
          %v1813 = vld [vmem:[%s1580 + $0xc5] sm:$0xff]
          %v1814 = vld [vmem:[%s1580 + $0xcd] sm:$0xff]
          %v1815 = vld [vmem:[%s1580 + $0xe5] sm:$0xff]
          %v1816 = vld [vmem:[%s1580 + $0xed] sm:$0xff]
          %v1817 = vld [vmem:[%s1580 + $0x105] sm:$0xff]
          %v1818 = vld [vmem:[%s1580 + $0x10d] sm:$0xff]
          %v1819 = vld [vmem:[%s1580 + $0x125] sm:$0xff]
          %v1820 = vld [vmem:[%s1580 + $0x12d] sm:$0xff]
          %v1821 = vld [vmem:[%s1580 + $0x145] sm:$0xff]
          %v1822 = vld [vmem:[%s1580 + $0x14d] sm:$0xff]
          %v1823 = vld [vmem:[%s1580 + $0x165] sm:$0xff]
          %v1824 = vld [vmem:[%s1580 + $0x16d] sm:$0xff]
          %v1825 = vld [vmem:[%s1580 + $0x185] sm:$0xff]
          %v1826 = vld [vmem:[%s1580 + $0x18d] sm:$0xff]
          %v1827 = vld [vmem:[%s1580 + $0x1a5] sm:$0xff]
          %v1828 = vld [vmem:[%s1580 + $0x1ad] sm:$0xff]
          %v1829 = vld [vmem:[%s1580 + $0x1c5] sm:$0xff]
          %v1830 = vld [vmem:[%s1580 + $0x1cd] sm:$0xff]
          %v1831 = vld [vmem:[%s1580 + $0x1e5] sm:$0xff]
          %v1832 = vld [vmem:[%s1580 + $0x1ed] sm:$0xff]
          %v1833 = vld [vmem:[%s1580 + $0x205] sm:$0xff]
          %v1834 = vld [vmem:[%s1580 + $0x20d] sm:$0xff]
          %v1835 = vld [vmem:[%s1580 + $0x225] sm:$0xff]
          %v1836 = vld [vmem:[%s1580 + $0x22d] sm:$0xff]
          %v1837 = vld [vmem:[%s1580 + $0x245] sm:$0xff]
          %v1838 = vld [vmem:[%s1580 + $0x24d] sm:$0xff]
          %v1839 = vld [vmem:[%s1580 + $0x265] sm:$0xff]
          %v1840 = vld [vmem:[%s1580 + $0x26d] sm:$0xff]
          %v1841 = vlaneseq
          %v1842 = vshrl.u32 %v1841, 7
          %v1843 = vsub.s32 1, %v1842
          %v1844 = vrot.slane %v1575, %v1843
          %v1845 = vmul.f32 %v1801, %v1844
          %v1846 = vmul.f32 %v1802, %v1844
          %v1847 = vmul.f32 %v1803, %v1844
          %v1848 = vmul.f32 %v1804, %v1844
          %v1849 = vmul.f32 %v1805, %v1844
          %v1850 = vmul.f32 %v1806, %v1844
          %v1851 = vmul.f32 %v1807, %v1844
          %v1852 = vmul.f32 %v1808, %v1844
          %v1853 = vmul.f32 %v1809, %v1844
          %v1854 = vmul.f32 %v1810, %v1844
          %v1855 = vmul.f32 %v1811, %v1844
          %v1856 = vmul.f32 %v1812, %v1844
          %v1857 = vmul.f32 %v1813, %v1844
          %v1858 = vmul.f32 %v1814, %v1844
          %v1859 = vmul.f32 %v1815, %v1844
          %v1860 = vmul.f32 %v1816, %v1844
          %v1861 = vadd.f32 %v1785, %v1845
          %v1862 = vadd.f32 %v1786, %v1846
          %v1863 = vadd.f32 %v1787, %v1847
          %v1864 = vadd.f32 %v1788, %v1848
          %v1865 = vadd.f32 %v1789, %v1849
          %v1866 = vadd.f32 %v1790, %v1850
          %v1867 = vadd.f32 %v1791, %v1851
          %v1868 = vadd.f32 %v1792, %v1852
          %v1869 = vadd.f32 %v1793, %v1853
          %v1870 = vadd.f32 %v1794, %v1854
          %v1871 = vadd.f32 %v1795, %v1855
          %v1872 = vadd.f32 %v1796, %v1856
          %v1873 = vadd.f32 %v1797, %v1857
          %v1874 = vadd.f32 %v1798, %v1858
          %v1875 = vadd.f32 %v1799, %v1859
          %v1876 = vadd.f32 %v1800, %v1860
          %v1877 = vlaneseq
          %v1878 = vshrl.u32 %v1877, 7
          %v1879 = vsub.s32 6, %v1878
          %v1880 = vrot.slane %v1575, %v1879
          %v1881 = vmul.f32 %v1807, %v1880
          %v1882 = vmul.f32 %v1808, %v1880
          %v1883 = vmul.f32 %v1809, %v1880
          %v1884 = vmul.f32 %v1810, %v1880
          %v1885 = vmul.f32 %v1811, %v1880
          %v1886 = vmul.f32 %v1812, %v1880
          %v1887 = vmul.f32 %v1813, %v1880
          %v1888 = vmul.f32 %v1814, %v1880
          %v1889 = vmul.f32 %v1815, %v1880
          %v1890 = vmul.f32 %v1816, %v1880
          %v1891 = vmul.f32 %v1817, %v1880
          %v1892 = vmul.f32 %v1818, %v1880
          %v1893 = vmul.f32 %v1819, %v1880
          %v1894 = vmul.f32 %v1820, %v1880
          %v1895 = vmul.f32 %v1821, %v1880
          %v1896 = vmul.f32 %v1822, %v1880
          %v1897 = vadd.f32 %v1861, %v1881
          %v1898 = vadd.f32 %v1862, %v1882
          %v1899 = vadd.f32 %v1863, %v1883
          %v1900 = vadd.f32 %v1864, %v1884
          %v1901 = vadd.f32 %v1865, %v1885
          %v1902 = vadd.f32 %v1866, %v1886
          %v1903 = vadd.f32 %v1867, %v1887
          %v1904 = vadd.f32 %v1868, %v1888
          %v1905 = vadd.f32 %v1869, %v1889
          %v1906 = vadd.f32 %v1870, %v1890
          %v1907 = vadd.f32 %v1871, %v1891
          %v1908 = vadd.f32 %v1872, %v1892
          %v1909 = vadd.f32 %v1873, %v1893
          %v1910 = vadd.f32 %v1874, %v1894
          %v1911 = vadd.f32 %v1875, %v1895
          %v1912 = vadd.f32 %v1876, %v1896
          %v1913 = vlaneseq
          %v1914 = vshrl.u32 %v1913, 7
          %v1915 = vsub.s32 3, %v1914
          %v1916 = vrot.slane %v1576, %v1915
          %v1917 = vmul.f32 %v1813, %v1916
          %v1918 = vmul.f32 %v1814, %v1916
          %v1919 = vmul.f32 %v1815, %v1916
          %v1920 = vmul.f32 %v1816, %v1916
          %v1921 = vmul.f32 %v1817, %v1916
          %v1922 = vmul.f32 %v1818, %v1916
          %v1923 = vmul.f32 %v1819, %v1916
          %v1924 = vmul.f32 %v1820, %v1916
          %v1925 = vmul.f32 %v1821, %v1916
          %v1926 = vmul.f32 %v1822, %v1916
          %v1927 = vmul.f32 %v1823, %v1916
          %v1928 = vmul.f32 %v1824, %v1916
          %v1929 = vmul.f32 %v1825, %v1916
          %v1930 = vmul.f32 %v1826, %v1916
          %v1931 = vmul.f32 %v1827, %v1916
          %v1932 = vmul.f32 %v1828, %v1916
          %v1933 = vadd.f32 %v1897, %v1917
          %v1934 = vadd.f32 %v1898, %v1918
          %v1935 = vadd.f32 %v1899, %v1919
          %v1936 = vadd.f32 %v1900, %v1920
          %v1937 = vadd.f32 %v1901, %v1921
          %v1938 = vadd.f32 %v1902, %v1922
          %v1939 = vadd.f32 %v1903, %v1923
          %v1940 = vadd.f32 %v1904, %v1924
          %v1941 = vadd.f32 %v1905, %v1925
          %v1942 = vadd.f32 %v1906, %v1926
          %v1943 = vadd.f32 %v1907, %v1927
          %v1944 = vadd.f32 %v1908, %v1928
          %v1945 = vadd.f32 %v1909, %v1929
          %v1946 = vadd.f32 %v1910, %v1930
          %v1947 = vadd.f32 %v1911, %v1931
          %v1948 = vadd.f32 %v1912, %v1932
          %v1949 = vlaneseq
          %v1950 = vshrl.u32 %v1949, 7
          %v1951 = vsub.s32 0, %v1950
          %v1952 = vrot.slane %v1577, %v1951
          %v1953 = vmul.f32 %v1819, %v1952
          %v1954 = vmul.f32 %v1820, %v1952
          %v1955 = vmul.f32 %v1821, %v1952
          %v1956 = vmul.f32 %v1822, %v1952
          %v1957 = vmul.f32 %v1823, %v1952
          %v1958 = vmul.f32 %v1824, %v1952
          %v1959 = vmul.f32 %v1825, %v1952
          %v1960 = vmul.f32 %v1826, %v1952
          %v1961 = vmul.f32 %v1827, %v1952
          %v1962 = vmul.f32 %v1828, %v1952
          %v1963 = vmul.f32 %v1829, %v1952
          %v1964 = vmul.f32 %v1830, %v1952
          %v1965 = vmul.f32 %v1831, %v1952
          %v1966 = vmul.f32 %v1832, %v1952
          %v1967 = vmul.f32 %v1833, %v1952
          %v1968 = vmul.f32 %v1834, %v1952
          %v1969 = vadd.f32 %v1933, %v1953
          %v1970 = vadd.f32 %v1934, %v1954
          %v1971 = vadd.f32 %v1935, %v1955
          %v1972 = vadd.f32 %v1936, %v1956
          %v1973 = vadd.f32 %v1937, %v1957
          %v1974 = vadd.f32 %v1938, %v1958
          %v1975 = vadd.f32 %v1939, %v1959
          %v1976 = vadd.f32 %v1940, %v1960
          %v1977 = vadd.f32 %v1941, %v1961
          %v1978 = vadd.f32 %v1942, %v1962
          %v1979 = vadd.f32 %v1943, %v1963
          %v1980 = vadd.f32 %v1944, %v1964
          %v1981 = vadd.f32 %v1945, %v1965
          %v1982 = vadd.f32 %v1946, %v1966
          %v1983 = vadd.f32 %v1947, %v1967
          %v1984 = vadd.f32 %v1948, %v1968
          %v1985 = vlaneseq
          %v1986 = vshrl.u32 %v1985, 7
          %v1987 = vsub.s32 5, %v1986
          %v1988 = vrot.slane %v1577, %v1987
          %v1989 = vmul.f32 %v1825, %v1988
          %v1990 = vmul.f32 %v1826, %v1988
          %v1991 = vmul.f32 %v1827, %v1988
          %v1992 = vmul.f32 %v1828, %v1988
          %v1993 = vmul.f32 %v1829, %v1988
          %v1994 = vmul.f32 %v1830, %v1988
          %v1995 = vmul.f32 %v1831, %v1988
          %v1996 = vmul.f32 %v1832, %v1988
          %v1997 = vmul.f32 %v1833, %v1988
          %v1998 = vmul.f32 %v1834, %v1988
          %v1999 = vmul.f32 %v1835, %v1988
          %v2000 = vmul.f32 %v1836, %v1988
          %v2001 = vmul.f32 %v1837, %v1988
          %v2002 = vmul.f32 %v1838, %v1988
          %v2003 = vmul.f32 %v1839, %v1988
          %v2004 = vmul.f32 %v1840, %v1988
          %v2005 = vadd.f32 %v1969, %v1989
          %v2006 = vadd.f32 %v1970, %v1990
          %v2007 = vadd.f32 %v1971, %v1991
          %v2008 = vadd.f32 %v1972, %v1992
          %v2009 = vadd.f32 %v1973, %v1993
          %v2010 = vadd.f32 %v1974, %v1994
          %v2011 = vadd.f32 %v1975, %v1995
          %v2012 = vadd.f32 %v1976, %v1996
          %v2013 = vadd.f32 %v1977, %v1997
          %v2014 = vadd.f32 %v1978, %v1998
          %v2015 = vadd.f32 %v1979, %v1999
          %v2016 = vadd.f32 %v1980, %v2000
          %v2017 = vadd.f32 %v1981, %v2001
          %v2018 = vadd.f32 %v1982, %v2002
          %v2019 = vadd.f32 %v1983, %v2003
          %v2020 = vadd.f32 %v1984, %v2004
          %v2021 = vld [vmem:[%s1580 + $0x8] sm:$0xff]
          %v2022 = vld [vmem:[%s1580 + $0x10] sm:$0xff]
          %v2023 = vld [vmem:[%s1580 + $0x28] sm:$0xff]
          %v2024 = vld [vmem:[%s1580 + $0x30] sm:$0xff]
          %v2025 = vld [vmem:[%s1580 + $0x48] sm:$0xff]
          %v2026 = vld [vmem:[%s1580 + $0x50] sm:$0xff]
          %v2027 = vld [vmem:[%s1580 + $0x68] sm:$0xff]
          %v2028 = vld [vmem:[%s1580 + $0x70] sm:$0xff]
          %v2029 = vld [vmem:[%s1580 + $0x88] sm:$0xff]
          %v2030 = vld [vmem:[%s1580 + $0x90] sm:$0xff]
          %v2031 = vld [vmem:[%s1580 + $0xa8] sm:$0xff]
          %v2032 = vld [vmem:[%s1580 + $0xb0] sm:$0xff]
          %v2033 = vld [vmem:[%s1580 + $0xc8] sm:$0xff]
          %v2034 = vld [vmem:[%s1580 + $0xd0] sm:$0xff]
          %v2035 = vld [vmem:[%s1580 + $0xe8] sm:$0xff]
          %v2036 = vld [vmem:[%s1580 + $0xf0] sm:$0xff]
          %v2037 = vld [vmem:[%s1580 + $0x108] sm:$0xff]
          %v2038 = vld [vmem:[%s1580 + $0x110] sm:$0xff]
          %v2039 = vld [vmem:[%s1580 + $0x128] sm:$0xff]
          %v2040 = vld [vmem:[%s1580 + $0x130] sm:$0xff]
          %v2041 = vld [vmem:[%s1580 + $0x148] sm:$0xff]
          %v2042 = vld [vmem:[%s1580 + $0x150] sm:$0xff]
          %v2043 = vld [vmem:[%s1580 + $0x168] sm:$0xff]
          %v2044 = vld [vmem:[%s1580 + $0x170] sm:$0xff]
          %v2045 = vld [vmem:[%s1580 + $0x188] sm:$0xff]
          %v2046 = vld [vmem:[%s1580 + $0x190] sm:$0xff]
          %v2047 = vld [vmem:[%s1580 + $0x1a8] sm:$0xff]
          %v2048 = vld [vmem:[%s1580 + $0x1b0] sm:$0xff]
          %v2049 = vld [vmem:[%s1580 + $0x1c8] sm:$0xff]
          %v2050 = vld [vmem:[%s1580 + $0x1d0] sm:$0xff]
          %v2051 = vld [vmem:[%s1580 + $0x1e8] sm:$0xff]
          %v2052 = vld [vmem:[%s1580 + $0x1f0] sm:$0xff]
          %v2053 = vld [vmem:[%s1580 + $0x208] sm:$0xff]
          %v2054 = vld [vmem:[%s1580 + $0x210] sm:$0xff]
          %v2055 = vld [vmem:[%s1580 + $0x228] sm:$0xff]
          %v2056 = vld [vmem:[%s1580 + $0x230] sm:$0xff]
          %v2057 = vld [vmem:[%s1580 + $0x248] sm:$0xff]
          %v2058 = vld [vmem:[%s1580 + $0x250] sm:$0xff]
          %v2059 = vld [vmem:[%s1580 + $0x268] sm:$0xff]
          %v2060 = vld [vmem:[%s1580 + $0x270] sm:$0xff]
          %v2061 = vlaneseq
          %v2062 = vshrl.u32 %v2061, 7
          %v2063 = vsub.s32 2, %v2062
          %v2064 = vrot.slane %v1575, %v2063
          %v2065 = vmul.f32 %v2021, %v2064
          %v2066 = vmul.f32 %v2022, %v2064
          %v2067 = vmul.f32 %v2023, %v2064
          %v2068 = vmul.f32 %v2024, %v2064
          %v2069 = vmul.f32 %v2025, %v2064
          %v2070 = vmul.f32 %v2026, %v2064
          %v2071 = vmul.f32 %v2027, %v2064
          %v2072 = vmul.f32 %v2028, %v2064
          %v2073 = vmul.f32 %v2029, %v2064
          %v2074 = vmul.f32 %v2030, %v2064
          %v2075 = vmul.f32 %v2031, %v2064
          %v2076 = vmul.f32 %v2032, %v2064
          %v2077 = vmul.f32 %v2033, %v2064
          %v2078 = vmul.f32 %v2034, %v2064
          %v2079 = vmul.f32 %v2035, %v2064
          %v2080 = vmul.f32 %v2036, %v2064
          %v2081 = vadd.f32 %v2005, %v2065
          %v2082 = vadd.f32 %v2006, %v2066
          %v2083 = vadd.f32 %v2007, %v2067
          %v2084 = vadd.f32 %v2008, %v2068
          %v2085 = vadd.f32 %v2009, %v2069
          %v2086 = vadd.f32 %v2010, %v2070
          %v2087 = vadd.f32 %v2011, %v2071
          %v2088 = vadd.f32 %v2012, %v2072
          %v2089 = vadd.f32 %v2013, %v2073
          %v2090 = vadd.f32 %v2014, %v2074
          %v2091 = vadd.f32 %v2015, %v2075
          %v2092 = vadd.f32 %v2016, %v2076
          %v2093 = vadd.f32 %v2017, %v2077
          %v2094 = vadd.f32 %v2018, %v2078
          %v2095 = vadd.f32 %v2019, %v2079
          %v2096 = vadd.f32 %v2020, %v2080
          %v2097 = vlaneseq
          %v2098 = vshrl.u32 %v2097, 7
          %v2099 = vsub.s32 7, %v2098
          %v2100 = vrot.slane %v1575, %v2099
          %v2101 = vmul.f32 %v2027, %v2100
          %v2102 = vmul.f32 %v2028, %v2100
          %v2103 = vmul.f32 %v2029, %v2100
          %v2104 = vmul.f32 %v2030, %v2100
          %v2105 = vmul.f32 %v2031, %v2100
          %v2106 = vmul.f32 %v2032, %v2100
          %v2107 = vmul.f32 %v2033, %v2100
          %v2108 = vmul.f32 %v2034, %v2100
          %v2109 = vmul.f32 %v2035, %v2100
          %v2110 = vmul.f32 %v2036, %v2100
          %v2111 = vmul.f32 %v2037, %v2100
          %v2112 = vmul.f32 %v2038, %v2100
          %v2113 = vmul.f32 %v2039, %v2100
          %v2114 = vmul.f32 %v2040, %v2100
          %v2115 = vmul.f32 %v2041, %v2100
          %v2116 = vmul.f32 %v2042, %v2100
          %v2117 = vadd.f32 %v2081, %v2101
          %v2118 = vadd.f32 %v2082, %v2102
          %v2119 = vadd.f32 %v2083, %v2103
          %v2120 = vadd.f32 %v2084, %v2104
          %v2121 = vadd.f32 %v2085, %v2105
          %v2122 = vadd.f32 %v2086, %v2106
          %v2123 = vadd.f32 %v2087, %v2107
          %v2124 = vadd.f32 %v2088, %v2108
          %v2125 = vadd.f32 %v2089, %v2109
          %v2126 = vadd.f32 %v2090, %v2110
          %v2127 = vadd.f32 %v2091, %v2111
          %v2128 = vadd.f32 %v2092, %v2112
          %v2129 = vadd.f32 %v2093, %v2113
          %v2130 = vadd.f32 %v2094, %v2114
          %v2131 = vadd.f32 %v2095, %v2115
          %v2132 = vadd.f32 %v2096, %v2116
          %v2133 = vlaneseq
          %v2134 = vshrl.u32 %v2133, 7
          %v2135 = vsub.s32 4, %v2134
          %v2136 = vrot.slane %v1576, %v2135
          %v2137 = vmul.f32 %v2033, %v2136
          %v2138 = vmul.f32 %v2034, %v2136
          %v2139 = vmul.f32 %v2035, %v2136
          %v2140 = vmul.f32 %v2036, %v2136
          %v2141 = vmul.f32 %v2037, %v2136
          %v2142 = vmul.f32 %v2038, %v2136
          %v2143 = vmul.f32 %v2039, %v2136
          %v2144 = vmul.f32 %v2040, %v2136
          %v2145 = vmul.f32 %v2041, %v2136
          %v2146 = vmul.f32 %v2042, %v2136
          %v2147 = vmul.f32 %v2043, %v2136
          %v2148 = vmul.f32 %v2044, %v2136
          %v2149 = vmul.f32 %v2045, %v2136
          %v2150 = vmul.f32 %v2046, %v2136
          %v2151 = vmul.f32 %v2047, %v2136
          %v2152 = vmul.f32 %v2048, %v2136
          %v2153 = vadd.f32 %v2117, %v2137
          %v2154 = vadd.f32 %v2118, %v2138
          %v2155 = vadd.f32 %v2119, %v2139
          %v2156 = vadd.f32 %v2120, %v2140
          %v2157 = vadd.f32 %v2121, %v2141
          %v2158 = vadd.f32 %v2122, %v2142
          %v2159 = vadd.f32 %v2123, %v2143
          %v2160 = vadd.f32 %v2124, %v2144
          %v2161 = vadd.f32 %v2125, %v2145
          %v2162 = vadd.f32 %v2126, %v2146
          %v2163 = vadd.f32 %v2127, %v2147
          %v2164 = vadd.f32 %v2128, %v2148
          %v2165 = vadd.f32 %v2129, %v2149
          %v2166 = vadd.f32 %v2130, %v2150
          %v2167 = vadd.f32 %v2131, %v2151
          %v2168 = vadd.f32 %v2132, %v2152
          %v2169 = vlaneseq
          %v2170 = vshrl.u32 %v2169, 7
          %v2171 = vsub.s32 1, %v2170
          %v2172 = vrot.slane %v1577, %v2171
          %v2173 = vmul.f32 %v2039, %v2172
          %v2174 = vmul.f32 %v2040, %v2172
          %v2175 = vmul.f32 %v2041, %v2172
          %v2176 = vmul.f32 %v2042, %v2172
          %v2177 = vmul.f32 %v2043, %v2172
          %v2178 = vmul.f32 %v2044, %v2172
          %v2179 = vmul.f32 %v2045, %v2172
          %v2180 = vmul.f32 %v2046, %v2172
          %v2181 = vmul.f32 %v2047, %v2172
          %v2182 = vmul.f32 %v2048, %v2172
          %v2183 = vmul.f32 %v2049, %v2172
          %v2184 = vmul.f32 %v2050, %v2172
          %v2185 = vmul.f32 %v2051, %v2172
          %v2186 = vmul.f32 %v2052, %v2172
          %v2187 = vmul.f32 %v2053, %v2172
          %v2188 = vmul.f32 %v2054, %v2172
          %v2189 = vadd.f32 %v2153, %v2173
          %v2190 = vadd.f32 %v2154, %v2174
          %v2191 = vadd.f32 %v2155, %v2175
          %v2192 = vadd.f32 %v2156, %v2176
          %v2193 = vadd.f32 %v2157, %v2177
          %v2194 = vadd.f32 %v2158, %v2178
          %v2195 = vadd.f32 %v2159, %v2179
          %v2196 = vadd.f32 %v2160, %v2180
          %v2197 = vadd.f32 %v2161, %v2181
          %v2198 = vadd.f32 %v2162, %v2182
          %v2199 = vadd.f32 %v2163, %v2183
          %v2200 = vadd.f32 %v2164, %v2184
          %v2201 = vadd.f32 %v2165, %v2185
          %v2202 = vadd.f32 %v2166, %v2186
          %v2203 = vadd.f32 %v2167, %v2187
          %v2204 = vadd.f32 %v2168, %v2188
          %v2205 = vlaneseq
          %v2206 = vshrl.u32 %v2205, 7
          %v2207 = vsub.s32 6, %v2206
          %v2208 = vrot.slane %v1577, %v2207
          %v2209 = vmul.f32 %v2045, %v2208
          %v2210 = vmul.f32 %v2046, %v2208
          %v2211 = vmul.f32 %v2047, %v2208
          %v2212 = vmul.f32 %v2048, %v2208
          %v2213 = vmul.f32 %v2049, %v2208
          %v2214 = vmul.f32 %v2050, %v2208
          %v2215 = vmul.f32 %v2051, %v2208
          %v2216 = vmul.f32 %v2052, %v2208
          %v2217 = vmul.f32 %v2053, %v2208
          %v2218 = vmul.f32 %v2054, %v2208
          %v2219 = vmul.f32 %v2055, %v2208
          %v2220 = vmul.f32 %v2056, %v2208
          %v2221 = vmul.f32 %v2057, %v2208
          %v2222 = vmul.f32 %v2058, %v2208
          %v2223 = vmul.f32 %v2059, %v2208
          %v2224 = vmul.f32 %v2060, %v2208
          %v2225 = vadd.f32 %v2189, %v2209
          %v2226 = vadd.f32 %v2190, %v2210
          %v2227 = vadd.f32 %v2191, %v2211
          %v2228 = vadd.f32 %v2192, %v2212
          %v2229 = vadd.f32 %v2193, %v2213
          %v2230 = vadd.f32 %v2194, %v2214
          %v2231 = vadd.f32 %v2195, %v2215
          %v2232 = vadd.f32 %v2196, %v2216
          %v2233 = vadd.f32 %v2197, %v2217
          %v2234 = vadd.f32 %v2198, %v2218
          %v2235 = vadd.f32 %v2199, %v2219
          %v2236 = vadd.f32 %v2200, %v2220
          %v2237 = vadd.f32 %v2201, %v2221
          %v2238 = vadd.f32 %v2202, %v2222
          %v2239 = vadd.f32 %v2203, %v2223
          %v2240 = vadd.f32 %v2204, %v2224
          %v2241 = vld [vmem:[%s1580 + $0xb] sm:$0xff]
          %v2242 = vld [vmem:[%s1580 + $0x13] sm:$0xff]
          %v2243 = vld [vmem:[%s1580 + $0x2b] sm:$0xff]
          %v2244 = vld [vmem:[%s1580 + $0x33] sm:$0xff]
          %v2245 = vld [vmem:[%s1580 + $0x4b] sm:$0xff]
          %v2246 = vld [vmem:[%s1580 + $0x53] sm:$0xff]
          %v2247 = vld [vmem:[%s1580 + $0x6b] sm:$0xff]
          %v2248 = vld [vmem:[%s1580 + $0x73] sm:$0xff]
          %v2249 = vld [vmem:[%s1580 + $0x8b] sm:$0xff]
          %v2250 = vld [vmem:[%s1580 + $0x93] sm:$0xff]
          %v2251 = vld [vmem:[%s1580 + $0xab] sm:$0xff]
          %v2252 = vld [vmem:[%s1580 + $0xb3] sm:$0xff]
          %v2253 = vld [vmem:[%s1580 + $0xcb] sm:$0xff]
          %v2254 = vld [vmem:[%s1580 + $0xd3] sm:$0xff]
          %v2255 = vld [vmem:[%s1580 + $0xeb] sm:$0xff]
          %v2256 = vld [vmem:[%s1580 + $0xf3] sm:$0xff]
          %v2257 = vld [vmem:[%s1580 + $0x10b] sm:$0xff]
          %v2258 = vld [vmem:[%s1580 + $0x113] sm:$0xff]
          %v2259 = vld [vmem:[%s1580 + $0x12b] sm:$0xff]
          %v2260 = vld [vmem:[%s1580 + $0x133] sm:$0xff]
          %v2261 = vld [vmem:[%s1580 + $0x14b] sm:$0xff]
          %v2262 = vld [vmem:[%s1580 + $0x153] sm:$0xff]
          %v2263 = vld [vmem:[%s1580 + $0x16b] sm:$0xff]
          %v2264 = vld [vmem:[%s1580 + $0x173] sm:$0xff]
          %v2265 = vld [vmem:[%s1580 + $0x18b] sm:$0xff]
          %v2266 = vld [vmem:[%s1580 + $0x193] sm:$0xff]
          %v2267 = vld [vmem:[%s1580 + $0x1ab] sm:$0xff]
          %v2268 = vld [vmem:[%s1580 + $0x1b3] sm:$0xff]
          %v2269 = vld [vmem:[%s1580 + $0x1cb] sm:$0xff]
          %v2270 = vld [vmem:[%s1580 + $0x1d3] sm:$0xff]
          %v2271 = vld [vmem:[%s1580 + $0x1eb] sm:$0xff]
          %v2272 = vld [vmem:[%s1580 + $0x1f3] sm:$0xff]
          %v2273 = vld [vmem:[%s1580 + $0x20b] sm:$0xff]
          %v2274 = vld [vmem:[%s1580 + $0x213] sm:$0xff]
          %v2275 = vld [vmem:[%s1580 + $0x22b] sm:$0xff]
          %v2276 = vld [vmem:[%s1580 + $0x233] sm:$0xff]
          %v2277 = vld [vmem:[%s1580 + $0x24b] sm:$0xff]
          %v2278 = vld [vmem:[%s1580 + $0x253] sm:$0xff]
          %v2279 = vld [vmem:[%s1580 + $0x26b] sm:$0xff]
          %v2280 = vld [vmem:[%s1580 + $0x273] sm:$0xff]
          %v2281 = vlaneseq
          %v2282 = vshrl.u32 %v2281, 7
          %v2283 = vsub.s32 3, %v2282
          %v2284 = vrot.slane %v1575, %v2283
          %v2285 = vmul.f32 %v2241, %v2284
          %v2286 = vmul.f32 %v2242, %v2284
          %v2287 = vmul.f32 %v2243, %v2284
          %v2288 = vmul.f32 %v2244, %v2284
          %v2289 = vmul.f32 %v2245, %v2284
          %v2290 = vmul.f32 %v2246, %v2284
          %v2291 = vmul.f32 %v2247, %v2284
          %v2292 = vmul.f32 %v2248, %v2284
          %v2293 = vmul.f32 %v2249, %v2284
          %v2294 = vmul.f32 %v2250, %v2284
          %v2295 = vmul.f32 %v2251, %v2284
          %v2296 = vmul.f32 %v2252, %v2284
          %v2297 = vmul.f32 %v2253, %v2284
          %v2298 = vmul.f32 %v2254, %v2284
          %v2299 = vmul.f32 %v2255, %v2284
          %v2300 = vmul.f32 %v2256, %v2284
          %v2301 = vadd.f32 %v2225, %v2285
          %v2302 = vadd.f32 %v2226, %v2286
          %v2303 = vadd.f32 %v2227, %v2287
          %v2304 = vadd.f32 %v2228, %v2288
          %v2305 = vadd.f32 %v2229, %v2289
          %v2306 = vadd.f32 %v2230, %v2290
          %v2307 = vadd.f32 %v2231, %v2291
          %v2308 = vadd.f32 %v2232, %v2292
          %v2309 = vadd.f32 %v2233, %v2293
          %v2310 = vadd.f32 %v2234, %v2294
          %v2311 = vadd.f32 %v2235, %v2295
          %v2312 = vadd.f32 %v2236, %v2296
          %v2313 = vadd.f32 %v2237, %v2297
          %v2314 = vadd.f32 %v2238, %v2298
          %v2315 = vadd.f32 %v2239, %v2299
          %v2316 = vadd.f32 %v2240, %v2300
          %v2317 = vlaneseq
          %v2318 = vshrl.u32 %v2317, 7
          %v2319 = vsub.s32 0, %v2318
          %v2320 = vrot.slane %v1576, %v2319
          %v2321 = vmul.f32 %v2247, %v2320
          %v2322 = vmul.f32 %v2248, %v2320
          %v2323 = vmul.f32 %v2249, %v2320
          %v2324 = vmul.f32 %v2250, %v2320
          %v2325 = vmul.f32 %v2251, %v2320
          %v2326 = vmul.f32 %v2252, %v2320
          %v2327 = vmul.f32 %v2253, %v2320
          %v2328 = vmul.f32 %v2254, %v2320
          %v2329 = vmul.f32 %v2255, %v2320
          %v2330 = vmul.f32 %v2256, %v2320
          %v2331 = vmul.f32 %v2257, %v2320
          %v2332 = vmul.f32 %v2258, %v2320
          %v2333 = vmul.f32 %v2259, %v2320
          %v2334 = vmul.f32 %v2260, %v2320
          %v2335 = vmul.f32 %v2261, %v2320
          %v2336 = vmul.f32 %v2262, %v2320
          %v2337 = vadd.f32 %v2301, %v2321
          %v2338 = vadd.f32 %v2302, %v2322
          %v2339 = vadd.f32 %v2303, %v2323
          %v2340 = vadd.f32 %v2304, %v2324
          %v2341 = vadd.f32 %v2305, %v2325
          %v2342 = vadd.f32 %v2306, %v2326
          %v2343 = vadd.f32 %v2307, %v2327
          %v2344 = vadd.f32 %v2308, %v2328
          %v2345 = vadd.f32 %v2309, %v2329
          %v2346 = vadd.f32 %v2310, %v2330
          %v2347 = vadd.f32 %v2311, %v2331
          %v2348 = vadd.f32 %v2312, %v2332
          %v2349 = vadd.f32 %v2313, %v2333
          %v2350 = vadd.f32 %v2314, %v2334
          %v2351 = vadd.f32 %v2315, %v2335
          %v2352 = vadd.f32 %v2316, %v2336
          %v2353 = vlaneseq
          %v2354 = vshrl.u32 %v2353, 7
          %v2355 = vsub.s32 5, %v2354
          %v2356 = vrot.slane %v1576, %v2355
          %v2357 = vmul.f32 %v2253, %v2356
          %v2358 = vmul.f32 %v2254, %v2356
          %v2359 = vmul.f32 %v2255, %v2356
          %v2360 = vmul.f32 %v2256, %v2356
          %v2361 = vmul.f32 %v2257, %v2356
          %v2362 = vmul.f32 %v2258, %v2356
          %v2363 = vmul.f32 %v2259, %v2356
          %v2364 = vmul.f32 %v2260, %v2356
          %v2365 = vmul.f32 %v2261, %v2356
          %v2366 = vmul.f32 %v2262, %v2356
          %v2367 = vmul.f32 %v2263, %v2356
          %v2368 = vmul.f32 %v2264, %v2356
          %v2369 = vmul.f32 %v2265, %v2356
          %v2370 = vmul.f32 %v2266, %v2356
          %v2371 = vmul.f32 %v2267, %v2356
          %v2372 = vmul.f32 %v2268, %v2356
          %v2373 = vadd.f32 %v2337, %v2357
          %v2374 = vadd.f32 %v2338, %v2358
          %v2375 = vadd.f32 %v2339, %v2359
          %v2376 = vadd.f32 %v2340, %v2360
          %v2377 = vadd.f32 %v2341, %v2361
          %v2378 = vadd.f32 %v2342, %v2362
          %v2379 = vadd.f32 %v2343, %v2363
          %v2380 = vadd.f32 %v2344, %v2364
          %v2381 = vadd.f32 %v2345, %v2365
          %v2382 = vadd.f32 %v2346, %v2366
          %v2383 = vadd.f32 %v2347, %v2367
          %v2384 = vadd.f32 %v2348, %v2368
          %v2385 = vadd.f32 %v2349, %v2369
          %v2386 = vadd.f32 %v2350, %v2370
          %v2387 = vadd.f32 %v2351, %v2371
          %v2388 = vadd.f32 %v2352, %v2372
          %v2389 = vlaneseq
          %v2390 = vshrl.u32 %v2389, 7
          %v2391 = vsub.s32 2, %v2390
          %v2392 = vrot.slane %v1577, %v2391
          %v2393 = vmul.f32 %v2259, %v2392
          %v2394 = vmul.f32 %v2260, %v2392
          %v2395 = vmul.f32 %v2261, %v2392
          %v2396 = vmul.f32 %v2262, %v2392
          %v2397 = vmul.f32 %v2263, %v2392
          %v2398 = vmul.f32 %v2264, %v2392
          %v2399 = vmul.f32 %v2265, %v2392
          %v2400 = vmul.f32 %v2266, %v2392
          %v2401 = vmul.f32 %v2267, %v2392
          %v2402 = vmul.f32 %v2268, %v2392
          %v2403 = vmul.f32 %v2269, %v2392
          %v2404 = vmul.f32 %v2270, %v2392
          %v2405 = vmul.f32 %v2271, %v2392
          %v2406 = vmul.f32 %v2272, %v2392
          %v2407 = vmul.f32 %v2273, %v2392
          %v2408 = vmul.f32 %v2274, %v2392
          %v2409 = vadd.f32 %v2373, %v2393
          %v2410 = vadd.f32 %v2374, %v2394
          %v2411 = vadd.f32 %v2375, %v2395
          %v2412 = vadd.f32 %v2376, %v2396
          %v2413 = vadd.f32 %v2377, %v2397
          %v2414 = vadd.f32 %v2378, %v2398
          %v2415 = vadd.f32 %v2379, %v2399
          %v2416 = vadd.f32 %v2380, %v2400
          %v2417 = vadd.f32 %v2381, %v2401
          %v2418 = vadd.f32 %v2382, %v2402
          %v2419 = vadd.f32 %v2383, %v2403
          %v2420 = vadd.f32 %v2384, %v2404
          %v2421 = vadd.f32 %v2385, %v2405
          %v2422 = vadd.f32 %v2386, %v2406
          %v2423 = vadd.f32 %v2387, %v2407
          %v2424 = vadd.f32 %v2388, %v2408
          %v2425 = vlaneseq
          %v2426 = vshrl.u32 %v2425, 7
          %v2427 = vsub.s32 7, %v2426
          %v2428 = vrot.slane %v1577, %v2427
          %v2429 = vmul.f32 %v2265, %v2428
          %v2430 = vmul.f32 %v2266, %v2428
          %v2431 = vmul.f32 %v2267, %v2428
          %v2432 = vmul.f32 %v2268, %v2428
          %v2433 = vmul.f32 %v2269, %v2428
          %v2434 = vmul.f32 %v2270, %v2428
          %v2435 = vmul.f32 %v2271, %v2428
          %v2436 = vmul.f32 %v2272, %v2428
          %v2437 = vmul.f32 %v2273, %v2428
          %v2438 = vmul.f32 %v2274, %v2428
          %v2439 = vmul.f32 %v2275, %v2428
          %v2440 = vmul.f32 %v2276, %v2428
          %v2441 = vmul.f32 %v2277, %v2428
          %v2442 = vmul.f32 %v2278, %v2428
          %v2443 = vmul.f32 %v2279, %v2428
          %v2444 = vmul.f32 %v2280, %v2428
          %v2445 = vadd.f32 %v2409, %v2429
          %v2446 = vadd.f32 %v2410, %v2430
          %v2447 = vadd.f32 %v2411, %v2431
          %v2448 = vadd.f32 %v2412, %v2432
          %v2449 = vadd.f32 %v2413, %v2433
          %v2450 = vadd.f32 %v2414, %v2434
          %v2451 = vadd.f32 %v2415, %v2435
          %v2452 = vadd.f32 %v2416, %v2436
          %v2453 = vadd.f32 %v2417, %v2437
          %v2454 = vadd.f32 %v2418, %v2438
          %v2455 = vadd.f32 %v2419, %v2439
          %v2456 = vadd.f32 %v2420, %v2440
          %v2457 = vadd.f32 %v2421, %v2441
          %v2458 = vadd.f32 %v2422, %v2442
          %v2459 = vadd.f32 %v2423, %v2443
          %v2460 = vadd.f32 %v2424, %v2444
          %v2461 = vld [vmem:[%s1580 + $0xe] sm:$0xff]
          %v2462 = vld [vmem:[%s1580 + $0x16] sm:$0xff]
          %v2463 = vld [vmem:[%s1580 + $0x2e] sm:$0xff]
          %v2464 = vld [vmem:[%s1580 + $0x36] sm:$0xff]
          %v2465 = vld [vmem:[%s1580 + $0x4e] sm:$0xff]
          %v2466 = vld [vmem:[%s1580 + $0x56] sm:$0xff]
          %v2467 = vld [vmem:[%s1580 + $0x6e] sm:$0xff]
          %v2468 = vld [vmem:[%s1580 + $0x76] sm:$0xff]
          %v2469 = vld [vmem:[%s1580 + $0x8e] sm:$0xff]
          %v2470 = vld [vmem:[%s1580 + $0x96] sm:$0xff]
          %v2471 = vld [vmem:[%s1580 + $0xae] sm:$0xff]
          %v2472 = vld [vmem:[%s1580 + $0xb6] sm:$0xff]
          %v2473 = vld [vmem:[%s1580 + $0xce] sm:$0xff]
          %v2474 = vld [vmem:[%s1580 + $0xd6] sm:$0xff]
          %v2475 = vld [vmem:[%s1580 + $0xee] sm:$0xff]
          %v2476 = vld [vmem:[%s1580 + $0xf6] sm:$0xff]
          %v2477 = vld [vmem:[%s1580 + $0x10e] sm:$0xff]
          %v2478 = vld [vmem:[%s1580 + $0x116] sm:$0xff]
          %v2479 = vld [vmem:[%s1580 + $0x12e] sm:$0xff]
          %v2480 = vld [vmem:[%s1580 + $0x136] sm:$0xff]
          %v2481 = vld [vmem:[%s1580 + $0x14e] sm:$0xff]
          %v2482 = vld [vmem:[%s1580 + $0x156] sm:$0xff]
          %v2483 = vld [vmem:[%s1580 + $0x16e] sm:$0xff]
          %v2484 = vld [vmem:[%s1580 + $0x176] sm:$0xff]
          %v2485 = vld [vmem:[%s1580 + $0x18e] sm:$0xff]
          %v2486 = vld [vmem:[%s1580 + $0x196] sm:$0xff]
          %v2487 = vld [vmem:[%s1580 + $0x1ae] sm:$0xff]
          %v2488 = vld [vmem:[%s1580 + $0x1b6] sm:$0xff]
          %v2489 = vld [vmem:[%s1580 + $0x1ce] sm:$0xff]
          %v2490 = vld [vmem:[%s1580 + $0x1d6] sm:$0xff]
          %v2491 = vld [vmem:[%s1580 + $0x1ee] sm:$0xff]
          %v2492 = vld [vmem:[%s1580 + $0x1f6] sm:$0xff]
          %v2493 = vld [vmem:[%s1580 + $0x20e] sm:$0xff]
          %v2494 = vld [vmem:[%s1580 + $0x216] sm:$0xff]
          %v2495 = vld [vmem:[%s1580 + $0x22e] sm:$0xff]
          %v2496 = vld [vmem:[%s1580 + $0x236] sm:$0xff]
          %v2497 = vld [vmem:[%s1580 + $0x24e] sm:$0xff]
          %v2498 = vld [vmem:[%s1580 + $0x256] sm:$0xff]
          %v2499 = vld [vmem:[%s1580 + $0x26e] sm:$0xff]
          %v2500 = vld [vmem:[%s1580 + $0x276] sm:$0xff]
          %v2501 = vlaneseq
          %v2502 = vshrl.u32 %v2501, 7
          %v2503 = vsub.s32 4, %v2502
          %v2504 = vrot.slane %v1575, %v2503
          %v2505 = vmul.f32 %v2461, %v2504
          %v2506 = vmul.f32 %v2462, %v2504
          %v2507 = vmul.f32 %v2463, %v2504
          %v2508 = vmul.f32 %v2464, %v2504
          %v2509 = vmul.f32 %v2465, %v2504
          %v2510 = vmul.f32 %v2466, %v2504
          %v2511 = vmul.f32 %v2467, %v2504
          %v2512 = vmul.f32 %v2468, %v2504
          %v2513 = vmul.f32 %v2469, %v2504
          %v2514 = vmul.f32 %v2470, %v2504
          %v2515 = vmul.f32 %v2471, %v2504
          %v2516 = vmul.f32 %v2472, %v2504
          %v2517 = vmul.f32 %v2473, %v2504
          %v2518 = vmul.f32 %v2474, %v2504
          %v2519 = vmul.f32 %v2475, %v2504
          %v2520 = vmul.f32 %v2476, %v2504
          %v2521 = vadd.f32 %v2445, %v2505
          %v2522 = vadd.f32 %v2446, %v2506
          %v2523 = vadd.f32 %v2447, %v2507
          %v2524 = vadd.f32 %v2448, %v2508
          %v2525 = vadd.f32 %v2449, %v2509
          %v2526 = vadd.f32 %v2450, %v2510
          %v2527 = vadd.f32 %v2451, %v2511
          %v2528 = vadd.f32 %v2452, %v2512
          %v2529 = vadd.f32 %v2453, %v2513
          %v2530 = vadd.f32 %v2454, %v2514
          %v2531 = vadd.f32 %v2455, %v2515
          %v2532 = vadd.f32 %v2456, %v2516
          %v2533 = vadd.f32 %v2457, %v2517
          %v2534 = vadd.f32 %v2458, %v2518
          %v2535 = vadd.f32 %v2459, %v2519
          %v2536 = vadd.f32 %v2460, %v2520
          %v2537 = vlaneseq
          %v2538 = vshrl.u32 %v2537, 7
          %v2539 = vsub.s32 1, %v2538
          %v2540 = vrot.slane %v1576, %v2539
          %v2541 = vmul.f32 %v2467, %v2540
          %v2542 = vmul.f32 %v2468, %v2540
          %v2543 = vmul.f32 %v2469, %v2540
          %v2544 = vmul.f32 %v2470, %v2540
          %v2545 = vmul.f32 %v2471, %v2540
          %v2546 = vmul.f32 %v2472, %v2540
          %v2547 = vmul.f32 %v2473, %v2540
          %v2548 = vmul.f32 %v2474, %v2540
          %v2549 = vmul.f32 %v2475, %v2540
          %v2550 = vmul.f32 %v2476, %v2540
          %v2551 = vmul.f32 %v2477, %v2540
          %v2552 = vmul.f32 %v2478, %v2540
          %v2553 = vmul.f32 %v2479, %v2540
          %v2554 = vmul.f32 %v2480, %v2540
          %v2555 = vmul.f32 %v2481, %v2540
          %v2556 = vmul.f32 %v2482, %v2540
          %v2557 = vadd.f32 %v2521, %v2541
          %v2558 = vadd.f32 %v2522, %v2542
          %v2559 = vadd.f32 %v2523, %v2543
          %v2560 = vadd.f32 %v2524, %v2544
          %v2561 = vadd.f32 %v2525, %v2545
          %v2562 = vadd.f32 %v2526, %v2546
          %v2563 = vadd.f32 %v2527, %v2547
          %v2564 = vadd.f32 %v2528, %v2548
          %v2565 = vadd.f32 %v2529, %v2549
          %v2566 = vadd.f32 %v2530, %v2550
          %v2567 = vadd.f32 %v2531, %v2551
          %v2568 = vadd.f32 %v2532, %v2552
          %v2569 = vadd.f32 %v2533, %v2553
          %v2570 = vadd.f32 %v2534, %v2554
          %v2571 = vadd.f32 %v2535, %v2555
          %v2572 = vadd.f32 %v2536, %v2556
          %v2573 = vlaneseq
          %v2574 = vshrl.u32 %v2573, 7
          %v2575 = vsub.s32 6, %v2574
          %v2576 = vrot.slane %v1576, %v2575
          %v2577 = vmul.f32 %v2473, %v2576
          %v2578 = vmul.f32 %v2474, %v2576
          %v2579 = vmul.f32 %v2475, %v2576
          %v2580 = vmul.f32 %v2476, %v2576
          %v2581 = vmul.f32 %v2477, %v2576
          %v2582 = vmul.f32 %v2478, %v2576
          %v2583 = vmul.f32 %v2479, %v2576
          %v2584 = vmul.f32 %v2480, %v2576
          %v2585 = vmul.f32 %v2481, %v2576
          %v2586 = vmul.f32 %v2482, %v2576
          %v2587 = vmul.f32 %v2483, %v2576
          %v2588 = vmul.f32 %v2484, %v2576
          %v2589 = vmul.f32 %v2485, %v2576
          %v2590 = vmul.f32 %v2486, %v2576
          %v2591 = vmul.f32 %v2487, %v2576
          %v2592 = vmul.f32 %v2488, %v2576
          %v2593 = vadd.f32 %v2557, %v2577
          %v2594 = vadd.f32 %v2558, %v2578
          %v2595 = vadd.f32 %v2559, %v2579
          %v2596 = vadd.f32 %v2560, %v2580
          %v2597 = vadd.f32 %v2561, %v2581
          %v2598 = vadd.f32 %v2562, %v2582
          %v2599 = vadd.f32 %v2563, %v2583
          %v2600 = vadd.f32 %v2564, %v2584
          %v2601 = vadd.f32 %v2565, %v2585
          %v2602 = vadd.f32 %v2566, %v2586
          %v2603 = vadd.f32 %v2567, %v2587
          %v2604 = vadd.f32 %v2568, %v2588
          %v2605 = vadd.f32 %v2569, %v2589
          %v2606 = vadd.f32 %v2570, %v2590
          %v2607 = vadd.f32 %v2571, %v2591
          %v2608 = vadd.f32 %v2572, %v2592
          %v2609 = vlaneseq
          %v2610 = vshrl.u32 %v2609, 7
          %v2611 = vsub.s32 3, %v2610
          %v2612 = vrot.slane %v1577, %v2611
          %v2613 = vmul.f32 %v2479, %v2612
          %v2614 = vmul.f32 %v2480, %v2612
          %v2615 = vmul.f32 %v2481, %v2612
          %v2616 = vmul.f32 %v2482, %v2612
          %v2617 = vmul.f32 %v2483, %v2612
          %v2618 = vmul.f32 %v2484, %v2612
          %v2619 = vmul.f32 %v2485, %v2612
          %v2620 = vmul.f32 %v2486, %v2612
          %v2621 = vmul.f32 %v2487, %v2612
          %v2622 = vmul.f32 %v2488, %v2612
          %v2623 = vmul.f32 %v2489, %v2612
          %v2624 = vmul.f32 %v2490, %v2612
          %v2625 = vmul.f32 %v2491, %v2612
          %v2626 = vmul.f32 %v2492, %v2612
          %v2627 = vmul.f32 %v2493, %v2612
          %v2628 = vmul.f32 %v2494, %v2612
          %v2629 = vadd.f32 %v2593, %v2613
          %v2630 = vadd.f32 %v2594, %v2614
          %v2631 = vadd.f32 %v2595, %v2615
          %v2632 = vadd.f32 %v2596, %v2616
          %v2633 = vadd.f32 %v2597, %v2617
          %v2634 = vadd.f32 %v2598, %v2618
          %v2635 = vadd.f32 %v2599, %v2619
          %v2636 = vadd.f32 %v2600, %v2620
          %v2637 = vadd.f32 %v2601, %v2621
          %v2638 = vadd.f32 %v2602, %v2622
          %v2639 = vadd.f32 %v2603, %v2623
          %v2640 = vadd.f32 %v2604, %v2624
          %v2641 = vadd.f32 %v2605, %v2625
          %v2642 = vadd.f32 %v2606, %v2626
          %v2643 = vadd.f32 %v2607, %v2627
          %v2644 = vadd.f32 %v2608, %v2628
          %v2645 = vlaneseq
          %v2646 = vshrl.u32 %v2645, 7
          %v2647 = vsub.s32 0, %v2646
          %v2648 = vrot.slane %v1578, %v2647
          %v2649 = vmul.f32 %v2485, %v2648
          %v2650 = vmul.f32 %v2486, %v2648
          %v2651 = vmul.f32 %v2487, %v2648
          %v2652 = vmul.f32 %v2488, %v2648
          %v2653 = vmul.f32 %v2489, %v2648
          %v2654 = vmul.f32 %v2490, %v2648
          %v2655 = vmul.f32 %v2491, %v2648
          %v2656 = vmul.f32 %v2492, %v2648
          %v2657 = vmul.f32 %v2493, %v2648
          %v2658 = vmul.f32 %v2494, %v2648
          %v2659 = vmul.f32 %v2495, %v2648
          %v2660 = vmul.f32 %v2496, %v2648
          %v2661 = vmul.f32 %v2497, %v2648
          %v2662 = vmul.f32 %v2498, %v2648
          %v2663 = vmul.f32 %v2499, %v2648
          %v2664 = vmul.f32 %v2500, %v2648
          %v2665 = vadd.f32 %v2629, %v2649
          %v2666 = vadd.f32 %v2630, %v2650
          %v2667 = vadd.f32 %v2631, %v2651
          %v2668 = vadd.f32 %v2632, %v2652
          %v2669 = vadd.f32 %v2633, %v2653
          %v2670 = vadd.f32 %v2634, %v2654
          %v2671 = vadd.f32 %v2635, %v2655
          %v2672 = vadd.f32 %v2636, %v2656
          %v2673 = vadd.f32 %v2637, %v2657
          %v2674 = vadd.f32 %v2638, %v2658
          %v2675 = vadd.f32 %v2639, %v2659
          %v2676 = vadd.f32 %v2640, %v2660
          %v2677 = vadd.f32 %v2641, %v2661
          %v2678 = vadd.f32 %v2642, %v2662
          %v2679 = vadd.f32 %v2643, %v2663
          %v2680 = vadd.f32 %v2644, %v2664
          %v2681 = vld [vmem:[%s4] sm:$0x1]
          %v2683 = vlaneseq
          %v2684 = vshrl.u32 %v2683, 7
          %v2685 = vsub.s32 0, %v2684
          %v2686 = vrot.slane %v2681, %v2685
          %v2688 = vadd.f32 %v2665, %v2686
          %v2689 = vadd.f32 %v2666, %v2686
          %v2690 = vadd.f32 %v2667, %v2686
          %v2691 = vadd.f32 %v2668, %v2686
          %v2692 = vadd.f32 %v2669, %v2686
          %v2693 = vadd.f32 %v2670, %v2686
          %v2694 = vadd.f32 %v2671, %v2686
          %v2695 = vadd.f32 %v2672, %v2686
          %v2696 = vadd.f32 %v2673, %v2686
          %v2697 = vadd.f32 %v2674, %v2686
          %v2698 = vadd.f32 %v2675, %v2686
          %v2699 = vadd.f32 %v2676, %v2686
          %v2700 = vadd.f32 %v2677, %v2686
          %v2701 = vadd.f32 %v2678, %v2686
          %v2702 = vadd.f32 %v2679, %v2686
          %v2703 = vadd.f32 %v2680, %v2686
          %v2704 = vld [vmem:[%s5] sm:$0xff]
          %v2705 = vld [vmem:[%s5 + $0x8] sm:$0xff]
          %v2706 = vld [vmem:[%s5 + $0x10] sm:$0xff]
          %v2707 = vld [vmem:[%s5 + $0x18] sm:$0xff]
          %v2708 = vld [vmem:[%s5 + $0x20] sm:$0xff]
          %v2709 = vld [vmem:[%s5 + $0x28] sm:$0xff]
          %v2710 = vld [vmem:[%s5 + $0x30] sm:$0xff]
          %v2711 = vld [vmem:[%s5 + $0x38] sm:$0xff]
          %v2712 = vld [vmem:[%s5 + $0x40] sm:$0xff]
          %v2713 = vld [vmem:[%s5 + $0x48] sm:$0xff]
          %v2714 = vld [vmem:[%s5 + $0x50] sm:$0xff]
          %v2715 = vld [vmem:[%s5 + $0x58] sm:$0xff]
          %v2716 = vld [vmem:[%s5 + $0x60] sm:$0xff]
          %v2717 = vld [vmem:[%s5 + $0x68] sm:$0xff]
          %v2718 = vld [vmem:[%s5 + $0x70] sm:$0xff]
          %v2719 = vld [vmem:[%s5 + $0x78] sm:$0xff]
          %v2720 = vld [vmem:[%s6] sm:$0x1]
          %v2722 = vlaneseq
          %v2723 = vshrl.u32 %v2722, 7
          %v2724 = vsub.s32 0, %v2723
          %v2725 = vrot.slane %v2720, %v2724
          %2727 = vmatprep.subr.mxu0 0.0
          %2728 = vmatpush1.msra.mxu0 %v2704
          %2729 = vmatprep.subr.mxu0 0.0
          %2730 = vmatpush1.msra.mxu0 %v2705
          %2731 = vmatprep.subr.mxu0 0.0
          %2732 = vmatpush1.msra.mxu0 %v2706
          %2733 = vmatprep.subr.mxu0 0.0
          %2734 = vmatpush1.msra.mxu0 %v2707
          %2735 = vmatprep.subr.mxu0 0.0
          %2736 = vmatpush1.msra.mxu0 %v2708
          %2737 = vmatprep.subr.mxu0 0.0
          %2738 = vmatpush1.msra.mxu0 %v2709
          %2739 = vmatprep.subr.mxu0 0.0
          %2740 = vmatpush1.msra.mxu0 %v2710
          %2741 = vmatprep.subr.mxu0 0.0
          %2742 = vmatpush1.msra.mxu0 %v2711
          %2743 = vmatprep.subr.mxu0 0.0
          %2744 = vmatpush1.msra.mxu0 %v2712
          %2745 = vmatprep.subr.mxu0 0.0
          %2746 = vmatpush1.msra.mxu0 %v2713
          %2747 = vmatprep.subr.mxu0 0.0
          %2748 = vmatpush1.msra.mxu0 %v2714
          %2749 = vmatprep.subr.mxu0 0.0
          %2750 = vmatpush1.msra.mxu0 %v2715
          %2751 = vmatprep.subr.mxu0 0.0
          %2752 = vmatpush1.msra.mxu0 %v2716
          %2753 = vmatprep.subr.mxu0 0.0
          %2754 = vmatpush1.msra.mxu0 %v2717
          %2755 = vmatprep.subr.mxu0 0.0
          %2756 = vmatpush1.msra.mxu0 %v2718
          %2757 = vmatprep.subr.mxu0 0.0
          %2758 = vmatpush1.msra.mxu0 %v2719
          %2759 = vmatprep.subr.mxu0 0.0
          %2760 = vmatpush1.msra.mxu0 0.0
          %2761 = vmatprep.subr.mxu0 0.0
          %2762 = vmatpush1.msra.mxu0 0.0
          %2763 = vmatprep.subr.mxu0 0.0
          %2764 = vmatpush1.msra.mxu0 0.0
          %2765 = vmatprep.subr.mxu0 0.0
          %2766 = vmatpush1.msra.mxu0 0.0
          %2767 = vmatprep.subr.mxu0 0.0
          %2768 = vmatpush1.msra.mxu0 0.0
          %2769 = vmatprep.subr.mxu0 0.0
          %2770 = vmatpush1.msra.mxu0 0.0
          %2771 = vmatprep.subr.mxu0 0.0
          %2772 = vmatpush1.msra.mxu0 0.0
          %2773 = vmatprep.subr.mxu0 0.0
          %2774 = vmatpush1.msra.mxu0 0.0
          %2775 = vmatprep.subr.mxu0 0.0
          %2776 = vmatpush1.msra.mxu0 0.0
          %2777 = vmatprep.subr.mxu0 0.0
          %2778 = vmatpush1.msra.mxu0 0.0
          %2779 = vmatprep.subr.mxu0 0.0
          %2780 = vmatpush1.msra.mxu0 0.0
          %2781 = vmatprep.subr.mxu0 0.0
          %2782 = vmatpush1.msra.mxu0 0.0
          %2783 = vmatprep.subr.mxu0 0.0
          %2784 = vmatpush1.msra.mxu0 0.0
          %2785 = vmatprep.subr.mxu0 0.0
          %2786 = vmatpush1.msra.mxu0 0.0
          %2787 = vmatprep.subr.mxu0 0.0
          %2788 = vmatpush1.msra.mxu0 0.0
          %2789 = vmatprep.subr.mxu0 0.0
          %2790 = vmatpush1.msra.mxu0 0.0
          %2791 = vmatprep.mubr.f32.mxu0 0.0
          %2792 = vmatmul.mubr.f32.gmra.mrb[0].mxu0 %v2688
          %v2793 = vpop.f32.mrb[0].mxu0
          %v2794 = vadd.f32 %v2725, %v2793
          %v2795 = vpop.f32.mrb[0].mxu0
          %2796 = vmatprep.mubr.f32.mxu0 0.0
          %2797 = vmatmul.mubr.f32.gmra.mrb[0].mxu0 %v2689
          %v2798 = vpop.f32.mrb[0].mxu0
          %v2799 = vadd.f32 %v2725, %v2798
          %v2800 = vpop.f32.mrb[0].mxu0
          %2801 = vmatprep.mubr.f32.mxu0 0.0
          %2802 = vmatmul.mubr.f32.gmra.mrb[0].mxu0 %v2690
          %v2803 = vpop.f32.mrb[0].mxu0
          %v2804 = vadd.f32 %v2725, %v2803
          %v2805 = vpop.f32.mrb[0].mxu0
          %2806 = vmatprep.mubr.f32.mxu0 0.0
          %2807 = vmatmul.mubr.f32.gmra.mrb[0].mxu0 %v2691
          %v2808 = vpop.f32.mrb[0].mxu0
          %v2809 = vadd.f32 %v2725, %v2808
          %v2810 = vpop.f32.mrb[0].mxu0
          %2811 = vmatprep.mubr.f32.mxu0 0.0
          %2812 = vmatmul.mubr.f32.gmra.mrb[0].mxu0 %v2692
          %v2813 = vpop.f32.mrb[0].mxu0
          %v2814 = vadd.f32 %v2725, %v2813
          %v2815 = vpop.f32.mrb[0].mxu0
          %2816 = vmatprep.mubr.f32.mxu0 0.0
          %2817 = vmatmul.mubr.f32.gmra.mrb[0].mxu0 %v2693
          %v2818 = vpop.f32.mrb[0].mxu0
          %v2819 = vadd.f32 %v2725, %v2818
          %v2820 = vpop.f32.mrb[0].mxu0
          %2821 = vmatprep.mubr.f32.mxu0 0.0
          %2822 = vmatmul.mubr.f32.gmra.mrb[0].mxu0 %v2694
          %v2823 = vpop.f32.mrb[0].mxu0
          %v2824 = vadd.f32 %v2725, %v2823
          %v2825 = vpop.f32.mrb[0].mxu0
          %2826 = vmatprep.mubr.f32.mxu0 0.0
          %2827 = vmatmul.mubr.f32.gmra.mrb[0].mxu0 %v2695
          %v2828 = vpop.f32.mrb[0].mxu0
          %v2829 = vadd.f32 %v2725, %v2828
          %v2830 = vpop.f32.mrb[0].mxu0
          %2831 = vmatprep.mubr.f32.mxu0 0.0
          %2832 = vmatmul.mubr.f32.gmra.mrb[0].mxu0 %v2696
          %v2833 = vpop.f32.mrb[0].mxu0
          %v2834 = vadd.f32 %v2725, %v2833
          %v2835 = vpop.f32.mrb[0].mxu0
          %2836 = vmatprep.mubr.f32.mxu0 0.0
          %2837 = vmatmul.mubr.f32.gmra.mrb[0].mxu0 %v2697
          %v2838 = vpop.f32.mrb[0].mxu0
          %v2839 = vadd.f32 %v2725, %v2838
          %v2840 = vpop.f32.mrb[0].mxu0
          %2841 = vmatprep.mubr.f32.mxu0 0.0
          %2842 = vmatmul.mubr.f32.gmra.mrb[0].mxu0 %v2698
          %v2843 = vpop.f32.mrb[0].mxu0
          %v2844 = vadd.f32 %v2725, %v2843
          %v2845 = vpop.f32.mrb[0].mxu0
          %2846 = vmatprep.mubr.f32.mxu0 0.0
          %2847 = vmatmul.mubr.f32.gmra.mrb[0].mxu0 %v2699
          %v2848 = vpop.f32.mrb[0].mxu0
          %v2849 = vadd.f32 %v2725, %v2848
          %v2850 = vpop.f32.mrb[0].mxu0
          %2851 = vmatprep.mubr.f32.mxu0 0.0
          %2852 = vmatmul.mubr.f32.gmra.mrb[0].mxu0 %v2700
          %v2853 = vpop.f32.mrb[0].mxu0
          %v2854 = vadd.f32 %v2725, %v2853
          %v2855 = vpop.f32.mrb[0].mxu0
          %2856 = vmatprep.mubr.f32.mxu0 0.0
          %2857 = vmatmul.mubr.f32.gmra.mrb[0].mxu0 %v2701
          %v2858 = vpop.f32.mrb[0].mxu0
          %v2859 = vadd.f32 %v2725, %v2858
          %v2860 = vpop.f32.mrb[0].mxu0
          %2861 = vmatprep.mubr.f32.mxu0 0.0
          %2862 = vmatmul.mubr.f32.gmra.mrb[0].mxu0 %v2702
          %v2863 = vpop.f32.mrb[0].mxu0
          %v2864 = vadd.f32 %v2725, %v2863
          %v2865 = vpop.f32.mrb[0].mxu0
          %2866 = vmatprep.mubr.f32.mxu0 0.0
          %2867 = vmatmul.mubr.f32.gmra.mrb[0].mxu0 %v2703
          %v2868 = vpop.f32.mrb[0].mxu0
          %v2869 = vadd.f32 %v2725, %v2868
          %v2870 = vpop.f32.mrb[0].mxu0
          %2871 = vdwg.mxu0
          %s2872 = smul.u32 %s1574, 16
          %s2873 = scalar_lea.vmem %s266, %s2872 [#allocation4]
          %v2874 = vld [vmem:[%s2873] sm:$0xff]
          %v2875 = vld [vmem:[%s2873 + $0x8] sm:$0xff]
          %v2876 = vld [vmem:[%s2873 + $0x10] sm:$0xff]
          %v2877 = vld [vmem:[%s2873 + $0x18] sm:$0xff]
          %v2878 = vld [vmem:[%s2873 + $0x20] sm:$0xff]
          %v2879 = vld [vmem:[%s2873 + $0x28] sm:$0xff]
          %v2880 = vld [vmem:[%s2873 + $0x30] sm:$0xff]
          %v2881 = vld [vmem:[%s2873 + $0x38] sm:$0xff]
          %v2882 = vld [vmem:[%s2873 + $0x40] sm:$0xff]
          %v2883 = vld [vmem:[%s2873 + $0x48] sm:$0xff]
          %v2884 = vld [vmem:[%s2873 + $0x50] sm:$0xff]
          %v2885 = vld [vmem:[%s2873 + $0x58] sm:$0xff]
          %v2886 = vld [vmem:[%s2873 + $0x60] sm:$0xff]
          %v2887 = vld [vmem:[%s2873 + $0x68] sm:$0xff]
          %v2888 = vld [vmem:[%s2873 + $0x70] sm:$0xff]
          %v2889 = vld [vmem:[%s2873 + $0x78] sm:$0xff]
          %v2890 = vmul.f32 %v2874, %v2794
          %v2891 = vmul.f32 %v2875, %v2799
          %v2892 = vmul.f32 %v2876, %v2804
          %v2893 = vmul.f32 %v2877, %v2809
          %v2894 = vmul.f32 %v2878, %v2814
          %v2895 = vmul.f32 %v2879, %v2819
          %v2896 = vmul.f32 %v2880, %v2824
          %v2897 = vmul.f32 %v2881, %v2829
          %v2898 = vmul.f32 %v2882, %v2834
          %v2899 = vmul.f32 %v2883, %v2839
          %v2900 = vmul.f32 %v2884, %v2844
          %v2901 = vmul.f32 %v2885, %v2849
          %v2902 = vmul.f32 %v2886, %v2854
          %v2903 = vmul.f32 %v2887, %v2859
          %v2904 = vmul.f32 %v2888, %v2864
          %v2905 = vmul.f32 %v2889, %v2869
          %s2906 = smul.u32 %s1569, 128
          %s2907 = scalar_lea.vmem %s296, %s2906 [#allocation7]
          %2908 = vst [vmem:[%s2907] sm:$0xff] %v2890
          %2909 = vst [vmem:[%s2907 + $0x8] sm:$0xff] %v2891
          %2910 = vst [vmem:[%s2907 + $0x10] sm:$0xff] %v2892
          %2911 = vst [vmem:[%s2907 + $0x18] sm:$0xff] %v2893
          %2912 = vst [vmem:[%s2907 + $0x20] sm:$0xff] %v2894
          %2913 = vst [vmem:[%s2907 + $0x28] sm:$0xff] %v2895
          %2914 = vst [vmem:[%s2907 + $0x30] sm:$0xff] %v2896
          %2915 = vst [vmem:[%s2907 + $0x38] sm:$0xff] %v2897
          %2916 = vst [vmem:[%s2907 + $0x40] sm:$0xff] %v2898
          %2917 = vst [vmem:[%s2907 + $0x48] sm:$0xff] %v2899
          %2918 = vst [vmem:[%s2907 + $0x50] sm:$0xff] %v2900
          %2919 = vst [vmem:[%s2907 + $0x58] sm:$0xff] %v2901
          %2920 = vst [vmem:[%s2907 + $0x60] sm:$0xff] %v2902
          %2921 = vst [vmem:[%s2907 + $0x68] sm:$0xff] %v2903
          %2922 = vst [vmem:[%s2907 + $0x70] sm:$0xff] %v2904
          %2923 = vst [vmem:[%s2907 + $0x78] sm:$0xff] %v2905
        $region64: #{lka_pallas.1} parent=47 // loop_footer
          %s1573 = sadd.s32 1, %s1569
        $region65: #{lka_pallas.1} parent=47 // loop_footer_branch
          %1568 = sbr.rel target = $region61
        $region66: #{lka_pallas.1} parent=47 // loop_exit
          _
        %s2924 = sand.u32 %s184, 1
        %s2925 = scalar_lea.sflag [#allocation6], %s2924
        %s2926 = sand.u32 %s184, 1
        %s2927 = smul.addr %s2926, 256
        %s2928 = scalar_lea.vmem [#allocation7], %s2927
        // Predicated region
        $region67: #{lka_pallas.1} parent=47 // pred_check
          %p2929 = pneg %p194
        $region68: #{lka_pallas.1} parent=47 // pred_check_branch
          %2931 = sbr.rel (%p2929) target = $region70
        $region69: #{lka_pallas.1} parent=47 // pred_region
          %s2933 = ssub.s32 4096, 4096
          %2934 = vsyncadd %s2925, %s2933
          %s2935 = smul.addr %s24, 32
          %s2936 = smul.addr %s2935, 128
          %s2937 = scalar_lea.hbm %s7, %s2936
          %s2938 = sshll.u32 %s2928, 4
          %s2939 = int_to_ptr.vmem [resolvable:$true] %s2938
          %2944 = dma.vmem_to_hbm [thread:$0]  %s2939, 4096, %s2937, %s2925, 128, 128, 8
        $region70: #{lka_pallas.1} parent=47 // pred_fallthru
          _
      $region48: #{lka_pallas.1} parent=5 // pred_fallthru
        _
      %p2945 = scmp.le.s32.totalorder 2, %s19
      // Predicated region
      $region71: #{lka_pallas.1} parent=5 // pred_check
        %p2946 = pneg %p2945
      $region72: #{lka_pallas.1} parent=5 // pred_check_branch
        %2948 = sbr.rel (%p2946) target = $region74
      $region73: #{lka_pallas.1} parent=5 // pred_region
        %s2949 = ssub.s32 %s19, 2
        // Predicated region
        $region75: #{lka_pallas.1} parent=73 // pred_check
          %p2950 = pneg %p200
        $region76: #{lka_pallas.1} parent=73 // pred_check_branch
          %2952 = sbr.rel (%p2950) target = $region78
        $region77: #{lka_pallas.1} parent=73 // pred_region
          %s2953 = sand.u32 %s185, 1
          %s2954 = scalar_lea.sflag [#allocation6], %s2953
          %s2955 = sand.u32 %s185, 1
          %s2956 = smul.addr %s2955, 256
          %s2957 = scalar_lea.vmem [#allocation7], %s2956
          %2958 = dma.done %s2954, 4096
        $region78: #{lka_pallas.1} parent=73 // pred_fallthru
          _
      $region74: #{lka_pallas.1} parent=5 // pred_fallthru
        _
    $region6: #{lka_pallas.1} parent=1 // loop_footer
      %s23 = sadd.s32 1, %s19
    $region7: #{lka_pallas.1} parent=1 // loop_footer_branch
      %18 = sbr.rel target = $region3
    $region8: #{lka_pallas.1} parent=1 // loop_exit
      _
    %2959 = vsyncpa [#allocation5], 1
    %s2960 = scalar_lea.sflag [#allocation5], 1
    %2961 = vsyncpa %s2960, 1
    %2962 = vsyncpa [#allocation6], 1
    %s2963 = scalar_lea.sflag [#allocation6], 1
    %2964 = vsyncpa %s2963, 1

</llo_original>
